<compile_context>
chip_gen: v5e
topology: v5e:2x2
jax: 0.10.0
libtpu: 0.0.40
codegen_flags: <defaults>
</compile_context>

<pallas_src>
import functools

import jax
import jax.numpy as jnp
from jax.experimental import pallas as pl
from jax.experimental.pallas import tpu as pltpu


# ----------------------------- in-kernel helpers ----------------------------

def _first_conv_pooled(p_ref, w_ref):
    """First conv of a branch with its MaxPool1d(4,4) fused.

    p_ref: [1, pool, Bt*Lpad, K*Cin] bf16 im2col patches grouped by pool phase
           (batch folded into rows, Lpad rows per sample).
    w_ref: [K*Cin, Cout] bf16.
    Returns [Bt*Lpad, Cout] f32 = max over pool phases of (patches @ w).
    """
    npool = p_ref.shape[1]
    w = w_ref[...]
    acc = jnp.dot(p_ref[0, 0], w, preferred_element_type=jnp.float32)
    for j in range(1, npool):
        acc = jnp.maximum(
            acc, jnp.dot(p_ref[0, j], w, preferred_element_type=jnp.float32))
    return acc


def _conv_to_scratch(act, w_ref, b_ref, out_ref):
    """Valid stride-1 Conv1d as K shifted matmuls (contraction = Cin), plus bias,
    written to a VMEM scratch with the same row count as `act` (the trailing
    K-1 rows are zero-filled so downstream strided pooling never reads junk).

    act: [N, Cin] f32 (batch folded into rows).  w_ref: [K, Cin, Cout] bf16.
    """
    K = w_ref.shape[0]
    L = act.shape[0] - K + 1
    act_bf = act.astype(jnp.bfloat16)            # cast hoisted out of the tap loop
    acc = jnp.dot(act_bf[0:L, :], w_ref[0], preferred_element_type=jnp.float32)
    for k in range(1, K):
        acc = acc + jnp.dot(act_bf[k:k + L, :], w_ref[k],
                            preferred_element_type=jnp.float32)
    out_ref[0:L, :] = acc + b_ref[...]
    out_ref[L:, :] = jnp.zeros((K - 1, out_ref.shape[1]), out_ref.dtype)


def _pool_strided(ref, pool):
    """MaxPool1d(pool, pool) over the row axis of a VMEM scratch via strided reads.
    Row padding per sample is a multiple of `pool`, so sample boundaries stay
    aligned and the torch floor-truncation semantics are preserved."""
    n = ref.shape[0] // pool
    out = ref[pl.ds(0, n, stride=pool), :]
    for j in range(1, pool):
        out = jnp.maximum(out, ref[pl.ds(j, n, stride=pool), :])
    return out


# ------------------------------- fused kernel -------------------------------

def _model_kernel(p11_ref, p21_ref,
                  w11_ref, b11_ref, w12_ref, b12_ref, w13_ref, b13_ref,
                  w21_ref, b21_ref, w22_ref, b22_ref, w23_ref, b23_ref,
                  w1_ref, fb1_ref, w2_ref, fb2_ref,
                  o_ref,
                  s12_ref, s13_ref, s22_ref, s23_ref, feat_ref):
    Bt = feat_ref.shape[0]

    # ---- branch 1: Conv(100,s6)+Pool4 -> Conv(8)+Pool4 -> Conv(8)+[Pool4 fused] --
    a11 = _first_conv_pooled(p11_ref, w11_ref) + b11_ref[...]   # [Bt*128, 128]
    _conv_to_scratch(a11, w12_ref, b12_ref, s12_ref)            # conv12 pre-pool
    a12 = _pool_strided(s12_ref, 4)                             # [Bt*32, 64]
    _conv_to_scratch(a12, w13_ref, b13_ref, s13_ref)            # conv13 pre-pool

    # ---- branch 2: Conv(200,s25)+Pool4 -> Conv(4)+Pool4 -> Conv(4)+[Pool2 fused] -
    a21 = _first_conv_pooled(p21_ref, w21_ref) + b21_ref[...]   # [Bt*32, 64]
    _conv_to_scratch(a21, w22_ref, b22_ref, s22_ref)            # conv22 pre-pool
    a22 = _pool_strided(s22_ref, 4)                             # [Bt*8, 32]
    _conv_to_scratch(a22, w23_ref, b23_ref, s23_ref)            # conv23 pre-pool

    # ---- feature gather: fuse each branch's last MaxPool into strided reads that
    #      assemble the [Bt, 176] fc1 input (fc1 rows were permuted in
    #      prepare_params to match this position-major layout + torch's cat). ------
    c13 = s13_ref.shape[1]                                      # 32
    c23 = s23_ref.shape[1]                                      # 16
    stride1 = s13_ref.shape[0] // Bt                            # rows / sample (32)
    stride2 = s23_ref.shape[0] // Bt                            # rows / sample (8)
    n_pos1 = (w1_ref.shape[0] - c23) // c13                     # 5
    for l in range(n_pos1):                                     # MaxPool1d(4,4) fused
        g = s13_ref[pl.ds(4 * l, Bt, stride=stride1), :]
        for j in range(1, 4):
            g = jnp.maximum(g, s13_ref[pl.ds(4 * l + j, Bt, stride=stride1), :])
        feat_ref[:, l * c13:(l + 1) * c13] = g
    g2 = jnp.maximum(s23_ref[pl.ds(0, Bt, stride=stride2), :],  # MaxPool1d(2,2) fused
                     s23_ref[pl.ds(1, Bt, stride=stride2), :])
    feat_ref[:, n_pos1 * c13:] = g2

    # ---- head: Dropout(id) -> Linear(176,64) -> LeakyReLU -> Dropout(id)
    #            -> Linear(64,C) -> Sigmoid -> Softmax ----------------------------
    h = jnp.dot(feat_ref[...].astype(jnp.bfloat16), w1_ref[...],
                preferred_element_type=jnp.float32) + fb1_ref[...]
    h = jnp.where(h > 0, h, 0.01 * h)                           # LeakyReLU(0.01)
    logits = jnp.dot(h.astype(jnp.bfloat16), w2_ref[...],
                     preferred_element_type=jnp.float32) + fb2_ref[...]
    s = 1.0 / (1.0 + jnp.exp(-logits))                          # Sigmoid
    e = jnp.exp(s - jnp.max(s, axis=-1, keepdims=True))         # Softmax(dim=-1)
    o_ref[0] = e / jnp.sum(e, axis=-1, keepdims=True)


# --------------------------- host-side preparation ---------------------------

def _im2col_pool_folded(x, kernel, stride, pool, Bt):
    """im2col for a branch's first conv, grouped by maxpool phase, per-sample
    position count padded to a multiple of 8, and Bt samples folded into rows.

    x: [Bp, Cin, T] (Bp % Bt == 0).
    Returns ([Bp//Bt, pool, Bt*Lpad, K*Cin] bf16, Lp, Lpad); feature order (k, ci).
    """
    Bp, Cin, T = x.shape
    L = (T - kernel) // stride + 1
    Lp = L // pool
    Lpad = ((Lp + 7) // 8) * 8
    idx = jnp.arange(Lp * pool)[:, None] * stride + jnp.arange(kernel)[None, :]
    p = x[:, :, idx]                                       # [Bp, Cin, Lp*pool, K]
    p = p.transpose(0, 2, 3, 1).reshape(Bp, Lp, pool, kernel * Cin)
    p = p.transpose(0, 2, 1, 3)                            # [Bp, pool, Lp, K*Cin]
    p = jnp.pad(p, ((0, 0), (0, 0), (0, Lpad - Lp), (0, 0)))
    nblk = Bp // Bt
    p = p.reshape(nblk, Bt, pool, Lpad, kernel * Cin)
    p = p.transpose(0, 2, 1, 3, 4).reshape(nblk, pool, Bt * Lpad, kernel * Cin)
    return p.astype(jnp.bfloat16), Lp, Lpad


def init_params(key, in_ch, num_classes, sfeq):
    """Same init scheme as the torch module: kaiming-normal conv weights,
    xavier-normal linear weights, torch-default uniform(+-1/sqrt(fan_in)) biases."""
    def kaiming(k, cout, cin, ks):
        return ((2.0 / (cin * ks)) ** 0.5) * jax.random.normal(k, (cout, cin, ks), jnp.float32)

    def xavier(k, out_f, in_f):
        return ((2.0 / (in_f + out_f)) ** 0.5) * jax.random.normal(k, (out_f, in_f), jnp.float32)

    def bias(k, fan_in, n):
        b = 1.0 / (fan_in ** 0.5)
        return jax.random.uniform(k, (n,), jnp.float32, -b, b)

    ks = jax.random.split(key, 16)
    p = {}
    p["c11_w"], p["c11_b"] = kaiming(ks[0], 128, in_ch, sfeq), bias(ks[1], in_ch * sfeq, 128)
    p["c12_w"], p["c12_b"] = kaiming(ks[2], 64, 128, 8), bias(ks[3], 128 * 8, 64)
    p["c13_w"], p["c13_b"] = kaiming(ks[4], 32, 64, 8), bias(ks[5], 64 * 8, 32)
    p["c21_w"], p["c21_b"] = kaiming(ks[6], 64, in_ch, 2 * sfeq), bias(ks[7], in_ch * 2 * sfeq, 64)
    p["c22_w"], p["c22_b"] = kaiming(ks[8], 32, 64, 4), bias(ks[9], 64 * 4, 32)
    p["c23_w"], p["c23_b"] = kaiming(ks[10], 16, 32, 4), bias(ks[11], 32 * 4, 16)
    p["fc1_w"], p["fc1_b"] = xavier(ks[12], 64, 176), bias(ks[13], 176, 64)
    p["fc2_w"], p["fc2_b"] = xavier(ks[14], num_classes, 64), bias(ks[15], 64, num_classes)
    return p


def prepare_params(p):
    """One-time layout prep: transpose / tap-split the conv weights, permute fc1
    rows to the kernel's position-major feature layout, cast MXU operands to bf16
    (accumulation stays f32)."""
    bf16, f32 = jnp.bfloat16, jnp.float32

    def conv_mat(w):     # [Cout, Cin, K] -> [K*Cin, Cout]  (im2col, (k, ci) order)
        cout, cin, k = w.shape
        return jnp.transpose(w, (2, 1, 0)).reshape(k * cin, cout).astype(bf16)

    def conv_taps(w):    # [Cout, Cin, K] -> [K, Cin, Cout] (shift-and-matmul)
        return jnp.transpose(w, (2, 1, 0)).astype(bf16)

    def row(b):
        return b.reshape(1, -1).astype(f32)

    # fc1: torch Flatten on branch1 is channel-major (index c*5 + l); the kernel's
    # feature layout is position-major (index l*32 + c).  Permute rows once here.
    c13_out = p["c13_w"].shape[0]                      # 32
    c23_out = p["c23_w"].shape[0]                      # 16
    fc1_t = p["fc1_w"].T                               # [176, 64]
    n1 = fc1_t.shape[0] - c23_out                      # 160
    pos1 = n1 // c13_out                               # 5
    br1 = fc1_t[:n1].reshape(c13_out, pos1, -1).transpose(1, 0, 2).reshape(n1, -1)
    w1 = jnp.concatenate([br1, fc1_t[n1:]], axis=0).astype(bf16)   # [176, 64]

    return dict(
        w11=conv_mat(p["c11_w"]), b11=row(p["c11_b"]),
        w12=conv_taps(p["c12_w"]), b12=row(p["c12_b"]),
        w13=conv_taps(p["c13_w"]), b13=row(p["c13_b"]),
        w21=conv_mat(p["c21_w"]), b21=row(p["c21_b"]),
        w22=conv_taps(p["c22_w"]), b22=row(p["c22_b"]),
        w23=conv_taps(p["c23_w"]), b23=row(p["c23_b"]),
        w1=w1, fb1=row(p["fc1_b"]),
        w2=p["fc2_w"].T.astype(bf16), fb2=row(p["fc2_b"]),
    )


# --------------------------------- forward ----------------------------------

def _forward(prep, x, *, sfeq, num_classes, block_batch=8):
    # x: [B, C, T] float32 (NCL, like torch).  Dropout layers are inference identity.
    B = x.shape[0]

    # ---- batch-block choice: Bt samples folded into each grid step's matmul M ----
    Bt = max(1, min(block_batch, B))
    if B >= 2:
        Bt = min(Bt, pl.cdiv(B, 2))       # keep >= 2 grid steps for v7x's two TCs
    nblk = pl.cdiv(B, Bt)
    Bp = nblk * Bt
    if Bp != B:
        x = jnp.pad(x, ((0, Bp - B), (0, 0), (0, 0)))

    # im2col (+pool-phase grouping + batch folding) for the two wide first convs.
    p11, Lp1, L1pad = _im2col_pool_folded(x, sfeq, sfeq // 16, 4, Bt)     # [nblk,4,Bt*128,200]
    p21, Lp2, L2pad = _im2col_pool_folded(x, 2 * sfeq, sfeq // 4, 4, Bt)  # [nblk,4,Bt*32,400]

    C11 = prep["w11"].shape[1]
    K12, Ci12, C12 = prep["w12"].shape
    K13, Ci13, C13 = prep["w13"].shape
    C21 = prep["w21"].shape[1]
    K22, Ci22, C22 = prep["w22"].shape
    K23, Ci23, C23 = prep["w23"].shape
    n_feat_ref = prep["w1"].shape[0]

    # Sanity: flattened feature count of the two branches must equal fc1's fan-in.
    n_feat = (C13 * (((Lp1 - K12 + 1) // 4 - K13 + 1) // 4)
              + C23 * (((Lp2 - K22 + 1) // 4 - K23 + 1) // 2))
    assert n_feat == n_feat_ref, (n_feat, n_feat_ref)

    weight_order = ("w11", "b11", "w12", "b12", "w13", "b13",
                    "w21", "b21", "w22", "b22", "w23", "b23",
                    "w1", "fb1", "w2", "fb2")
    weights = [prep[k] for k in weight_order]

    def _resident(a):
        # Full-array block, identical for every grid step -> stays VMEM-resident.
        nd = a.ndim
        return pl.BlockSpec(a.shape, lambda b: (0,) * nd)

    in_specs = (
        [pl.BlockSpec((1,) + p11.shape[1:], lambda b: (b, 0, 0, 0)),
         pl.BlockSpec((1,) + p21.shape[1:], lambda b: (b, 0, 0, 0))]
        + [_resident(w) for w in weights]
    )

    scratch_shapes = [
        pltpu.VMEM((Bt * L1pad, C12), jnp.float32),         # conv12 pre-pool rows
        pltpu.VMEM((Bt * (L1pad // 4), C13), jnp.float32),  # conv13 pre-pool rows
        pltpu.VMEM((Bt * L2pad, C22), jnp.float32),         # conv22 pre-pool rows
        pltpu.VMEM((Bt * (L2pad // 4), C23), jnp.float32),  # conv23 pre-pool rows
        pltpu.VMEM((Bt, n_feat_ref), jnp.float32),          # fc1 input features
    ]

    flops_blk = 2 * (
        4 * (Bt * L1pad) * p11.shape[-1] * C11
        + K12 * (Bt * L1pad) * Ci12 * C12
        + K13 * (Bt * (L1pad // 4)) * Ci13 * C13
        + 4 * (Bt * L2pad) * p21.shape[-1] * C21
        + K22 * (Bt * L2pad) * Ci22 * C22
        + K23 * (Bt * (L2pad // 4)) * Ci23 * C23
        + Bt * (n_feat_ref * prep["w1"].shape[1] + prep["w2"].shape[0] * num_classes))
    bytes_accessed = int(sum(a.size * a.dtype.itemsize for a in [p11, p21] + weights)
                         + Bp * num_classes * 4)

    out = pl.pallas_call(
        _model_kernel,
        out_shape=jax.ShapeDtypeStruct((nblk, Bt, num_classes), jnp.float32),
        grid=(nblk,),
        in_specs=in_specs,
        out_specs=pl.BlockSpec((1, Bt, num_classes), lambda b: (b, 0, 0)),
        scratch_shapes=scratch_shapes,
        compiler_params=pltpu.CompilerParams(
            dimension_semantics=("parallel",),          # megacore sharding on v7x
            vmem_limit_bytes=48 * 1024 * 1024),         # safe on v5e/v6e/v7x at Bt<=8
        cost_estimate=pl.CostEstimate(
            flops=int(nblk * flops_blk),
            transcendentals=int(Bp * 2 * num_classes),
            bytes_accessed=bytes_accessed),
    )(p11, p21, *weights)
    return out.reshape(Bp, num_classes)[:B]


# ---------------------------------- main -------------------------------------

if __name__ == "__main__":
    sampling_frequency = 100            # module global `sampling_frequency`
    num_channels = 2                    # len(decided_channels)
    num_classes = 5                     # len(pathology_dict)
    seq_len = 30 * sampling_frequency   # 3000-sample epoch -> Linear(176, 64) matches
    batch = 2

    key = jax.random.PRNGKey(0)
    k_param, k_x = jax.random.split(key)
    params = init_params(k_param, num_channels, num_classes, sampling_frequency)
    prep = prepare_params(params)       # one-time weight layout prep (bf16 MXU operands)
    x = jax.random.normal(k_x, (batch, num_channels, seq_len), jnp.float32)

    fwd = jax.jit(functools.partial(_forward, sfeq=sampling_frequency,
                                    num_classes=num_classes))
    out = jax.block_until_ready(fwd(prep, x))

    assert out.shape == (batch, num_classes)
    assert bool(jnp.all(jnp.isfinite(out)))
    assert bool(jnp.allclose(jnp.sum(out, axis=-1), 1.0, atol=1e-4))   # softmax rows
    print("KERNEL_OK")
</pallas_src>

<mosaic_0001>
module attributes {stable_mosaic.version = 11 : i64} {
  func.func @_model_kernel(%arg0: i32, %arg1: memref<1x4x128x200xbf16, #tpu.memory_space<vmem>>, %arg2: memref<1x4x32x400xbf16, #tpu.memory_space<vmem>>, %arg3: memref<200x128xbf16, #tpu.memory_space<vmem>>, %arg4: memref<1x128xf32, #tpu.memory_space<vmem>>, %arg5: memref<8x128x64xbf16, #tpu.memory_space<vmem>>, %arg6: memref<1x64xf32, #tpu.memory_space<vmem>>, %arg7: memref<8x64x32xbf16, #tpu.memory_space<vmem>>, %arg8: memref<1x32xf32, #tpu.memory_space<vmem>>, %arg9: memref<400x64xbf16, #tpu.memory_space<vmem>>, %arg10: memref<1x64xf32, #tpu.memory_space<vmem>>, %arg11: memref<4x64x32xbf16, #tpu.memory_space<vmem>>, %arg12: memref<1x32xf32, #tpu.memory_space<vmem>>, %arg13: memref<4x32x16xbf16, #tpu.memory_space<vmem>>, %arg14: memref<1x16xf32, #tpu.memory_space<vmem>>, %arg15: memref<176x64xbf16, #tpu.memory_space<vmem>>, %arg16: memref<1x64xf32, #tpu.memory_space<vmem>>, %arg17: memref<64x5xbf16, #tpu.memory_space<vmem>>, %arg18: memref<1x5xf32, #tpu.memory_space<vmem>>, %arg19: memref<1x1x5xf32, #tpu.memory_space<vmem>>, %arg20: memref<128x64xf32, #tpu.memory_space<vmem>>, %arg21: memref<32x32xf32, #tpu.memory_space<vmem>>, %arg22: memref<32x32xf32, #tpu.memory_space<vmem>>, %arg23: memref<8x16xf32, #tpu.memory_space<vmem>>, %arg24: memref<1x176xf32, #tpu.memory_space<vmem>>) attributes {dimension_semantics = [#tpu.dimension_semantics<parallel>], iteration_bounds = array<i64: 2>, scalar_prefetch = 0 : i64, scratch_operands = 5 : i64, tpu.core_type = #tpu.core_type<tc>, window_params = [{transform_indices = @transform_0, window_bounds = array<i64: 1, 4, 128, 200>}, {transform_indices = @transform_1, window_bounds = array<i64: 1, 4, 32, 400>}, {pipeline_mode = #tpu.pipeline_mode<synchronous>, transform_indices = @transform_2, window_bounds = array<i64: 200, 128>}, {pipeline_mode = #tpu.pipeline_mode<synchronous>, transform_indices = @transform_3, window_bounds = array<i64: 1, 128>}, {pipeline_mode = #tpu.pipeline_mode<synchronous>, transform_indices = @transform_4, window_bounds = array<i64: 8, 128, 64>}, {pipeline_mode = #tpu.pipeline_mode<synchronous>, transform_indices = @transform_5, window_bounds = array<i64: 1, 64>}, {pipeline_mode = #tpu.pipeline_mode<synchronous>, transform_indices = @transform_6, window_bounds = array<i64: 8, 64, 32>}, {pipeline_mode = #tpu.pipeline_mode<synchronous>, transform_indices = @transform_7, window_bounds = array<i64: 1, 32>}, {pipeline_mode = #tpu.pipeline_mode<synchronous>, transform_indices = @transform_8, window_bounds = array<i64: 400, 64>}, {pipeline_mode = #tpu.pipeline_mode<synchronous>, transform_indices = @transform_9, window_bounds = array<i64: 1, 64>}, {pipeline_mode = #tpu.pipeline_mode<synchronous>, transform_indices = @transform_10, window_bounds = array<i64: 4, 64, 32>}, {pipeline_mode = #tpu.pipeline_mode<synchronous>, transform_indices = @transform_11, window_bounds = array<i64: 1, 32>}, {pipeline_mode = #tpu.pipeline_mode<synchronous>, transform_indices = @transform_12, window_bounds = array<i64: 4, 32, 16>}, {pipeline_mode = #tpu.pipeline_mode<synchronous>, transform_indices = @transform_13, window_bounds = array<i64: 1, 16>}, {pipeline_mode = #tpu.pipeline_mode<synchronous>, transform_indices = @transform_14, window_bounds = array<i64: 176, 64>}, {pipeline_mode = #tpu.pipeline_mode<synchronous>, transform_indices = @transform_15, window_bounds = array<i64: 1, 64>}, {pipeline_mode = #tpu.pipeline_mode<synchronous>, transform_indices = @transform_16, window_bounds = array<i64: 64, 5>}, {pipeline_mode = #tpu.pipeline_mode<synchronous>, transform_indices = @transform_17, window_bounds = array<i64: 1, 5>}, {transform_indices = @transform_18, window_bounds = array<i64: 1, 1, 5>}]} {
    %c0 = arith.constant 0 : index
    %c0_0 = arith.constant 0 : index
    %0 = vector.load %arg3[%c0, %c0_0] : memref<200x128xbf16, #tpu.memory_space<vmem>>, vector<200x128xbf16>
    %c0_1 = arith.constant 0 : index
    %c0_2 = arith.constant 0 : index
    %c0_3 = arith.constant 0 : index
    %c0_4 = arith.constant 0 : index
    %1 = vector.load %arg1[%c0_1, %c0_2, %c0_3, %c0_4] : memref<1x4x128x200xbf16, #tpu.memory_space<vmem>>, vector<1x1x128x200xbf16>
    %2 = vector.shape_cast %1 : vector<1x1x128x200xbf16> to vector<128x200xbf16>
    %cst = arith.constant dense<0.000000e+00> : vector<128x128xf32>
    %3 = tpu.matmul %2, %0, %cst {dimension_numbers = #tpu.dot_dimension_numbers<[1], [0], [0], [1], [0, 0, 1, 1], [], []>} : vector<128x200xbf16>, vector<200x128xbf16>, vector<128x128xf32> -> vector<128x128xf32>
    %c0_5 = arith.constant 0 : index
    %c1 = arith.constant 1 : index
    %c0_6 = arith.constant 0 : index
    %c0_7 = arith.constant 0 : index
    %4 = vector.load %arg1[%c0_5, %c1, %c0_6, %c0_7] : memref<1x4x128x200xbf16, #tpu.memory_space<vmem>>, vector<1x1x128x200xbf16>
    %5 = vector.shape_cast %4 : vector<1x1x128x200xbf16> to vector<128x200xbf16>
    %cst_8 = arith.constant dense<0.000000e+00> : vector<128x128xf32>
    %6 = tpu.matmul %5, %0, %cst_8 {dimension_numbers = #tpu.dot_dimension_numbers<[1], [0], [0], [1], [0, 0, 1, 1], [], []>} : vector<128x200xbf16>, vector<200x128xbf16>, vector<128x128xf32> -> vector<128x128xf32>
    %7 = arith.maximumf %3, %6 : vector<128x128xf32>
    %c0_9 = arith.constant 0 : index
    %c2 = arith.constant 2 : index
    %c0_10 = arith.constant 0 : index
    %c0_11 = arith.constant 0 : index
    %8 = vector.load %arg1[%c0_9, %c2, %c0_10, %c0_11] : memref<1x4x128x200xbf16, #tpu.memory_space<vmem>>, vector<1x1x128x200xbf16>
    %9 = vector.shape_cast %8 : vector<1x1x128x200xbf16> to vector<128x200xbf16>
    %cst_12 = arith.constant dense<0.000000e+00> : vector<128x128xf32>
    %10 = tpu.matmul %9, %0, %cst_12 {dimension_numbers = #tpu.dot_dimension_numbers<[1], [0], [0], [1], [0, 0, 1, 1], [], []>} : vector<128x200xbf16>, vector<200x128xbf16>, vector<128x128xf32> -> vector<128x128xf32>
    %11 = arith.maximumf %7, %10 : vector<128x128xf32>
    %c0_13 = arith.constant 0 : index
    %c3 = arith.constant 3 : index
    %c0_14 = arith.constant 0 : index
    %c0_15 = arith.constant 0 : index
    %12 = vector.load %arg1[%c0_13, %c3, %c0_14, %c0_15] : memref<1x4x128x200xbf16, #tpu.memory_space<vmem>>, vector<1x1x128x200xbf16>
    %13 = vector.shape_cast %12 : vector<1x1x128x200xbf16> to vector<128x200xbf16>
    %cst_16 = arith.constant dense<0.000000e+00> : vector<128x128xf32>
    %14 = tpu.matmul %13, %0, %cst_16 {dimension_numbers = #tpu.dot_dimension_numbers<[1], [0], [0], [1], [0, 0, 1, 1], [], []>} : vector<128x200xbf16>, vector<200x128xbf16>, vector<128x128xf32> -> vector<128x128xf32>
    %15 = arith.maximumf %11, %14 : vector<128x128xf32>
    %c0_17 = arith.constant 0 : index
    %c0_18 = arith.constant 0 : index
    %16 = vector.load %arg4[%c0_17, %c0_18] : memref<1x128xf32, #tpu.memory_space<vmem>>, vector<1x128xf32>
    %17 = vector.broadcast %16 : vector<1x128xf32> to vector<128x128xf32>
    %18 = arith.addf %15, %17 : vector<128x128xf32>
    %19 = arith.truncf %18 : vector<128x128xf32> to vector<128x128xbf16>
    %20 = vector.extract_strided_slice %19 {offsets = [0, 0], sizes = [121, 128], strides = [1, 1]} : vector<128x128xbf16> to vector<121x128xbf16>
    %c0_19 = arith.constant 0 : index
    %c0_20 = arith.constant 0 : index
    %c0_21 = arith.constant 0 : index
    %21 = vector.load %arg5[%c0_19, %c0_20, %c0_21] : memref<8x128x64xbf16, #tpu.memory_space<vmem>>, vector<1x128x64xbf16>
    %22 = vector.shape_cast %21 : vector<1x128x64xbf16> to vector<128x64xbf16>
    %cst_22 = arith.constant dense<0.000000e+00> : vector<121x64xf32>
    %23 = tpu.matmul %20, %22, %cst_22 {dimension_numbers = #tpu.dot_dimension_numbers<[1], [0], [0], [1], [0, 0, 1, 1], [], []>} : vector<121x128xbf16>, vector<128x64xbf16>, vector<121x64xf32> -> vector<121x64xf32>
    %24 = vector.extract_strided_slice %19 {offsets = [1, 0], sizes = [121, 128], strides = [1, 1]} : vector<128x128xbf16> to vector<121x128xbf16>
    %c1_23 = arith.constant 1 : index
    %c0_24 = arith.constant 0 : index
    %c0_25 = arith.constant 0 : index
    %25 = vector.load %arg5[%c1_23, %c0_24, %c0_25] : memref<8x128x64xbf16, #tpu.memory_space<vmem>>, vector<1x128x64xbf16>
    %26 = vector.shape_cast %25 : vector<1x128x64xbf16> to vector<128x64xbf16>
    %cst_26 = arith.constant dense<0.000000e+00> : vector<121x64xf32>
    %27 = tpu.matmul %24, %26, %cst_26 {dimension_numbers = #tpu.dot_dimension_numbers<[1], [0], [0], [1], [0, 0, 1, 1], [], []>} : vector<121x128xbf16>, vector<128x64xbf16>, vector<121x64xf32> -> vector<121x64xf32>
    %28 = arith.addf %23, %27 : vector<121x64xf32>
    %29 = vector.extract_strided_slice %19 {offsets = [2, 0], sizes = [121, 128], strides = [1, 1]} : vector<128x128xbf16> to vector<121x128xbf16>
    %c2_27 = arith.constant 2 : index
    %c0_28 = arith.constant 0 : index
    %c0_29 = arith.constant 0 : index
    %30 = vector.load %arg5[%c2_27, %c0_28, %c0_29] : memref<8x128x64xbf16, #tpu.memory_space<vmem>>, vector<1x128x64xbf16>
    %31 = vector.shape_cast %30 : vector<1x128x64xbf16> to vector<128x64xbf16>
    %cst_30 = arith.constant dense<0.000000e+00> : vector<121x64xf32>
    %32 = tpu.matmul %29, %31, %cst_30 {dimension_numbers = #tpu.dot_dimension_numbers<[1], [0], [0], [1], [0, 0, 1, 1], [], []>} : vector<121x128xbf16>, vector<128x64xbf16>, vector<121x64xf32> -> vector<121x64xf32>
    %33 = arith.addf %28, %32 : vector<121x64xf32>
    %34 = vector.extract_strided_slice %19 {offsets = [3, 0], sizes = [121, 128], strides = [1, 1]} : vector<128x128xbf16> to vector<121x128xbf16>
    %c3_31 = arith.constant 3 : index
    %c0_32 = arith.constant 0 : index
    %c0_33 = arith.constant 0 : index
    %35 = vector.load %arg5[%c3_31, %c0_32, %c0_33] : memref<8x128x64xbf16, #tpu.memory_space<vmem>>, vector<1x128x64xbf16>
    %36 = vector.shape_cast %35 : vector<1x128x64xbf16> to vector<128x64xbf16>
    %cst_34 = arith.constant dense<0.000000e+00> : vector<121x64xf32>
    %37 = tpu.matmul %34, %36, %cst_34 {dimension_numbers = #tpu.dot_dimension_numbers<[1], [0], [0], [1], [0, 0, 1, 1], [], []>} : vector<121x128xbf16>, vector<128x64xbf16>, vector<121x64xf32> -> vector<121x64xf32>
    %38 = arith.addf %33, %37 : vector<121x64xf32>
    %39 = vector.extract_strided_slice %19 {offsets = [4, 0], sizes = [121, 128], strides = [1, 1]} : vector<128x128xbf16> to vector<121x128xbf16>
    %c4 = arith.constant 4 : index
    %c0_35 = arith.constant 0 : index
    %c0_36 = arith.constant 0 : index
    %40 = vector.load %arg5[%c4, %c0_35, %c0_36] : memref<8x128x64xbf16, #tpu.memory_space<vmem>>, vector<1x128x64xbf16>
    %41 = vector.shape_cast %40 : vector<1x128x64xbf16> to vector<128x64xbf16>
    %cst_37 = arith.constant dense<0.000000e+00> : vector<121x64xf32>
    %42 = tpu.matmul %39, %41, %cst_37 {dimension_numbers = #tpu.dot_dimension_numbers<[1], [0], [0], [1], [0, 0, 1, 1], [], []>} : vector<121x128xbf16>, vector<128x64xbf16>, vector<121x64xf32> -> vector<121x64xf32>
    %43 = arith.addf %38, %42 : vector<121x64xf32>
    %44 = vector.extract_strided_slice %19 {offsets = [5, 0], sizes = [121, 128], strides = [1, 1]} : vector<128x128xbf16> to vector<121x128xbf16>
    %c5 = arith.constant 5 : index
    %c0_38 = arith.constant 0 : index
    %c0_39 = arith.constant 0 : index
    %45 = vector.load %arg5[%c5, %c0_38, %c0_39] : memref<8x128x64xbf16, #tpu.memory_space<vmem>>, vector<1x128x64xbf16>
    %46 = vector.shape_cast %45 : vector<1x128x64xbf16> to vector<128x64xbf16>
    %cst_40 = arith.constant dense<0.000000e+00> : vector<121x64xf32>
    %47 = tpu.matmul %44, %46, %cst_40 {dimension_numbers = #tpu.dot_dimension_numbers<[1], [0], [0], [1], [0, 0, 1, 1], [], []>} : vector<121x128xbf16>, vector<128x64xbf16>, vector<121x64xf32> -> vector<121x64xf32>
    %48 = arith.addf %43, %47 : vector<121x64xf32>
    %49 = vector.extract_strided_slice %19 {offsets = [6, 0], sizes = [121, 128], strides = [1, 1]} : vector<128x128xbf16> to vector<121x128xbf16>
    %c6 = arith.constant 6 : index
    %c0_41 = arith.constant 0 : index
    %c0_42 = arith.constant 0 : index
    %50 = vector.load %arg5[%c6, %c0_41, %c0_42] : memref<8x128x64xbf16, #tpu.memory_space<vmem>>, vector<1x128x64xbf16>
    %51 = vector.shape_cast %50 : vector<1x128x64xbf16> to vector<128x64xbf16>
    %cst_43 = arith.constant dense<0.000000e+00> : vector<121x64xf32>
    %52 = tpu.matmul %49, %51, %cst_43 {dimension_numbers = #tpu.dot_dimension_numbers<[1], [0], [0], [1], [0, 0, 1, 1], [], []>} : vector<121x128xbf16>, vector<128x64xbf16>, vector<121x64xf32> -> vector<121x64xf32>
    %53 = arith.addf %48, %52 : vector<121x64xf32>
    %54 = vector.extract_strided_slice %19 {offsets = [7, 0], sizes = [121, 128], strides = [1, 1]} : vector<128x128xbf16> to vector<121x128xbf16>
    %c7 = arith.constant 7 : index
    %c0_44 = arith.constant 0 : index
    %c0_45 = arith.constant 0 : index
    %55 = vector.load %arg5[%c7, %c0_44, %c0_45] : memref<8x128x64xbf16, #tpu.memory_space<vmem>>, vector<1x128x64xbf16>
    %56 = vector.shape_cast %55 : vector<1x128x64xbf16> to vector<128x64xbf16>
    %cst_46 = arith.constant dense<0.000000e+00> : vector<121x64xf32>
    %57 = tpu.matmul %54, %56, %cst_46 {dimension_numbers = #tpu.dot_dimension_numbers<[1], [0], [0], [1], [0, 0, 1, 1], [], []>} : vector<121x128xbf16>, vector<128x64xbf16>, vector<121x64xf32> -> vector<121x64xf32>
    %58 = arith.addf %53, %57 : vector<121x64xf32>
    %c0_47 = arith.constant 0 : index
    %c0_48 = arith.constant 0 : index
    %59 = vector.load %arg6[%c0_47, %c0_48] : memref<1x64xf32, #tpu.memory_space<vmem>>, vector<1x64xf32>
    %60 = vector.broadcast %59 : vector<1x64xf32> to vector<121x64xf32>
    %61 = arith.addf %58, %60 : vector<121x64xf32>
    %c0_49 = arith.constant 0 : index
    %c0_50 = arith.constant 0 : index
    %62 = vector.load %arg20[%c0_49, %c0_50] : memref<128x64xf32, #tpu.memory_space<vmem>>, vector<121x64xf32>
    tpu.vector_store %arg20[%c0_49, %c0_50], %61 {strides = array<i32>} : memref<128x64xf32, #tpu.memory_space<vmem>>, vector<121x64xf32>,
    %cst_51 = arith.constant 0.000000e+00 : f32
    %63 = vector.broadcast %cst_51 : f32 to vector<7x64xf32>
    %c121 = arith.constant 121 : index
    %c0_52 = arith.constant 0 : index
    %64 = vector.load %arg20[%c121, %c0_52] : memref<128x64xf32, #tpu.memory_space<vmem>>, vector<7x64xf32>
    tpu.vector_store %arg20[%c121, %c0_52], %63 {strides = array<i32>} : memref<128x64xf32, #tpu.memory_space<vmem>>, vector<7x64xf32>,
    %c0_53 = arith.constant 0 : index
    %c0_54 = arith.constant 0 : index
    %65 = tpu.strided_load %arg20[%c0_53, %c0_54] {strides = array<i32: 4, 1>} : memref<128x64xf32, #tpu.memory_space<vmem>>, vector<32x64xf32>
    %c1_55 = arith.constant 1 : index
    %c0_56 = arith.constant 0 : index
    %66 = tpu.strided_load %arg20[%c1_55, %c0_56] {strides = array<i32: 4, 1>} : memref<128x64xf32, #tpu.memory_space<vmem>>, vector<32x64xf32>
    %67 = arith.maximumf %65, %66 : vector<32x64xf32>
    %c2_57 = arith.constant 2 : index
    %c0_58 = arith.constant 0 : index
    %68 = tpu.strided_load %arg20[%c2_57, %c0_58] {strides = array<i32: 4, 1>} : memref<128x64xf32, #tpu.memory_space<vmem>>, vector<32x64xf32>
    %69 = arith.maximumf %67, %68 : vector<32x64xf32>
    %c3_59 = arith.constant 3 : index
    %c0_60 = arith.constant 0 : index
    %70 = tpu.strided_load %arg20[%c3_59, %c0_60] {strides = array<i32: 4, 1>} : memref<128x64xf32, #tpu.memory_space<vmem>>, vector<32x64xf32>
    %71 = arith.maximumf %69, %70 : vector<32x64xf32>
    %72 = arith.truncf %71 : vector<32x64xf32> to vector<32x64xbf16>
    %73 = vector.extract_strided_slice %72 {offsets = [0, 0], sizes = [25, 64], strides = [1, 1]} : vector<32x64xbf16> to vector<25x64xbf16>
    %c0_61 = arith.constant 0 : index
    %c0_62 = arith.constant 0 : index
    %c0_63 = arith.constant 0 : index
    %74 = vector.load %arg7[%c0_61, %c0_62, %c0_63] : memref<8x64x32xbf16, #tpu.memory_space<vmem>>, vector<1x64x32xbf16>
    %75 = vector.shape_cast %74 : vector<1x64x32xbf16> to vector<64x32xbf16>
    %cst_64 = arith.constant dense<0.000000e+00> : vector<25x32xf32>
    %76 = tpu.matmul %73, %75, %cst_64 {dimension_numbers = #tpu.dot_dimension_numbers<[1], [0], [0], [1], [0, 0, 1, 1], [], []>} : vector<25x64xbf16>, vector<64x32xbf16>, vector<25x32xf32> -> vector<25x32xf32>
    %77 = vector.extract_strided_slice %72 {offsets = [1, 0], sizes = [25, 64], strides = [1, 1]} : vector<32x64xbf16> to vector<25x64xbf16>
    %c1_65 = arith.constant 1 : index
    %c0_66 = arith.constant 0 : index
    %c0_67 = arith.constant 0 : index
    %78 = vector.load %arg7[%c1_65, %c0_66, %c0_67] : memref<8x64x32xbf16, #tpu.memory_space<vmem>>, vector<1x64x32xbf16>
    %79 = vector.shape_cast %78 : vector<1x64x32xbf16> to vector<64x32xbf16>
    %cst_68 = arith.constant dense<0.000000e+00> : vector<25x32xf32>
    %80 = tpu.matmul %77, %79, %cst_68 {dimension_numbers = #tpu.dot_dimension_numbers<[1], [0], [0], [1], [0, 0, 1, 1], [], []>} : vector<25x64xbf16>, vector<64x32xbf16>, vector<25x32xf32> -> vector<25x32xf32>
    %81 = arith.addf %76, %80 : vector<25x32xf32>
    %82 = vector.extract_strided_slice %72 {offsets = [2, 0], sizes = [25, 64], strides = [1, 1]} : vector<32x64xbf16> to vector<25x64xbf16>
    %c2_69 = arith.constant 2 : index
    %c0_70 = arith.constant 0 : index
    %c0_71 = arith.constant 0 : index
    %83 = vector.load %arg7[%c2_69, %c0_70, %c0_71] : memref<8x64x32xbf16, #tpu.memory_space<vmem>>, vector<1x64x32xbf16>
    %84 = vector.shape_cast %83 : vector<1x64x32xbf16> to vector<64x32xbf16>
    %cst_72 = arith.constant dense<0.000000e+00> : vector<25x32xf32>
    %85 = tpu.matmul %82, %84, %cst_72 {dimension_numbers = #tpu.dot_dimension_numbers<[1], [0], [0], [1], [0, 0, 1, 1], [], []>} : vector<25x64xbf16>, vector<64x32xbf16>, vector<25x32xf32> -> vector<25x32xf32>
    %86 = arith.addf %81, %85 : vector<25x32xf32>
    %87 = vector.extract_strided_slice %72 {offsets = [3, 0], sizes = [25, 64], strides = [1, 1]} : vector<32x64xbf16> to vector<25x64xbf16>
    %c3_73 = arith.constant 3 : index
    %c0_74 = arith.constant 0 : index
    %c0_75 = arith.constant 0 : index
    %88 = vector.load %arg7[%c3_73, %c0_74, %c0_75] : memref<8x64x32xbf16, #tpu.memory_space<vmem>>, vector<1x64x32xbf16>
    %89 = vector.shape_cast %88 : vector<1x64x32xbf16> to vector<64x32xbf16>
    %cst_76 = arith.constant dense<0.000000e+00> : vector<25x32xf32>
    %90 = tpu.matmul %87, %89, %cst_76 {dimension_numbers = #tpu.dot_dimension_numbers<[1], [0], [0], [1], [0, 0, 1, 1], [], []>} : vector<25x64xbf16>, vector<64x32xbf16>, vector<25x32xf32> -> vector<25x32xf32>
    %91 = arith.addf %86, %90 : vector<25x32xf32>
    %92 = vector.extract_strided_slice %72 {offsets = [4, 0], sizes = [25, 64], strides = [1, 1]} : vector<32x64xbf16> to vector<25x64xbf16>
    %c4_77 = arith.constant 4 : index
    %c0_78 = arith.constant 0 : index
    %c0_79 = arith.constant 0 : index
    %93 = vector.load %arg7[%c4_77, %c0_78, %c0_79] : memref<8x64x32xbf16, #tpu.memory_space<vmem>>, vector<1x64x32xbf16>
    %94 = vector.shape_cast %93 : vector<1x64x32xbf16> to vector<64x32xbf16>
    %cst_80 = arith.constant dense<0.000000e+00> : vector<25x32xf32>
    %95 = tpu.matmul %92, %94, %cst_80 {dimension_numbers = #tpu.dot_dimension_numbers<[1], [0], [0], [1], [0, 0, 1, 1], [], []>} : vector<25x64xbf16>, vector<64x32xbf16>, vector<25x32xf32> -> vector<25x32xf32>
    %96 = arith.addf %91, %95 : vector<25x32xf32>
    %97 = vector.extract_strided_slice %72 {offsets = [5, 0], sizes = [25, 64], strides = [1, 1]} : vector<32x64xbf16> to vector<25x64xbf16>
    %c5_81 = arith.constant 5 : index
    %c0_82 = arith.constant 0 : index
    %c0_83 = arith.constant 0 : index
    %98 = vector.load %arg7[%c5_81, %c0_82, %c0_83] : memref<8x64x32xbf16, #tpu.memory_space<vmem>>, vector<1x64x32xbf16>
    %99 = vector.shape_cast %98 : vector<1x64x32xbf16> to vector<64x32xbf16>
    %cst_84 = arith.constant dense<0.000000e+00> : vector<25x32xf32>
    %100 = tpu.matmul %97, %99, %cst_84 {dimension_numbers = #tpu.dot_dimension_numbers<[1], [0], [0], [1], [0, 0, 1, 1], [], []>} : vector<25x64xbf16>, vector<64x32xbf16>, vector<25x32xf32> -> vector<25x32xf32>
    %101 = arith.addf %96, %100 : vector<25x32xf32>
    %102 = vector.extract_strided_slice %72 {offsets = [6, 0], sizes = [25, 64], strides = [1, 1]} : vector<32x64xbf16> to vector<25x64xbf16>
    %c6_85 = arith.constant 6 : index
    %c0_86 = arith.constant 0 : index
    %c0_87 = arith.constant 0 : index
    %103 = vector.load %arg7[%c6_85, %c0_86, %c0_87] : memref<8x64x32xbf16, #tpu.memory_space<vmem>>, vector<1x64x32xbf16>
    %104 = vector.shape_cast %103 : vector<1x64x32xbf16> to vector<64x32xbf16>
    %cst_88 = arith.constant dense<0.000000e+00> : vector<25x32xf32>
    %105 = tpu.matmul %102, %104, %cst_88 {dimension_numbers = #tpu.dot_dimension_numbers<[1], [0], [0], [1], [0, 0, 1, 1], [], []>} : vector<25x64xbf16>, vector<64x32xbf16>, vector<25x32xf32> -> vector<25x32xf32>
    %106 = arith.addf %101, %105 : vector<25x32xf32>
    %107 = vector.extract_strided_slice %72 {offsets = [7, 0], sizes = [25, 64], strides = [1, 1]} : vector<32x64xbf16> to vector<25x64xbf16>
    %c7_89 = arith.constant 7 : index
    %c0_90 = arith.constant 0 : index
    %c0_91 = arith.constant 0 : index
    %108 = vector.load %arg7[%c7_89, %c0_90, %c0_91] : memref<8x64x32xbf16, #tpu.memory_space<vmem>>, vector<1x64x32xbf16>
    %109 = vector.shape_cast %108 : vector<1x64x32xbf16> to vector<64x32xbf16>
    %cst_92 = arith.constant dense<0.000000e+00> : vector<25x32xf32>
    %110 = tpu.matmul %107, %109, %cst_92 {dimension_numbers = #tpu.dot_dimension_numbers<[1], [0], [0], [1], [0, 0, 1, 1], [], []>} : vector<25x64xbf16>, vector<64x32xbf16>, vector<25x32xf32> -> vector<25x32xf32>
    %111 = arith.addf %106, %110 : vector<25x32xf32>
    %c0_93 = arith.constant 0 : index
    %c0_94 = arith.constant 0 : index
    %112 = vector.load %arg8[%c0_93, %c0_94] : memref<1x32xf32, #tpu.memory_space<vmem>>, vector<1x32xf32>
    %113 = vector.broadcast %112 : vector<1x32xf32> to vector<25x32xf32>
    %114 = arith.addf %111, %113 : vector<25x32xf32>
    %c0_95 = arith.constant 0 : index
    %c0_96 = arith.constant 0 : index
    %115 = vector.load %arg21[%c0_95, %c0_96] : memref<32x32xf32, #tpu.memory_space<vmem>>, vector<25x32xf32>
    tpu.vector_store %arg21[%c0_95, %c0_96], %114 {strides = array<i32>} : memref<32x32xf32, #tpu.memory_space<vmem>>, vector<25x32xf32>,
    %cst_97 = arith.constant 0.000000e+00 : f32
    %116 = vector.broadcast %cst_97 : f32 to vector<7x32xf32>
    %c25 = arith.constant 25 : index
    %c0_98 = arith.constant 0 : index
    %117 = vector.load %arg21[%c25, %c0_98] : memref<32x32xf32, #tpu.memory_space<vmem>>, vector<7x32xf32>
    tpu.vector_store %arg21[%c25, %c0_98], %116 {strides = array<i32>} : memref<32x32xf32, #tpu.memory_space<vmem>>, vector<7x32xf32>,
    %c0_99 = arith.constant 0 : index
    %c0_100 = arith.constant 0 : index
    %118 = vector.load %arg9[%c0_99, %c0_100] : memref<400x64xbf16, #tpu.memory_space<vmem>>, vector<400x64xbf16>
    %c0_101 = arith.constant 0 : index
    %c0_102 = arith.constant 0 : index
    %c0_103 = arith.constant 0 : index
    %c0_104 = arith.constant 0 : index
    %119 = vector.load %arg2[%c0_101, %c0_102, %c0_103, %c0_104] : memref<1x4x32x400xbf16, #tpu.memory_space<vmem>>, vector<1x1x32x400xbf16>
    %120 = vector.shape_cast %119 : vector<1x1x32x400xbf16> to vector<32x400xbf16>
    %cst_105 = arith.constant dense<0.000000e+00> : vector<32x64xf32>
    %121 = tpu.matmul %120, %118, %cst_105 {dimension_numbers = #tpu.dot_dimension_numbers<[1], [0], [0], [1], [0, 0, 1, 1], [], []>} : vector<32x400xbf16>, vector<400x64xbf16>, vector<32x64xf32> -> vector<32x64xf32>
    %c0_106 = arith.constant 0 : index
    %c1_107 = arith.constant 1 : index
    %c0_108 = arith.constant 0 : index
    %c0_109 = arith.constant 0 : index
    %122 = vector.load %arg2[%c0_106, %c1_107, %c0_108, %c0_109] : memref<1x4x32x400xbf16, #tpu.memory_space<vmem>>, vector<1x1x32x400xbf16>
    %123 = vector.shape_cast %122 : vector<1x1x32x400xbf16> to vector<32x400xbf16>
    %cst_110 = arith.constant dense<0.000000e+00> : vector<32x64xf32>
    %124 = tpu.matmul %123, %118, %cst_110 {dimension_numbers = #tpu.dot_dimension_numbers<[1], [0], [0], [1], [0, 0, 1, 1], [], []>} : vector<32x400xbf16>, vector<400x64xbf16>, vector<32x64xf32> -> vector<32x64xf32>
    %125 = arith.maximumf %121, %124 : vector<32x64xf32>
    %c0_111 = arith.constant 0 : index
    %c2_112 = arith.constant 2 : index
    %c0_113 = arith.constant 0 : index
    %c0_114 = arith.constant 0 : index
    %126 = vector.load %arg2[%c0_111, %c2_112, %c0_113, %c0_114] : memref<1x4x32x400xbf16, #tpu.memory_space<vmem>>, vector<1x1x32x400xbf16>
    %127 = vector.shape_cast %126 : vector<1x1x32x400xbf16> to vector<32x400xbf16>
    %cst_115 = arith.constant dense<0.000000e+00> : vector<32x64xf32>
    %128 = tpu.matmul %127, %118, %cst_115 {dimension_numbers = #tpu.dot_dimension_numbers<[1], [0], [0], [1], [0, 0, 1, 1], [], []>} : vector<32x400xbf16>, vector<400x64xbf16>, vector<32x64xf32> -> vector<32x64xf32>
    %129 = arith.maximumf %125, %128 : vector<32x64xf32>
    %c0_116 = arith.constant 0 : index
    %c3_117 = arith.constant 3 : index
    %c0_118 = arith.constant 0 : index
    %c0_119 = arith.constant 0 : index
    %130 = vector.load %arg2[%c0_116, %c3_117, %c0_118, %c0_119] : memref<1x4x32x400xbf16, #tpu.memory_space<vmem>>, vector<1x1x32x400xbf16>
    %131 = vector.shape_cast %130 : vector<1x1x32x400xbf16> to vector<32x400xbf16>
    %cst_120 = arith.constant dense<0.000000e+00> : vector<32x64xf32>
    %132 = tpu.matmul %131, %118, %cst_120 {dimension_numbers = #tpu.dot_dimension_numbers<[1], [0], [0], [1], [0, 0, 1, 1], [], []>} : vector<32x400xbf16>, vector<400x64xbf16>, vector<32x64xf32> -> vector<32x64xf32>
    %133 = arith.maximumf %129, %132 : vector<32x64xf32>
    %c0_121 = arith.constant 0 : index
    %c0_122 = arith.constant 0 : index
    %134 = vector.load %arg10[%c0_121, %c0_122] : memref<1x64xf32, #tpu.memory_space<vmem>>, vector<1x64xf32>
    %135 = vector.broadcast %134 : vector<1x64xf32> to vector<32x64xf32>
    %136 = arith.addf %133, %135 : vector<32x64xf32>
    %137 = arith.truncf %136 : vector<32x64xf32> to vector<32x64xbf16>
    %138 = vector.extract_strided_slice %137 {offsets = [0, 0], sizes = [29, 64], strides = [1, 1]} : vector<32x64xbf16> to vector<29x64xbf16>
    %c0_123 = arith.constant 0 : index
    %c0_124 = arith.constant 0 : index
    %c0_125 = arith.constant 0 : index
    %139 = vector.load %arg11[%c0_123, %c0_124, %c0_125] : memref<4x64x32xbf16, #tpu.memory_space<vmem>>, vector<1x64x32xbf16>
    %140 = vector.shape_cast %139 : vector<1x64x32xbf16> to vector<64x32xbf16>
    %cst_126 = arith.constant dense<0.000000e+00> : vector<29x32xf32>
    %141 = tpu.matmul %138, %140, %cst_126 {dimension_numbers = #tpu.dot_dimension_numbers<[1], [0], [0], [1], [0, 0, 1, 1], [], []>} : vector<29x64xbf16>, vector<64x32xbf16>, vector<29x32xf32> -> vector<29x32xf32>
    %142 = vector.extract_strided_slice %137 {offsets = [1, 0], sizes = [29, 64], strides = [1, 1]} : vector<32x64xbf16> to vector<29x64xbf16>
    %c1_127 = arith.constant 1 : index
    %c0_128 = arith.constant 0 : index
    %c0_129 = arith.constant 0 : index
    %143 = vector.load %arg11[%c1_127, %c0_128, %c0_129] : memref<4x64x32xbf16, #tpu.memory_space<vmem>>, vector<1x64x32xbf16>
    %144 = vector.shape_cast %143 : vector<1x64x32xbf16> to vector<64x32xbf16>
    %cst_130 = arith.constant dense<0.000000e+00> : vector<29x32xf32>
    %145 = tpu.matmul %142, %144, %cst_130 {dimension_numbers = #tpu.dot_dimension_numbers<[1], [0], [0], [1], [0, 0, 1, 1], [], []>} : vector<29x64xbf16>, vector<64x32xbf16>, vector<29x32xf32> -> vector<29x32xf32>
    %146 = arith.addf %141, %145 : vector<29x32xf32>
    %147 = vector.extract_strided_slice %137 {offsets = [2, 0], sizes = [29, 64], strides = [1, 1]} : vector<32x64xbf16> to vector<29x64xbf16>
    %c2_131 = arith.constant 2 : index
    %c0_132 = arith.constant 0 : index
    %c0_133 = arith.constant 0 : index
    %148 = vector.load %arg11[%c2_131, %c0_132, %c0_133] : memref<4x64x32xbf16, #tpu.memory_space<vmem>>, vector<1x64x32xbf16>
    %149 = vector.shape_cast %148 : vector<1x64x32xbf16> to vector<64x32xbf16>
    %cst_134 = arith.constant dense<0.000000e+00> : vector<29x32xf32>
    %150 = tpu.matmul %147, %149, %cst_134 {dimension_numbers = #tpu.dot_dimension_numbers<[1], [0], [0], [1], [0, 0, 1, 1], [], []>} : vector<29x64xbf16>, vector<64x32xbf16>, vector<29x32xf32> -> vector<29x32xf32>
    %151 = arith.addf %146, %150 : vector<29x32xf32>
    %152 = vector.extract_strided_slice %137 {offsets = [3, 0], sizes = [29, 64], strides = [1, 1]} : vector<32x64xbf16> to vector<29x64xbf16>
    %c3_135 = arith.constant 3 : index
    %c0_136 = arith.constant 0 : index
    %c0_137 = arith.constant 0 : index
    %153 = vector.load %arg11[%c3_135, %c0_136, %c0_137] : memref<4x64x32xbf16, #tpu.memory_space<vmem>>, vector<1x64x32xbf16>
    %154 = vector.shape_cast %153 : vector<1x64x32xbf16> to vector<64x32xbf16>
    %cst_138 = arith.constant dense<0.000000e+00> : vector<29x32xf32>
    %155 = tpu.matmul %152, %154, %cst_138 {dimension_numbers = #tpu.dot_dimension_numbers<[1], [0], [0], [1], [0, 0, 1, 1], [], []>} : vector<29x64xbf16>, vector<64x32xbf16>, vector<29x32xf32> -> vector<29x32xf32>
    %156 = arith.addf %151, %155 : vector<29x32xf32>
    %c0_139 = arith.constant 0 : index
    %c0_140 = arith.constant 0 : index
    %157 = vector.load %arg12[%c0_139, %c0_140] : memref<1x32xf32, #tpu.memory_space<vmem>>, vector<1x32xf32>
    %158 = vector.broadcast %157 : vector<1x32xf32> to vector<29x32xf32>
    %159 = arith.addf %156, %158 : vector<29x32xf32>
    %c0_141 = arith.constant 0 : index
    %c0_142 = arith.constant 0 : index
    %160 = vector.load %arg22[%c0_141, %c0_142] : memref<32x32xf32, #tpu.memory_space<vmem>>, vector<29x32xf32>
    tpu.vector_store %arg22[%c0_141, %c0_142], %159 {strides = array<i32>} : memref<32x32xf32, #tpu.memory_space<vmem>>, vector<29x32xf32>,
    %cst_143 = arith.constant 0.000000e+00 : f32
    %161 = vector.broadcast %cst_143 : f32 to vector<3x32xf32>
    %c29 = arith.constant 29 : index
    %c0_144 = arith.constant 0 : index
    %162 = vector.load %arg22[%c29, %c0_144] : memref<32x32xf32, #tpu.memory_space<vmem>>, vector<3x32xf32>
    tpu.vector_store %arg22[%c29, %c0_144], %161 {strides = array<i32>} : memref<32x32xf32, #tpu.memory_space<vmem>>, vector<3x32xf32>,
    %c0_145 = arith.constant 0 : index
    %c0_146 = arith.constant 0 : index
    %163 = tpu.strided_load %arg22[%c0_145, %c0_146] {strides = array<i32: 4, 1>} : memref<32x32xf32, #tpu.memory_space<vmem>>, vector<8x32xf32>
    %c1_147 = arith.constant 1 : index
    %c0_148 = arith.constant 0 : index
    %164 = tpu.strided_load %arg22[%c1_147, %c0_148] {strides = array<i32: 4, 1>} : memref<32x32xf32, #tpu.memory_space<vmem>>, vector<8x32xf32>
    %165 = arith.maximumf %163, %164 : vector<8x32xf32>
    %c2_149 = arith.constant 2 : index
    %c0_150 = arith.constant 0 : index
    %166 = tpu.strided_load %arg22[%c2_149, %c0_150] {strides = array<i32: 4, 1>} : memref<32x32xf32, #tpu.memory_space<vmem>>, vector<8x32xf32>
    %167 = arith.maximumf %165, %166 : vector<8x32xf32>
    %c3_151 = arith.constant 3 : index
    %c0_152 = arith.constant 0 : index
    %168 = tpu.strided_load %arg22[%c3_151, %c0_152] {strides = array<i32: 4, 1>} : memref<32x32xf32, #tpu.memory_space<vmem>>, vector<8x32xf32>
    %169 = arith.maximumf %167, %168 : vector<8x32xf32>
    %170 = arith.truncf %169 : vector<8x32xf32> to vector<8x32xbf16>
    %171 = vector.extract_strided_slice %170 {offsets = [0, 0], sizes = [5, 32], strides = [1, 1]} : vector<8x32xbf16> to vector<5x32xbf16>
    %c0_153 = arith.constant 0 : index
    %c0_154 = arith.constant 0 : index
    %c0_155 = arith.constant 0 : index
    %172 = vector.load %arg13[%c0_153, %c0_154, %c0_155] : memref<4x32x16xbf16, #tpu.memory_space<vmem>>, vector<1x32x16xbf16>
    %173 = vector.shape_cast %172 : vector<1x32x16xbf16> to vector<32x16xbf16>
    %cst_156 = arith.constant dense<0.000000e+00> : vector<5x16xf32>
    %174 = tpu.matmul %171, %173, %cst_156 {dimension_numbers = #tpu.dot_dimension_numbers<[1], [0], [0], [1], [0, 0, 1, 1], [], []>} : vector<5x32xbf16>, vector<32x16xbf16>, vector<5x16xf32> -> vector<5x16xf32>
    %175 = vector.extract_strided_slice %170 {offsets = [1, 0], sizes = [5, 32], strides = [1, 1]} : vector<8x32xbf16> to vector<5x32xbf16>
    %c1_157 = arith.constant 1 : index
    %c0_158 = arith.constant 0 : index
    %c0_159 = arith.constant 0 : index
    %176 = vector.load %arg13[%c1_157, %c0_158, %c0_159] : memref<4x32x16xbf16, #tpu.memory_space<vmem>>, vector<1x32x16xbf16>
    %177 = vector.shape_cast %176 : vector<1x32x16xbf16> to vector<32x16xbf16>
    %cst_160 = arith.constant dense<0.000000e+00> : vector<5x16xf32>
    %178 = tpu.matmul %175, %177, %cst_160 {dimension_numbers = #tpu.dot_dimension_numbers<[1], [0], [0], [1], [0, 0, 1, 1], [], []>} : vector<5x32xbf16>, vector<32x16xbf16>, vector<5x16xf32> -> vector<5x16xf32>
    %179 = arith.addf %174, %178 : vector<5x16xf32>
    %180 = vector.extract_strided_slice %170 {offsets = [2, 0], sizes = [5, 32], strides = [1, 1]} : vector<8x32xbf16> to vector<5x32xbf16>
    %c2_161 = arith.constant 2 : index
    %c0_162 = arith.constant 0 : index
    %c0_163 = arith.constant 0 : index
    %181 = vector.load %arg13[%c2_161, %c0_162, %c0_163] : memref<4x32x16xbf16, #tpu.memory_space<vmem>>, vector<1x32x16xbf16>
    %182 = vector.shape_cast %181 : vector<1x32x16xbf16> to vector<32x16xbf16>
    %cst_164 = arith.constant dense<0.000000e+00> : vector<5x16xf32>
    %183 = tpu.matmul %180, %182, %cst_164 {dimension_numbers = #tpu.dot_dimension_numbers<[1], [0], [0], [1], [0, 0, 1, 1], [], []>} : vector<5x32xbf16>, vector<32x16xbf16>, vector<5x16xf32> -> vector<5x16xf32>
    %184 = arith.addf %179, %183 : vector<5x16xf32>
    %185 = vector.extract_strided_slice %170 {offsets = [3, 0], sizes = [5, 32], strides = [1, 1]} : vector<8x32xbf16> to vector<5x32xbf16>
    %c3_165 = arith.constant 3 : index
    %c0_166 = arith.constant 0 : index
    %c0_167 = arith.constant 0 : index
    %186 = vector.load %arg13[%c3_165, %c0_166, %c0_167] : memref<4x32x16xbf16, #tpu.memory_space<vmem>>, vector<1x32x16xbf16>
    %187 = vector.shape_cast %186 : vector<1x32x16xbf16> to vector<32x16xbf16>
    %cst_168 = arith.constant dense<0.000000e+00> : vector<5x16xf32>
    %188 = tpu.matmul %185, %187, %cst_168 {dimension_numbers = #tpu.dot_dimension_numbers<[1], [0], [0], [1], [0, 0, 1, 1], [], []>} : vector<5x32xbf16>, vector<32x16xbf16>, vector<5x16xf32> -> vector<5x16xf32>
    %189 = arith.addf %184, %188 : vector<5x16xf32>
    %c0_169 = arith.constant 0 : index
    %c0_170 = arith.constant 0 : index
    %190 = vector.load %arg14[%c0_169, %c0_170] : memref<1x16xf32, #tpu.memory_space<vmem>>, vector<1x16xf32>
    %191 = vector.broadcast %190 : vector<1x16xf32> to vector<5x16xf32>
    %192 = arith.addf %189, %191 : vector<5x16xf32>
    %c0_171 = arith.constant 0 : index
    %c0_172 = arith.constant 0 : index
    %193 = vector.load %arg23[%c0_171, %c0_172] : memref<8x16xf32, #tpu.memory_space<vmem>>, vector<5x16xf32>
    tpu.vector_store %arg23[%c0_171, %c0_172], %192 {strides = array<i32>} : memref<8x16xf32, #tpu.memory_space<vmem>>, vector<5x16xf32>,
    %cst_173 = arith.constant 0.000000e+00 : f32
    %194 = vector.broadcast %cst_173 : f32 to vector<3x16xf32>
    %c5_174 = arith.constant 5 : index
    %c0_175 = arith.constant 0 : index
    %195 = vector.load %arg23[%c5_174, %c0_175] : memref<8x16xf32, #tpu.memory_space<vmem>>, vector<3x16xf32>
    tpu.vector_store %arg23[%c5_174, %c0_175], %194 {strides = array<i32>} : memref<8x16xf32, #tpu.memory_space<vmem>>, vector<3x16xf32>,
    %c0_176 = arith.constant 0 : index
    %c0_177 = arith.constant 0 : index
    %196 = tpu.strided_load %arg21[%c0_176, %c0_177] {strides = array<i32: 32, 1>} : memref<32x32xf32, #tpu.memory_space<vmem>>, vector<1x32xf32>
    %c1_178 = arith.constant 1 : index
    %c0_179 = arith.constant 0 : index
    %197 = tpu.strided_load %arg21[%c1_178, %c0_179] {strides = array<i32: 32, 1>} : memref<32x32xf32, #tpu.memory_space<vmem>>, vector<1x32xf32>
    %198 = arith.maximumf %196, %197 : vector<1x32xf32>
    %c2_180 = arith.constant 2 : index
    %c0_181 = arith.constant 0 : index
    %199 = tpu.strided_load %arg21[%c2_180, %c0_181] {strides = array<i32: 32, 1>} : memref<32x32xf32, #tpu.memory_space<vmem>>, vector<1x32xf32>
    %200 = arith.maximumf %198, %199 : vector<1x32xf32>
    %c3_182 = arith.constant 3 : index
    %c0_183 = arith.constant 0 : index
    %201 = tpu.strided_load %arg21[%c3_182, %c0_183] {strides = array<i32: 32, 1>} : memref<32x32xf32, #tpu.memory_space<vmem>>, vector<1x32xf32>
    %202 = arith.maximumf %200, %201 : vector<1x32xf32>
    %c0_184 = arith.constant 0 : index
    %c0_185 = arith.constant 0 : index
    %203 = vector.load %arg24[%c0_184, %c0_185] : memref<1x176xf32, #tpu.memory_space<vmem>>, vector<1x32xf32>
    tpu.vector_store %arg24[%c0_184, %c0_185], %202 {strides = array<i32>} : memref<1x176xf32, #tpu.memory_space<vmem>>, vector<1x32xf32>,
    %c4_186 = arith.constant 4 : index
    %c0_187 = arith.constant 0 : index
    %204 = tpu.strided_load %arg21[%c4_186, %c0_187] {strides = array<i32: 32, 1>} : memref<32x32xf32, #tpu.memory_space<vmem>>, vector<1x32xf32>
    %c5_188 = arith.constant 5 : index
    %c0_189 = arith.constant 0 : index
    %205 = tpu.strided_load %arg21[%c5_188, %c0_189] {strides = array<i32: 32, 1>} : memref<32x32xf32, #tpu.memory_space<vmem>>, vector<1x32xf32>
    %206 = arith.maximumf %204, %205 : vector<1x32xf32>
    %c6_190 = arith.constant 6 : index
    %c0_191 = arith.constant 0 : index
    %207 = tpu.strided_load %arg21[%c6_190, %c0_191] {strides = array<i32: 32, 1>} : memref<32x32xf32, #tpu.memory_space<vmem>>, vector<1x32xf32>
    %208 = arith.maximumf %206, %207 : vector<1x32xf32>
    %c7_192 = arith.constant 7 : index
    %c0_193 = arith.constant 0 : index
    %209 = tpu.strided_load %arg21[%c7_192, %c0_193] {strides = array<i32: 32, 1>} : memref<32x32xf32, #tpu.memory_space<vmem>>, vector<1x32xf32>
    %210 = arith.maximumf %208, %209 : vector<1x32xf32>
    %c0_194 = arith.constant 0 : index
    %c32 = arith.constant 32 : index
    %211 = vector.load %arg24[%c0_194, %c32] : memref<1x176xf32, #tpu.memory_space<vmem>>, vector<1x32xf32>
    tpu.vector_store %arg24[%c0_194, %c32], %210 {strides = array<i32>} : memref<1x176xf32, #tpu.memory_space<vmem>>, vector<1x32xf32>,
    %c8 = arith.constant 8 : index
    %c0_195 = arith.constant 0 : index
    %212 = tpu.strided_load %arg21[%c8, %c0_195] {strides = array<i32: 32, 1>} : memref<32x32xf32, #tpu.memory_space<vmem>>, vector<1x32xf32>
    %c9 = arith.constant 9 : index
    %c0_196 = arith.constant 0 : index
    %213 = tpu.strided_load %arg21[%c9, %c0_196] {strides = array<i32: 32, 1>} : memref<32x32xf32, #tpu.memory_space<vmem>>, vector<1x32xf32>
    %214 = arith.maximumf %212, %213 : vector<1x32xf32>
    %c10 = arith.constant 10 : index
    %c0_197 = arith.constant 0 : index
    %215 = tpu.strided_load %arg21[%c10, %c0_197] {strides = array<i32: 32, 1>} : memref<32x32xf32, #tpu.memory_space<vmem>>, vector<1x32xf32>
    %216 = arith.maximumf %214, %215 : vector<1x32xf32>
    %c11 = arith.constant 11 : index
    %c0_198 = arith.constant 0 : index
    %217 = tpu.strided_load %arg21[%c11, %c0_198] {strides = array<i32: 32, 1>} : memref<32x32xf32, #tpu.memory_space<vmem>>, vector<1x32xf32>
    %218 = arith.maximumf %216, %217 : vector<1x32xf32>
    %c0_199 = arith.constant 0 : index
    %c64 = arith.constant 64 : index
    %219 = vector.load %arg24[%c0_199, %c64] : memref<1x176xf32, #tpu.memory_space<vmem>>, vector<1x32xf32>
    tpu.vector_store %arg24[%c0_199, %c64], %218 {strides = array<i32>} : memref<1x176xf32, #tpu.memory_space<vmem>>, vector<1x32xf32>,
    %c12 = arith.constant 12 : index
    %c0_200 = arith.constant 0 : index
    %220 = tpu.strided_load %arg21[%c12, %c0_200] {strides = array<i32: 32, 1>} : memref<32x32xf32, #tpu.memory_space<vmem>>, vector<1x32xf32>
    %c13 = arith.constant 13 : index
    %c0_201 = arith.constant 0 : index
    %221 = tpu.strided_load %arg21[%c13, %c0_201] {strides = array<i32: 32, 1>} : memref<32x32xf32, #tpu.memory_space<vmem>>, vector<1x32xf32>
    %222 = arith.maximumf %220, %221 : vector<1x32xf32>
    %c14 = arith.constant 14 : index
    %c0_202 = arith.constant 0 : index
    %223 = tpu.strided_load %arg21[%c14, %c0_202] {strides = array<i32: 32, 1>} : memref<32x32xf32, #tpu.memory_space<vmem>>, vector<1x32xf32>
    %224 = arith.maximumf %222, %223 : vector<1x32xf32>
    %c15 = arith.constant 15 : index
    %c0_203 = arith.constant 0 : index
    %225 = tpu.strided_load %arg21[%c15, %c0_203] {strides = array<i32: 32, 1>} : memref<32x32xf32, #tpu.memory_space<vmem>>, vector<1x32xf32>
    %226 = arith.maximumf %224, %225 : vector<1x32xf32>
    %c0_204 = arith.constant 0 : index
    %c96 = arith.constant 96 : index
    %227 = vector.load %arg24[%c0_204, %c96] : memref<1x176xf32, #tpu.memory_space<vmem>>, vector<1x32xf32>
    tpu.vector_store %arg24[%c0_204, %c96], %226 {strides = array<i32>} : memref<1x176xf32, #tpu.memory_space<vmem>>, vector<1x32xf32>,
    %c16 = arith.constant 16 : index
    %c0_205 = arith.constant 0 : index
    %228 = tpu.strided_load %arg21[%c16, %c0_205] {strides = array<i32: 32, 1>} : memref<32x32xf32, #tpu.memory_space<vmem>>, vector<1x32xf32>
    %c17 = arith.constant 17 : index
    %c0_206 = arith.constant 0 : index
    %229 = tpu.strided_load %arg21[%c17, %c0_206] {strides = array<i32: 32, 1>} : memref<32x32xf32, #tpu.memory_space<vmem>>, vector<1x32xf32>
    %230 = arith.maximumf %228, %229 : vector<1x32xf32>
    %c18 = arith.constant 18 : index
    %c0_207 = arith.constant 0 : index
    %231 = tpu.strided_load %arg21[%c18, %c0_207] {strides = array<i32: 32, 1>} : memref<32x32xf32, #tpu.memory_space<vmem>>, vector<1x32xf32>
    %232 = arith.maximumf %230, %231 : vector<1x32xf32>
    %c19 = arith.constant 19 : index
    %c0_208 = arith.constant 0 : index
    %233 = tpu.strided_load %arg21[%c19, %c0_208] {strides = array<i32: 32, 1>} : memref<32x32xf32, #tpu.memory_space<vmem>>, vector<1x32xf32>
    %234 = arith.maximumf %232, %233 : vector<1x32xf32>
    %c0_209 = arith.constant 0 : index
    %c128 = arith.constant 128 : index
    %235 = vector.load %arg24[%c0_209, %c128] : memref<1x176xf32, #tpu.memory_space<vmem>>, vector<1x32xf32>
    tpu.vector_store %arg24[%c0_209, %c128], %234 {strides = array<i32>} : memref<1x176xf32, #tpu.memory_space<vmem>>, vector<1x32xf32>,
    %c0_210 = arith.constant 0 : index
    %c0_211 = arith.constant 0 : index
    %236 = tpu.strided_load %arg23[%c0_210, %c0_211] {strides = array<i32: 8, 1>} : memref<8x16xf32, #tpu.memory_space<vmem>>, vector<1x16xf32>
    %c1_212 = arith.constant 1 : index
    %c0_213 = arith.constant 0 : index
    %237 = tpu.strided_load %arg23[%c1_212, %c0_213] {strides = array<i32: 8, 1>} : memref<8x16xf32, #tpu.memory_space<vmem>>, vector<1x16xf32>
    %238 = arith.maximumf %236, %237 : vector<1x16xf32>
    %c0_214 = arith.constant 0 : index
    %c160 = arith.constant 160 : index
    %239 = vector.load %arg24[%c0_214, %c160] : memref<1x176xf32, #tpu.memory_space<vmem>>, vector<1x16xf32>
    tpu.vector_store %arg24[%c0_214, %c160], %238 {strides = array<i32>} : memref<1x176xf32, #tpu.memory_space<vmem>>, vector<1x16xf32>,
    %c0_215 = arith.constant 0 : index
    %c0_216 = arith.constant 0 : index
    %240 = vector.load %arg24[%c0_215, %c0_216] : memref<1x176xf32, #tpu.memory_space<vmem>>, vector<1x176xf32>
    %241 = arith.truncf %240 : vector<1x176xf32> to vector<1x176xbf16>
    %c0_217 = arith.constant 0 : index
    %c0_218 = arith.constant 0 : index
    %242 = vector.load %arg15[%c0_217, %c0_218] : memref<176x64xbf16, #tpu.memory_space<vmem>>, vector<176x64xbf16>
    %cst_219 = arith.constant dense<0.000000e+00> : vector<1x64xf32>
    %243 = tpu.matmul %241, %242, %cst_219 {dimension_numbers = #tpu.dot_dimension_numbers<[1], [0], [0], [1], [0, 0, 1, 1], [], []>} : vector<1x176xbf16>, vector<176x64xbf16>, vector<1x64xf32> -> vector<1x64xf32>
    %c0_220 = arith.constant 0 : index
    %c0_221 = arith.constant 0 : index
    %244 = vector.load %arg16[%c0_220, %c0_221] : memref<1x64xf32, #tpu.memory_space<vmem>>, vector<1x64xf32>
    %245 = arith.addf %243, %244 : vector<1x64xf32>
    %cst_222 = arith.constant 0.000000e+00 : f32
    %246 = vector.broadcast %cst_222 : f32 to vector<1x64xf32>
    %247 = arith.cmpf ogt, %245, %246 : vector<1x64xf32>
    %cst_223 = arith.constant 0.00999999977 : f32
    %248 = vector.broadcast %cst_223 : f32 to vector<1x64xf32>
    %249 = arith.mulf %248, %245 : vector<1x64xf32>
    %250 = arith.select %247, %245, %249 : vector<1x64xi1>, vector<1x64xf32>
    %251 = arith.truncf %250 : vector<1x64xf32> to vector<1x64xbf16>
    %c0_224 = arith.constant 0 : index
    %c0_225 = arith.constant 0 : index
    %252 = vector.load %arg17[%c0_224, %c0_225] : memref<64x5xbf16, #tpu.memory_space<vmem>>, vector<64x5xbf16>
    %cst_226 = arith.constant dense<0.000000e+00> : vector<1x5xf32>
    %253 = tpu.matmul %251, %252, %cst_226 {dimension_numbers = #tpu.dot_dimension_numbers<[1], [0], [0], [1], [0, 0, 1, 1], [], []>} : vector<1x64xbf16>, vector<64x5xbf16>, vector<1x5xf32> -> vector<1x5xf32>
    %c0_227 = arith.constant 0 : index
    %c0_228 = arith.constant 0 : index
    %254 = vector.load %arg18[%c0_227, %c0_228] : memref<1x5xf32, #tpu.memory_space<vmem>>, vector<1x5xf32>
    %255 = arith.addf %253, %254 : vector<1x5xf32>
    %cst_229 = arith.constant 0.000000e+00 : f32
    %256 = vector.broadcast %cst_229 : f32 to vector<1x5xf32>
    %257 = arith.subf %256, %255 : vector<1x5xf32>
    %258 = math.exp %257 : vector<1x5xf32>
    %cst_230 = arith.constant 1.000000e+00 : f32
    %259 = vector.broadcast %cst_230 : f32 to vector<1x5xf32>
    %260 = arith.addf %259, %258 : vector<1x5xf32>
    %cst_231 = arith.constant 1.000000e+00 : f32
    %261 = vector.broadcast %cst_231 : f32 to vector<1x5xf32>
    %262 = arith.divf %261, %260 : vector<1x5xf32>
    %cst_232 = arith.constant dense<0xFF800000> : vector<1xf32>
    %263 = vector.multi_reduction <maximumf>, %262, %cst_232 [1] : vector<1x5xf32> to vector<1xf32>
    %264 = vector.shape_cast %263 : vector<1xf32> to vector<1x1xf32>
    %265 = vector.broadcast %264 : vector<1x1xf32> to vector<1x5xf32>
    %266 = arith.subf %262, %265 : vector<1x5xf32>
    %267 = math.exp %266 : vector<1x5xf32>
    %cst_233 = arith.constant dense<0.000000e+00> : vector<1xf32>
    %268 = vector.multi_reduction <add>, %267, %cst_233 [1] : vector<1x5xf32> to vector<1xf32>
    %269 = vector.shape_cast %268 : vector<1xf32> to vector<1x1xf32>
    %270 = vector.broadcast %269 : vector<1x1xf32> to vector<1x5xf32>
    %271 = arith.divf %267, %270 : vector<1x5xf32>
    %c0_234 = arith.constant 0 : index
    %c0_235 = arith.constant 0 : index
    %c0_236 = arith.constant 0 : index
    %272 = vector.load %arg19[%c0_234, %c0_235, %c0_236] : memref<1x1x5xf32, #tpu.memory_space<vmem>>, vector<1x1x5xf32>
    %273 = vector.shape_cast %272 : vector<1x1x5xf32> to vector<1x5xf32>
    %274 = vector.shape_cast %271 : vector<1x5xf32> to vector<1x1x5xf32>
    tpu.vector_store %arg19[%c0_234, %c0_235, %c0_236], %274 {strides = array<i32>} : memref<1x1x5xf32, #tpu.memory_space<vmem>>, vector<1x1x5xf32>,
    return
  }
  func.func @transform_0(%arg0: i32) -> (i32, i32, i32, i32) {
    %c0_i32 = arith.constant 0 : i32
    %c0_i32_0 = arith.constant 0 : i32
    %c0_i32_1 = arith.constant 0 : i32
    %c0_i32_2 = arith.constant 0 : i32
    return %arg0, %c0_i32, %c0_i32_0, %c0_i32_1 : i32, i32, i32, i32
  }
  func.func @transform_1(%arg0: i32) -> (i32, i32, i32, i32) {
    %c0_i32 = arith.constant 0 : i32
    %c0_i32_0 = arith.constant 0 : i32
    %c0_i32_1 = arith.constant 0 : i32
    %c0_i32_2 = arith.constant 0 : i32
    return %arg0, %c0_i32, %c0_i32_0, %c0_i32_1 : i32, i32, i32, i32
  }
  func.func @transform_2(%arg0: i32) -> (i32, i32) {
    %c0_i32 = arith.constant 0 : i32
    %c0_i32_0 = arith.constant 0 : i32
    %c0_i32_1 = arith.constant 0 : i32
    return %c0_i32, %c0_i32_0 : i32, i32
  }
  func.func @transform_3(%arg0: i32) -> (i32, i32) {
    %c0_i32 = arith.constant 0 : i32
    %c0_i32_0 = arith.constant 0 : i32
    %c0_i32_1 = arith.constant 0 : i32
    return %c0_i32, %c0_i32_0 : i32, i32
  }
  func.func @transform_4(%arg0: i32) -> (i32, i32, i32) {
    %c0_i32 = arith.constant 0 : i32
    %c0_i32_0 = arith.constant 0 : i32
    %c0_i32_1 = arith.constant 0 : i32
    %c0_i32_2 = arith.constant 0 : i32
    return %c0_i32, %c0_i32_0, %c0_i32_1 : i32, i32, i32
  }
  func.func @transform_5(%arg0: i32) -> (i32, i32) {
    %c0_i32 = arith.constant 0 : i32
    %c0_i32_0 = arith.constant 0 : i32
    %c0_i32_1 = arith.constant 0 : i32
    return %c0_i32, %c0_i32_0 : i32, i32
  }
  func.func @transform_6(%arg0: i32) -> (i32, i32, i32) {
    %c0_i32 = arith.constant 0 : i32
    %c0_i32_0 = arith.constant 0 : i32
    %c0_i32_1 = arith.constant 0 : i32
    %c0_i32_2 = arith.constant 0 : i32
    return %c0_i32, %c0_i32_0, %c0_i32_1 : i32, i32, i32
  }
  func.func @transform_7(%arg0: i32) -> (i32, i32) {
    %c0_i32 = arith.constant 0 : i32
    %c0_i32_0 = arith.constant 0 : i32
    %c0_i32_1 = arith.constant 0 : i32
    return %c0_i32, %c0_i32_0 : i32, i32
  }
  func.func @transform_8(%arg0: i32) -> (i32, i32) {
    %c0_i32 = arith.constant 0 : i32
    %c0_i32_0 = arith.constant 0 : i32
    %c0_i32_1 = arith.constant 0 : i32
    return %c0_i32, %c0_i32_0 : i32, i32
  }
  func.func @transform_9(%arg0: i32) -> (i32, i32) {
    %c0_i32 = arith.constant 0 : i32
    %c0_i32_0 = arith.constant 0 : i32
    %c0_i32_1 = arith.constant 0 : i32
    return %c0_i32, %c0_i32_0 : i32, i32
  }
  func.func @transform_10(%arg0: i32) -> (i32, i32, i32) {
    %c0_i32 = arith.constant 0 : i32
    %c0_i32_0 = arith.constant 0 : i32
    %c0_i32_1 = arith.constant 0 : i32
    %c0_i32_2 = arith.constant 0 : i32
    return %c0_i32, %c0_i32_0, %c0_i32_1 : i32, i32, i32
  }
  func.func @transform_11(%arg0: i32) -> (i32, i32) {
    %c0_i32 = arith.constant 0 : i32
    %c0_i32_0 = arith.constant 0 : i32
    %c0_i32_1 = arith.constant 0 : i32
    return %c0_i32, %c0_i32_0 : i32, i32
  }
  func.func @transform_12(%arg0: i32) -> (i32, i32, i32) {
    %c0_i32 = arith.constant 0 : i32
    %c0_i32_0 = arith.constant 0 : i32
    %c0_i32_1 = arith.constant 0 : i32
    %c0_i32_2 = arith.constant 0 : i32
    return %c0_i32, %c0_i32_0, %c0_i32_1 : i32, i32, i32
  }
  func.func @transform_13(%arg0: i32) -> (i32, i32) {
    %c0_i32 = arith.constant 0 : i32
    %c0_i32_0 = arith.constant 0 : i32
    %c0_i32_1 = arith.constant 0 : i32
    return %c0_i32, %c0_i32_0 : i32, i32
  }
  func.func @transform_14(%arg0: i32) -> (i32, i32) {
    %c0_i32 = arith.constant 0 : i32
    %c0_i32_0 = arith.constant 0 : i32
    %c0_i32_1 = arith.constant 0 : i32
    return %c0_i32, %c0_i32_0 : i32, i32
  }
  func.func @transform_15(%arg0: i32) -> (i32, i32) {
    %c0_i32 = arith.constant 0 : i32
    %c0_i32_0 = arith.constant 0 : i32
    %c0_i32_1 = arith.constant 0 : i32
    return %c0_i32, %c0_i32_0 : i32, i32
  }
  func.func @transform_16(%arg0: i32) -> (i32, i32) {
    %c0_i32 = arith.constant 0 : i32
    %c0_i32_0 = arith.constant 0 : i32
    %c0_i32_1 = arith.constant 0 : i32
    return %c0_i32, %c0_i32_0 : i32, i32
  }
  func.func @transform_17(%arg0: i32) -> (i32, i32) {
    %c0_i32 = arith.constant 0 : i32
    %c0_i32_0 = arith.constant 0 : i32
    %c0_i32_1 = arith.constant 0 : i32
    return %c0_i32, %c0_i32_0 : i32, i32
  }
  func.func @transform_18(%arg0: i32) -> (i32, i32, i32) {
    %c0_i32 = arith.constant 0 : i32
    %c0_i32_0 = arith.constant 0 : i32
    %c0_i32_1 = arith.constant 0 : i32
    return %arg0, %c0_i32, %c0_i32_0 : i32, i32, i32
  }
}

</mosaic_0001>

<llo_original>
// kernel: _forward.1
$region0: #{_forward.1}
  #allocation0 [shape = 'u32[]', space=smem, size = 0x4, offset = 0x4, fixed_abs, tag = 'smem constant byte address 0x4 - core index']
  #allocation1 [shape = 'u32[72,128]{1,0:T(1,128)}', space=vmem, size = 0x9000, scoped, tag = 'internal scratch']
  #allocation2 [shape = 'f32[128,64]{1,0:T(8,128)}', space=vmem, size = 0x10000, scoped, tag = 'scratch operand']
  #allocation3 [shape = 'f32[32,32]{1,0:T(8,128)}', space=vmem, size = 0x4000, scoped, tag = 'scratch operand']
  #allocation4 [shape = 'f32[32,32]{1,0:T(8,128)}', space=vmem, size = 0x4000, scoped, tag = 'scratch operand']
  #allocation5 [shape = 'f32[8,16]{1,0:T(8,128)}', space=vmem, size = 0x1000, scoped, tag = 'scratch operand']
  #allocation6 [shape = 'f32[1,176]{1,0:T(1,128)}', space=vmem, size = 0x400, scoped, tag = 'scratch operand']
  %s0 = inlined_call_operand.vmem [shape: bf16[2,4,128,200], index: 0, kind: input, shape index: {}]
  %s1 = inlined_call_operand.vmem [shape: bf16[2,4,32,400], index: 1, kind: input, shape index: {}]
  %s2 = inlined_call_operand.vmem [shape: bf16[200,128], index: 2, kind: input, shape index: {}]
  %s3 = inlined_call_operand.vmem [shape: f32[1,128], index: 3, kind: input, shape index: {}]
  %s4 = inlined_call_operand.vmem [shape: bf16[8,128,64], index: 4, kind: input, shape index: {}]
  %s5 = inlined_call_operand.vmem [shape: f32[1,64], index: 5, kind: input, shape index: {}]
  %s6 = inlined_call_operand.vmem [shape: bf16[8,64,32], index: 6, kind: input, shape index: {}]
  %s7 = inlined_call_operand.vmem [shape: f32[1,32], index: 7, kind: input, shape index: {}]
  %s8 = inlined_call_operand.vmem [shape: bf16[400,64], index: 8, kind: input, shape index: {}]
  %s9 = inlined_call_operand.vmem [shape: f32[1,64], index: 9, kind: input, shape index: {}]
  %s10 = inlined_call_operand.vmem [shape: bf16[4,64,32], index: 10, kind: input, shape index: {}]
  %s11 = inlined_call_operand.vmem [shape: f32[1,32], index: 11, kind: input, shape index: {}]
  %s12 = inlined_call_operand.vmem [shape: bf16[4,32,16], index: 12, kind: input, shape index: {}]
  %s13 = inlined_call_operand.vmem [shape: f32[1,16], index: 13, kind: input, shape index: {}]
  %s14 = inlined_call_operand.vmem [shape: bf16[176,64], index: 14, kind: input, shape index: {}]
  %s15 = inlined_call_operand.vmem [shape: f32[1,64], index: 15, kind: input, shape index: {}]
  %s16 = inlined_call_operand.vmem [shape: bf16[64,5], index: 16, kind: input, shape index: {}]
  %s17 = inlined_call_operand.vmem [shape: f32[1,5], index: 17, kind: input, shape index: {}]
  %s18 = inlined_call_operand.hbm [shape: f32[2,1,5], index: 18, kind: output, shape index: {}]
  %s19 = sld [smem:[#allocation0]]
  $region105: #{_forward.1} parent=0
    _
  %s21 = ssub.s32 1, %s19
  %s22 = scalar_select 0, %s21, %s19
  $region1: #{_forward.1} parent=0
    #allocation7 [shape = 'u8[1024]{0}', space=vmem, size = 0x400, scoped, tag = 'output window, operand 0']
    #allocation8 [shape = 's32[2]{0}', space=sflag, size = 0x8, scoped, tag = 'scoped memory for _forward.1']
    %23 = vsyncpa [#allocation8], 0
    %s24 = scalar_lea.sflag [#allocation8], 1
    %25 = vsyncpa %s24, 0
    loop: start=0, step=1, limit=4
    $region2: #{_forward.1} parent=1 // loop_pre_header
      _
    $region3: #{_forward.1} parent=1 // loop_header
      %s27 = sphi 0, %s31
      %p28 = scmp.ge.s32.totalorder %s27, 4
      %s37 = sphi 0, %s39
      %s40 = sphi 0, %s37
      %s41 = sphi 0, %s40
      %s57 = sphi 0, %s41
      %s63 = sphi 0, %s65
      %s66 = sphi 0, %s63
      %s67 = sphi 0, %s66
      %s83 = sphi 0, %s67
      %s87 = sphi 0, %s87
      %s89 = sphi 0, %s87
      %s90 = sphi 0, %s89
      %s104 = sphi 0, %s90
      %s108 = sphi 0, %s108
      %s110 = sphi 0, %s108
      %s111 = sphi 0, %s110
      %s125 = sphi 0, %s111
      %s129 = sphi 0, %s129
      %s131 = sphi 0, %s129
      %s132 = sphi 0, %s131
      %s146 = sphi 0, %s132
      %s150 = sphi 0, %s150
      %s152 = sphi 0, %s150
      %s153 = sphi 0, %s152
      %s167 = sphi 0, %s153
      %s171 = sphi 0, %s171
      %s173 = sphi 0, %s171
      %s174 = sphi 0, %s173
      %s188 = sphi 0, %s174
      %s192 = sphi 0, %s192
      %s194 = sphi 0, %s192
      %s195 = sphi 0, %s194
      %s209 = sphi 0, %s195
      %s213 = sphi 0, %s213
      %s215 = sphi 0, %s213
      %s216 = sphi 0, %s215
      %s230 = sphi 0, %s216
      %s234 = sphi 0, %s234
      %s236 = sphi 0, %s234
      %s237 = sphi 0, %s236
      %s251 = sphi 0, %s237
      %s255 = sphi 0, %s255
      %s257 = sphi 0, %s255
      %s258 = sphi 0, %s257
      %s272 = sphi 0, %s258
      %s276 = sphi 0, %s276
      %s278 = sphi 0, %s276
      %s279 = sphi 0, %s278
      %s293 = sphi 0, %s279
      %s297 = sphi 0, %s297
      %s299 = sphi 0, %s297
      %s300 = sphi 0, %s299
      %s314 = sphi 0, %s300
      %s318 = sphi 0, %s318
      %s320 = sphi 0, %s318
      %s321 = sphi 0, %s320
      %s335 = sphi 0, %s321
      %s339 = sphi 0, %s339
      %s341 = sphi 0, %s339
      %s342 = sphi 0, %s341
      %s356 = sphi 0, %s342
      %s360 = sphi 0, %s360
      %s362 = sphi 0, %s360
      %s363 = sphi 0, %s362
      %s377 = sphi 0, %s363
      %s381 = sphi 0, %s381
      %s383 = sphi 0, %s381
      %s384 = sphi 0, %s383
      %s398 = sphi 0, %s384
      %s402 = sphi 0, %s402
      %s404 = sphi 0, %s402
      %s405 = sphi 0, %s404
      %s419 = sphi 0, %s405
      %s425 = sphi 0, %s427
      %s428 = sphi 0, %s425
      %s429 = sphi 0, %s428
      %s445 = sphi 0, %s429
    $region4: #{_forward.1} parent=1 // loop_header_branch
      %30 = sbr.rel (%p28) target = $region8
    $region5: #{_forward.1} parent=1 // loop_body
      %s32 = ssub.s32 %s27, 1
      %s33 = ssub.s32 %s27, 2
      %s34 = sadd.s32 %s27, 1
      %s35 = ssub.s32 %s27, %s34
      %p36 = scmp.eq.s32.totalorder %s35, 0
      %s38 = sadd.s32 %s37, 1
      %s39 = scalar_select %p36, %s37, %s38
      %p42 = pneg %p36
      %p43 = scmp.eq.s32.totalorder %s27, 1
      %p44 = por %p42, %p43
      %p45 = scmp.ne.s32.totalorder %s37, %s40
      %p46 = scmp.eq.s32.totalorder %s27, 0
      %p47 = por %p45, %p46
      %p48 = scmp.ne.s32.totalorder %s37, %s40
      %p49 = scmp.eq.s32.totalorder %s32, 1
      %p50 = por %p48, %p49
      %p51 = scmp.ne.s32.totalorder %s40, %s41
      %p52 = scmp.eq.s32.totalorder %s32, 0
      %p53 = por %p51, %p52
      %p54 = scmp.ne.s32.totalorder %s40, %s41
      %p55 = scmp.eq.s32.totalorder %s33, 1
      %p56 = por %p54, %p55
      %p58 = scmp.ne.s32.totalorder %s41, %s57
      %p59 = scmp.eq.s32.totalorder %s33, 0
      %p60 = por %p58, %p59
      %s61 = ssub.s32 %s27, %s34
      %p62 = scmp.eq.s32.totalorder %s61, 0
      %s64 = sadd.s32 %s63, 1
      %s65 = scalar_select %p62, %s63, %s64
      %p68 = pneg %p62
      %p69 = scmp.eq.s32.totalorder %s27, 1
      %p70 = por %p68, %p69
      %p71 = scmp.ne.s32.totalorder %s63, %s66
      %p72 = scmp.eq.s32.totalorder %s27, 0
      %p73 = por %p71, %p72
      %p74 = scmp.ne.s32.totalorder %s63, %s66
      %p75 = scmp.eq.s32.totalorder %s32, 1
      %p76 = por %p74, %p75
      %p77 = scmp.ne.s32.totalorder %s66, %s67
      %p78 = scmp.eq.s32.totalorder %s32, 0
      %p79 = por %p77, %p78
      %p80 = scmp.ne.s32.totalorder %s66, %s67
      %p81 = scmp.eq.s32.totalorder %s33, 1
      %p82 = por %p80, %p81
      %p84 = scmp.ne.s32.totalorder %s67, %s83
      %p85 = scmp.eq.s32.totalorder %s33, 0
      %p86 = por %p84, %p85
      %s88 = sadd.s32 %s87, 1
      %p91 = scmp.eq.s32.totalorder %s27, 1
      %p92 = scmp.ne.s32.totalorder %s87, %s89
      %p93 = scmp.eq.s32.totalorder %s27, 0
      %p94 = por %p92, %p93
      %p95 = scmp.ne.s32.totalorder %s87, %s89
      %p96 = scmp.eq.s32.totalorder %s32, 1
      %p97 = por %p95, %p96
      %p98 = scmp.ne.s32.totalorder %s89, %s90
      %p99 = scmp.eq.s32.totalorder %s32, 0
      %p100 = por %p98, %p99
      %p101 = scmp.ne.s32.totalorder %s89, %s90
      %p102 = scmp.eq.s32.totalorder %s33, 1
      %p103 = por %p101, %p102
      %p105 = scmp.ne.s32.totalorder %s90, %s104
      %p106 = scmp.eq.s32.totalorder %s33, 0
      %p107 = por %p105, %p106
      %s109 = sadd.s32 %s108, 1
      %p112 = scmp.eq.s32.totalorder %s27, 1
      %p113 = scmp.ne.s32.totalorder %s108, %s110
      %p114 = scmp.eq.s32.totalorder %s27, 0
      %p115 = por %p113, %p114
      %p116 = scmp.ne.s32.totalorder %s108, %s110
      %p117 = scmp.eq.s32.totalorder %s32, 1
      %p118 = por %p116, %p117
      %p119 = scmp.ne.s32.totalorder %s110, %s111
      %p120 = scmp.eq.s32.totalorder %s32, 0
      %p121 = por %p119, %p120
      %p122 = scmp.ne.s32.totalorder %s110, %s111
      %p123 = scmp.eq.s32.totalorder %s33, 1
      %p124 = por %p122, %p123
      %p126 = scmp.ne.s32.totalorder %s111, %s125
      %p127 = scmp.eq.s32.totalorder %s33, 0
      %p128 = por %p126, %p127
      %s130 = sadd.s32 %s129, 1
      %p133 = scmp.eq.s32.totalorder %s27, 1
      %p134 = scmp.ne.s32.totalorder %s129, %s131
      %p135 = scmp.eq.s32.totalorder %s27, 0
      %p136 = por %p134, %p135
      %p137 = scmp.ne.s32.totalorder %s129, %s131
      %p138 = scmp.eq.s32.totalorder %s32, 1
      %p139 = por %p137, %p138
      %p140 = scmp.ne.s32.totalorder %s131, %s132
      %p141 = scmp.eq.s32.totalorder %s32, 0
      %p142 = por %p140, %p141
      %p143 = scmp.ne.s32.totalorder %s131, %s132
      %p144 = scmp.eq.s32.totalorder %s33, 1
      %p145 = por %p143, %p144
      %p147 = scmp.ne.s32.totalorder %s132, %s146
      %p148 = scmp.eq.s32.totalorder %s33, 0
      %p149 = por %p147, %p148
      %s151 = sadd.s32 %s150, 1
      %p154 = scmp.eq.s32.totalorder %s27, 1
      %p155 = scmp.ne.s32.totalorder %s150, %s152
      %p156 = scmp.eq.s32.totalorder %s27, 0
      %p157 = por %p155, %p156
      %p158 = scmp.ne.s32.totalorder %s150, %s152
      %p159 = scmp.eq.s32.totalorder %s32, 1
      %p160 = por %p158, %p159
      %p161 = scmp.ne.s32.totalorder %s152, %s153
      %p162 = scmp.eq.s32.totalorder %s32, 0
      %p163 = por %p161, %p162
      %p164 = scmp.ne.s32.totalorder %s152, %s153
      %p165 = scmp.eq.s32.totalorder %s33, 1
      %p166 = por %p164, %p165
      %p168 = scmp.ne.s32.totalorder %s153, %s167
      %p169 = scmp.eq.s32.totalorder %s33, 0
      %p170 = por %p168, %p169
      %s172 = sadd.s32 %s171, 1
      %p175 = scmp.eq.s32.totalorder %s27, 1
      %p176 = scmp.ne.s32.totalorder %s171, %s173
      %p177 = scmp.eq.s32.totalorder %s27, 0
      %p178 = por %p176, %p177
      %p179 = scmp.ne.s32.totalorder %s171, %s173
      %p180 = scmp.eq.s32.totalorder %s32, 1
      %p181 = por %p179, %p180
      %p182 = scmp.ne.s32.totalorder %s173, %s174
      %p183 = scmp.eq.s32.totalorder %s32, 0
      %p184 = por %p182, %p183
      %p185 = scmp.ne.s32.totalorder %s173, %s174
      %p186 = scmp.eq.s32.totalorder %s33, 1
      %p187 = por %p185, %p186
      %p189 = scmp.ne.s32.totalorder %s174, %s188
      %p190 = scmp.eq.s32.totalorder %s33, 0
      %p191 = por %p189, %p190
      %s193 = sadd.s32 %s192, 1
      %p196 = scmp.eq.s32.totalorder %s27, 1
      %p197 = scmp.ne.s32.totalorder %s192, %s194
      %p198 = scmp.eq.s32.totalorder %s27, 0
      %p199 = por %p197, %p198
      %p200 = scmp.ne.s32.totalorder %s192, %s194
      %p201 = scmp.eq.s32.totalorder %s32, 1
      %p202 = por %p200, %p201
      %p203 = scmp.ne.s32.totalorder %s194, %s195
      %p204 = scmp.eq.s32.totalorder %s32, 0
      %p205 = por %p203, %p204
      %p206 = scmp.ne.s32.totalorder %s194, %s195
      %p207 = scmp.eq.s32.totalorder %s33, 1
      %p208 = por %p206, %p207
      %p210 = scmp.ne.s32.totalorder %s195, %s209
      %p211 = scmp.eq.s32.totalorder %s33, 0
      %p212 = por %p210, %p211
      %s214 = sadd.s32 %s213, 1
      %p217 = scmp.eq.s32.totalorder %s27, 1
      %p218 = scmp.ne.s32.totalorder %s213, %s215
      %p219 = scmp.eq.s32.totalorder %s27, 0
      %p220 = por %p218, %p219
      %p221 = scmp.ne.s32.totalorder %s213, %s215
      %p222 = scmp.eq.s32.totalorder %s32, 1
      %p223 = por %p221, %p222
      %p224 = scmp.ne.s32.totalorder %s215, %s216
      %p225 = scmp.eq.s32.totalorder %s32, 0
      %p226 = por %p224, %p225
      %p227 = scmp.ne.s32.totalorder %s215, %s216
      %p228 = scmp.eq.s32.totalorder %s33, 1
      %p229 = por %p227, %p228
      %p231 = scmp.ne.s32.totalorder %s216, %s230
      %p232 = scmp.eq.s32.totalorder %s33, 0
      %p233 = por %p231, %p232
      %s235 = sadd.s32 %s234, 1
      %p238 = scmp.eq.s32.totalorder %s27, 1
      %p239 = scmp.ne.s32.totalorder %s234, %s236
      %p240 = scmp.eq.s32.totalorder %s27, 0
      %p241 = por %p239, %p240
      %p242 = scmp.ne.s32.totalorder %s234, %s236
      %p243 = scmp.eq.s32.totalorder %s32, 1
      %p244 = por %p242, %p243
      %p245 = scmp.ne.s32.totalorder %s236, %s237
      %p246 = scmp.eq.s32.totalorder %s32, 0
      %p247 = por %p245, %p246
      %p248 = scmp.ne.s32.totalorder %s236, %s237
      %p249 = scmp.eq.s32.totalorder %s33, 1
      %p250 = por %p248, %p249
      %p252 = scmp.ne.s32.totalorder %s237, %s251
      %p253 = scmp.eq.s32.totalorder %s33, 0
      %p254 = por %p252, %p253
      %s256 = sadd.s32 %s255, 1
      %p259 = scmp.eq.s32.totalorder %s27, 1
      %p260 = scmp.ne.s32.totalorder %s255, %s257
      %p261 = scmp.eq.s32.totalorder %s27, 0
      %p262 = por %p260, %p261
      %p263 = scmp.ne.s32.totalorder %s255, %s257
      %p264 = scmp.eq.s32.totalorder %s32, 1
      %p265 = por %p263, %p264
      %p266 = scmp.ne.s32.totalorder %s257, %s258
      %p267 = scmp.eq.s32.totalorder %s32, 0
      %p268 = por %p266, %p267
      %p269 = scmp.ne.s32.totalorder %s257, %s258
      %p270 = scmp.eq.s32.totalorder %s33, 1
      %p271 = por %p269, %p270
      %p273 = scmp.ne.s32.totalorder %s258, %s272
      %p274 = scmp.eq.s32.totalorder %s33, 0
      %p275 = por %p273, %p274
      %s277 = sadd.s32 %s276, 1
      %p280 = scmp.eq.s32.totalorder %s27, 1
      %p281 = scmp.ne.s32.totalorder %s276, %s278
      %p282 = scmp.eq.s32.totalorder %s27, 0
      %p283 = por %p281, %p282
      %p284 = scmp.ne.s32.totalorder %s276, %s278
      %p285 = scmp.eq.s32.totalorder %s32, 1
      %p286 = por %p284, %p285
      %p287 = scmp.ne.s32.totalorder %s278, %s279
      %p288 = scmp.eq.s32.totalorder %s32, 0
      %p289 = por %p287, %p288
      %p290 = scmp.ne.s32.totalorder %s278, %s279
      %p291 = scmp.eq.s32.totalorder %s33, 1
      %p292 = por %p290, %p291
      %p294 = scmp.ne.s32.totalorder %s279, %s293
      %p295 = scmp.eq.s32.totalorder %s33, 0
      %p296 = por %p294, %p295
      %s298 = sadd.s32 %s297, 1
      %p301 = scmp.eq.s32.totalorder %s27, 1
      %p302 = scmp.ne.s32.totalorder %s297, %s299
      %p303 = scmp.eq.s32.totalorder %s27, 0
      %p304 = por %p302, %p303
      %p305 = scmp.ne.s32.totalorder %s297, %s299
      %p306 = scmp.eq.s32.totalorder %s32, 1
      %p307 = por %p305, %p306
      %p308 = scmp.ne.s32.totalorder %s299, %s300
      %p309 = scmp.eq.s32.totalorder %s32, 0
      %p310 = por %p308, %p309
      %p311 = scmp.ne.s32.totalorder %s299, %s300
      %p312 = scmp.eq.s32.totalorder %s33, 1
      %p313 = por %p311, %p312
      %p315 = scmp.ne.s32.totalorder %s300, %s314
      %p316 = scmp.eq.s32.totalorder %s33, 0
      %p317 = por %p315, %p316
      %s319 = sadd.s32 %s318, 1
      %p322 = scmp.eq.s32.totalorder %s27, 1
      %p323 = scmp.ne.s32.totalorder %s318, %s320
      %p324 = scmp.eq.s32.totalorder %s27, 0
      %p325 = por %p323, %p324
      %p326 = scmp.ne.s32.totalorder %s318, %s320
      %p327 = scmp.eq.s32.totalorder %s32, 1
      %p328 = por %p326, %p327
      %p329 = scmp.ne.s32.totalorder %s320, %s321
      %p330 = scmp.eq.s32.totalorder %s32, 0
      %p331 = por %p329, %p330
      %p332 = scmp.ne.s32.totalorder %s320, %s321
      %p333 = scmp.eq.s32.totalorder %s33, 1
      %p334 = por %p332, %p333
      %p336 = scmp.ne.s32.totalorder %s321, %s335
      %p337 = scmp.eq.s32.totalorder %s33, 0
      %p338 = por %p336, %p337
      %s340 = sadd.s32 %s339, 1
      %p343 = scmp.eq.s32.totalorder %s27, 1
      %p344 = scmp.ne.s32.totalorder %s339, %s341
      %p345 = scmp.eq.s32.totalorder %s27, 0
      %p346 = por %p344, %p345
      %p347 = scmp.ne.s32.totalorder %s339, %s341
      %p348 = scmp.eq.s32.totalorder %s32, 1
      %p349 = por %p347, %p348
      %p350 = scmp.ne.s32.totalorder %s341, %s342
      %p351 = scmp.eq.s32.totalorder %s32, 0
      %p352 = por %p350, %p351
      %p353 = scmp.ne.s32.totalorder %s341, %s342
      %p354 = scmp.eq.s32.totalorder %s33, 1
      %p355 = por %p353, %p354
      %p357 = scmp.ne.s32.totalorder %s342, %s356
      %p358 = scmp.eq.s32.totalorder %s33, 0
      %p359 = por %p357, %p358
      %s361 = sadd.s32 %s360, 1
      %p364 = scmp.eq.s32.totalorder %s27, 1
      %p365 = scmp.ne.s32.totalorder %s360, %s362
      %p366 = scmp.eq.s32.totalorder %s27, 0
      %p367 = por %p365, %p366
      %p368 = scmp.ne.s32.totalorder %s360, %s362
      %p369 = scmp.eq.s32.totalorder %s32, 1
      %p370 = por %p368, %p369
      %p371 = scmp.ne.s32.totalorder %s362, %s363
      %p372 = scmp.eq.s32.totalorder %s32, 0
      %p373 = por %p371, %p372
      %p374 = scmp.ne.s32.totalorder %s362, %s363
      %p375 = scmp.eq.s32.totalorder %s33, 1
      %p376 = por %p374, %p375
      %p378 = scmp.ne.s32.totalorder %s363, %s377
      %p379 = scmp.eq.s32.totalorder %s33, 0
      %p380 = por %p378, %p379
      %s382 = sadd.s32 %s381, 1
      %p385 = scmp.eq.s32.totalorder %s27, 1
      %p386 = scmp.ne.s32.totalorder %s381, %s383
      %p387 = scmp.eq.s32.totalorder %s27, 0
      %p388 = por %p386, %p387
      %p389 = scmp.ne.s32.totalorder %s381, %s383
      %p390 = scmp.eq.s32.totalorder %s32, 1
      %p391 = por %p389, %p390
      %p392 = scmp.ne.s32.totalorder %s383, %s384
      %p393 = scmp.eq.s32.totalorder %s32, 0
      %p394 = por %p392, %p393
      %p395 = scmp.ne.s32.totalorder %s383, %s384
      %p396 = scmp.eq.s32.totalorder %s33, 1
      %p397 = por %p395, %p396
      %p399 = scmp.ne.s32.totalorder %s384, %s398
      %p400 = scmp.eq.s32.totalorder %s33, 0
      %p401 = por %p399, %p400
      %s403 = sadd.s32 %s402, 1
      %p406 = scmp.eq.s32.totalorder %s27, 1
      %p407 = scmp.ne.s32.totalorder %s402, %s404
      %p408 = scmp.eq.s32.totalorder %s27, 0
      %p409 = por %p407, %p408
      %p410 = scmp.ne.s32.totalorder %s402, %s404
      %p411 = scmp.eq.s32.totalorder %s32, 1
      %p412 = por %p410, %p411
      %p413 = scmp.ne.s32.totalorder %s404, %s405
      %p414 = scmp.eq.s32.totalorder %s32, 0
      %p415 = por %p413, %p414
      %p416 = scmp.ne.s32.totalorder %s404, %s405
      %p417 = scmp.eq.s32.totalorder %s33, 1
      %p418 = por %p416, %p417
      %p420 = scmp.ne.s32.totalorder %s405, %s419
      %p421 = scmp.eq.s32.totalorder %s33, 0
      %p422 = por %p420, %p421
      %s423 = ssub.s32 %s27, %s34
      %p424 = scmp.eq.s32.totalorder %s423, 0
      %s426 = sadd.s32 %s425, 1
      %s427 = scalar_select %p424, %s425, %s426
      %p430 = pneg %p424
      %p431 = scmp.eq.s32.totalorder %s27, 1
      %p432 = por %p430, %p431
      %p433 = scmp.ne.s32.totalorder %s425, %s428
      %p434 = scmp.eq.s32.totalorder %s27, 0
      %p435 = por %p433, %p434
      %p436 = scmp.ne.s32.totalorder %s425, %s428
      %p437 = scmp.eq.s32.totalorder %s32, 1
      %p438 = por %p436, %p437
      %p439 = scmp.ne.s32.totalorder %s428, %s429
      %p440 = scmp.eq.s32.totalorder %s32, 0
      %p441 = por %p439, %p440
      %p442 = scmp.ne.s32.totalorder %s428, %s429
      %p443 = scmp.eq.s32.totalorder %s33, 1
      %p444 = por %p442, %p443
      %p446 = scmp.ne.s32.totalorder %s429, %s445
      %p447 = scmp.eq.s32.totalorder %s33, 0
      %p448 = por %p446, %p447
      %p449 = scmp.le.s32.totalorder 1, %s27
      %p450 = scmp.lt.s32.totalorder %s27, 3
      %p451 = pnand %p449, %p450
      %p452 = pneg %p451
      // Predicated region
      $region9: #{_forward.1} parent=5 // pred_check
        _
      $region10: #{_forward.1} parent=5 // pred_check_branch
        %454 = sbr.rel (%p451) target = $region12
      $region11: #{_forward.1} parent=5 // pred_region
        %s455 = ssub.s32 %s27, 1
        // Predicated region
        $region13: #{_forward.1} parent=11 // pred_check
          %p456 = pneg %p100
        $region14: #{_forward.1} parent=11 // pred_check_branch
          %458 = sbr.rel (%p456) target = $region16
        $region15: #{_forward.1} parent=11 // pred_region
          _
        $region16: #{_forward.1} parent=11 // pred_fallthru
          _
        // Predicated region
        $region17: #{_forward.1} parent=11 // pred_check
          %p459 = pneg %p121
        $region18: #{_forward.1} parent=11 // pred_check_branch
          %461 = sbr.rel (%p459) target = $region20
        $region19: #{_forward.1} parent=11 // pred_region
          _
        $region20: #{_forward.1} parent=11 // pred_fallthru
          _
        // Predicated region
        $region21: #{_forward.1} parent=11 // pred_check
          %p462 = pneg %p142
        $region22: #{_forward.1} parent=11 // pred_check_branch
          %464 = sbr.rel (%p462) target = $region24
        $region23: #{_forward.1} parent=11 // pred_region
          _
        $region24: #{_forward.1} parent=11 // pred_fallthru
          _
        // Predicated region
        $region25: #{_forward.1} parent=11 // pred_check
          %p465 = pneg %p163
        $region26: #{_forward.1} parent=11 // pred_check_branch
          %467 = sbr.rel (%p465) target = $region28
        $region27: #{_forward.1} parent=11 // pred_region
          _
        $region28: #{_forward.1} parent=11 // pred_fallthru
          _
        // Predicated region
        $region29: #{_forward.1} parent=11 // pred_check
          %p468 = pneg %p184
        $region30: #{_forward.1} parent=11 // pred_check_branch
          %470 = sbr.rel (%p468) target = $region32
        $region31: #{_forward.1} parent=11 // pred_region
          _
        $region32: #{_forward.1} parent=11 // pred_fallthru
          _
        // Predicated region
        $region33: #{_forward.1} parent=11 // pred_check
          %p471 = pneg %p205
        $region34: #{_forward.1} parent=11 // pred_check_branch
          %473 = sbr.rel (%p471) target = $region36
        $region35: #{_forward.1} parent=11 // pred_region
          _
        $region36: #{_forward.1} parent=11 // pred_fallthru
          _
        // Predicated region
        $region37: #{_forward.1} parent=11 // pred_check
          %p474 = pneg %p226
        $region38: #{_forward.1} parent=11 // pred_check_branch
          %476 = sbr.rel (%p474) target = $region40
        $region39: #{_forward.1} parent=11 // pred_region
          _
        $region40: #{_forward.1} parent=11 // pred_fallthru
          _
        // Predicated region
        $region41: #{_forward.1} parent=11 // pred_check
          %p477 = pneg %p247
        $region42: #{_forward.1} parent=11 // pred_check_branch
          %479 = sbr.rel (%p477) target = $region44
        $region43: #{_forward.1} parent=11 // pred_region
          _
        $region44: #{_forward.1} parent=11 // pred_fallthru
          _
        // Predicated region
        $region45: #{_forward.1} parent=11 // pred_check
          %p480 = pneg %p268
        $region46: #{_forward.1} parent=11 // pred_check_branch
          %482 = sbr.rel (%p480) target = $region48
        $region47: #{_forward.1} parent=11 // pred_region
          _
        $region48: #{_forward.1} parent=11 // pred_fallthru
          _
        // Predicated region
        $region49: #{_forward.1} parent=11 // pred_check
          %p483 = pneg %p289
        $region50: #{_forward.1} parent=11 // pred_check_branch
          %485 = sbr.rel (%p483) target = $region52
        $region51: #{_forward.1} parent=11 // pred_region
          _
        $region52: #{_forward.1} parent=11 // pred_fallthru
          _
        // Predicated region
        $region53: #{_forward.1} parent=11 // pred_check
          %p486 = pneg %p310
        $region54: #{_forward.1} parent=11 // pred_check_branch
          %488 = sbr.rel (%p486) target = $region56
        $region55: #{_forward.1} parent=11 // pred_region
          _
        $region56: #{_forward.1} parent=11 // pred_fallthru
          _
        // Predicated region
        $region57: #{_forward.1} parent=11 // pred_check
          %p489 = pneg %p331
        $region58: #{_forward.1} parent=11 // pred_check_branch
          %491 = sbr.rel (%p489) target = $region60
        $region59: #{_forward.1} parent=11 // pred_region
          _
        $region60: #{_forward.1} parent=11 // pred_fallthru
          _
        // Predicated region
        $region61: #{_forward.1} parent=11 // pred_check
          %p492 = pneg %p352
        $region62: #{_forward.1} parent=11 // pred_check_branch
          %494 = sbr.rel (%p492) target = $region64
        $region63: #{_forward.1} parent=11 // pred_region
          _
        $region64: #{_forward.1} parent=11 // pred_fallthru
          _
        // Predicated region
        $region65: #{_forward.1} parent=11 // pred_check
          %p495 = pneg %p373
        $region66: #{_forward.1} parent=11 // pred_check_branch
          %497 = sbr.rel (%p495) target = $region68
        $region67: #{_forward.1} parent=11 // pred_region
          _
        $region68: #{_forward.1} parent=11 // pred_fallthru
          _
        // Predicated region
        $region69: #{_forward.1} parent=11 // pred_check
          %p498 = pneg %p394
        $region70: #{_forward.1} parent=11 // pred_check_branch
          %500 = sbr.rel (%p498) target = $region72
        $region71: #{_forward.1} parent=11 // pred_region
          _
        $region72: #{_forward.1} parent=11 // pred_fallthru
          _
        // Predicated region
        $region73: #{_forward.1} parent=11 // pred_check
          %p501 = pneg %p415
        $region74: #{_forward.1} parent=11 // pred_check_branch
          %503 = sbr.rel (%p501) target = $region76
        $region75: #{_forward.1} parent=11 // pred_region
          _
        $region76: #{_forward.1} parent=11 // pred_fallthru
          _
      $region12: #{_forward.1} parent=5 // pred_fallthru
        _
      %p504 = scmp.lt.s32.totalorder %s27, 2
      // Predicated region
      $region77: #{_forward.1} parent=5 // pred_check
        %p505 = pneg %p504
      $region78: #{_forward.1} parent=5 // pred_check_branch
        %507 = sbr.rel (%p505) target = $region80
      $region79: #{_forward.1} parent=5 // pred_region
        // Predicated region
        $region81: #{_forward.1} parent=79 // pred_check
          %p508 = pneg %p47
        $region82: #{_forward.1} parent=79 // pred_check_branch
          %510 = sbr.rel (%p508) target = $region84
        $region83: #{_forward.1} parent=79 // pred_region
          %p511 = scmp.lt.s32.totalorder %s27, 1
          %s512 = scalar_select %p511, %s27, 1
          %s513 = smul.addr %s512, 128
          %s514 = smul.addr %s513, 4
          %s515 = scalar_lea.vmem %s0, %s514
        $region84: #{_forward.1} parent=79 // pred_fallthru
          _
        // Predicated region
        $region85: #{_forward.1} parent=79 // pred_check
          %p516 = pneg %p73
        $region86: #{_forward.1} parent=79 // pred_check_branch
          %518 = sbr.rel (%p516) target = $region88
        $region87: #{_forward.1} parent=79 // pred_region
          %p519 = scmp.lt.s32.totalorder %s27, 1
          %s520 = scalar_select %p519, %s27, 1
          %s521 = smul.addr %s520, 64
          %s522 = smul.addr %s521, 4
          %s523 = scalar_lea.vmem %s1, %s522
        $region88: #{_forward.1} parent=79 // pred_fallthru
          _
      $region80: #{_forward.1} parent=5 // pred_fallthru
        _
      %p524 = scmp.le.s32.totalorder 1, %s27
      %p525 = scmp.lt.s32.totalorder %s27, 3
      %p526 = pnand %p524, %p525
      %p527 = pneg %p526
      // Predicated region
      $region89: #{_forward.1} parent=5 // pred_check
        _
      $region90: #{_forward.1} parent=5 // pred_check_branch
        %529 = sbr.rel (%p526) target = $region92
      $region91: #{_forward.1} parent=5 // pred_region
        %s530 = ssub.s32 %s27, 1
        %p531 = scmp.lt.s32.totalorder %s32, 1
        %s532 = scalar_select %p531, %s32, 1
        %s533 = smul.addr %s532, 128
        %s534 = smul.addr %s533, 4
        %s535 = scalar_lea.vmem %s0, %s534
        %p536 = pneg %p53
        %p537 = pneg %p50
        %p538 = scmp.lt.s32.totalorder %s32, 1
        %s539 = scalar_select %p538, %s32, 1
        %s540 = smul.addr %s539, 64
        %s541 = smul.addr %s540, 4
        %s542 = scalar_lea.vmem %s1, %s541
        %p543 = pneg %p79
        %p544 = pneg %p76
        %p545 = pneg %p100
        %p546 = pneg %p97
        %p547 = pneg %p121
        %p548 = pneg %p118
        %p549 = pneg %p142
        %p550 = pneg %p139
        %p551 = pneg %p163
        %p552 = pneg %p160
        %p553 = pneg %p184
        %p554 = pneg %p181
        %p555 = pneg %p205
        %p556 = pneg %p202
        %p557 = pneg %p226
        %p558 = pneg %p223
        %p559 = pneg %p247
        %p560 = pneg %p244
        %p561 = pneg %p268
        %p562 = pneg %p265
        %p563 = pneg %p289
        %p564 = pneg %p286
        %p565 = pneg %p310
        %p566 = pneg %p307
        %p567 = pneg %p331
        %p568 = pneg %p328
        %p569 = pneg %p352
        %p570 = pneg %p349
        %p571 = pneg %p373
        %p572 = pneg %p370
        %p573 = pneg %p394
        %p574 = pneg %p391
        %p575 = pneg %p415
        %p576 = pneg %p412
        %p577 = pneg %p441
        %p578 = pneg %p438
        %s579 = sand.u32 %s428, 1
        %s580 = scalar_lea.sflag [#allocation8], %s579
        %s581 = sand.u32 %s428, 1
        %s582 = scalar_lea.vmem [#allocation7], %s581
        %p583 = scmp.lt.s32.totalorder %s32, 1
        %s584 = scalar_select %p583, %s32, 1
        %s585 = smul.addr %s584, 128
        %s586 = smul.addr %s585, 4
        %s587 = scalar_lea.vmem %s0, %s586
        %p588 = scmp.lt.s32.totalorder %s32, 1
        %s589 = scalar_select %p588, %s32, 1
        %s590 = smul.addr %s589, 64
        %s591 = smul.addr %s590, 4
        %s592 = scalar_lea.vmem %s1, %s591
        %v594 = vld [vmem:[%s2] sm:$0xf]
        %v595 = vld [vmem:[%s2 + $0x4] sm:$0xf]
        %v596 = vld [vmem:[%s2 + $0x8] sm:$0xf]
        %v597 = vld [vmem:[%s2 + $0xc] sm:$0xf]
        %v598 = vld [vmem:[%s2 + $0x10] sm:$0xf]
        %v599 = vld [vmem:[%s2 + $0x14] sm:$0xf]
        %v600 = vld [vmem:[%s2 + $0x18] sm:$0xf]
        %v601 = vld [vmem:[%s2 + $0x1c] sm:$0xf]
        %v602 = vld [vmem:[%s2 + $0x20] sm:$0xf]
        %v603 = vld [vmem:[%s2 + $0x24] sm:$0xf]
        %v604 = vld [vmem:[%s2 + $0x28] sm:$0xf]
        %v605 = vld [vmem:[%s2 + $0x2c] sm:$0xf]
        %v606 = vld [vmem:[%s2 + $0x30] sm:$0xf]
        %v607 = vld [vmem:[%s2 + $0x34] sm:$0xf]
        %v608 = vld [vmem:[%s2 + $0x38] sm:$0xf]
        %v609 = vld [vmem:[%s2 + $0x3c] sm:$0xf]
        %v610 = vld [vmem:[%s2 + $0x40] sm:$0xf]
        %v611 = vld [vmem:[%s2 + $0x44] sm:$0xf]
        %v612 = vld [vmem:[%s2 + $0x48] sm:$0xf]
        %v613 = vld [vmem:[%s2 + $0x4c] sm:$0xf]
        %v614 = vld [vmem:[%s2 + $0x50] sm:$0xf]
        %v615 = vld [vmem:[%s2 + $0x54] sm:$0xf]
        %v616 = vld [vmem:[%s2 + $0x58] sm:$0xf]
        %v617 = vld [vmem:[%s2 + $0x5c] sm:$0xf]
        %v618 = vld [vmem:[%s2 + $0x60] sm:$0xf]
        %v619 = vld [vmem:[%s587] sm:$0xff]
        %v620 = vld [vmem:[%s587 + $0x8] sm:$0xff]
        %v621 = vld [vmem:[%s587 + $0x10] sm:$0xff]
        %v622 = vld [vmem:[%s587 + $0x18] sm:$0xff]
        %v623 = vld [vmem:[%s587 + $0x20] sm:$0xff]
        %v624 = vld [vmem:[%s587 + $0x28] sm:$0xff]
        %v625 = vld [vmem:[%s587 + $0x30] sm:$0xff]
        %v626 = vld [vmem:[%s587 + $0x38] sm:$0xff]
        %v627 = vld [vmem:[%s587 + $0x40] sm:$0xff]
        %v628 = vld [vmem:[%s587 + $0x48] sm:$0xff]
        %v629 = vld [vmem:[%s587 + $0x50] sm:$0xff]
        %v630 = vld [vmem:[%s587 + $0x58] sm:$0xff]
        %v631 = vld [vmem:[%s587 + $0x60] sm:$0xff]
        %v632 = vld [vmem:[%s587 + $0x68] sm:$0xff]
        %v633 = vld [vmem:[%s587 + $0x70] sm:$0xff]
        %v634 = vld [vmem:[%s587 + $0x78] sm:$0xff]
        %v651 = vunpack.c.l.b16 %v619
        %v652 = vunpack.c.h.b16 %v619
        %v653 = vunpack.c.l.b16 %v620
        %v654 = vunpack.c.h.b16 %v620
        %v655 = vunpack.c.l.b16 %v621
        %v656 = vunpack.c.h.b16 %v621
        %v657 = vunpack.c.l.b16 %v622
        %v658 = vunpack.c.h.b16 %v622
        %v659 = vunpack.c.l.b16 %v623
        %v660 = vunpack.c.h.b16 %v623
        %v661 = vunpack.c.l.b16 %v624
        %v662 = vunpack.c.h.b16 %v624
        %v663 = vunpack.c.l.b16 %v625
        %v664 = vunpack.c.h.b16 %v625
        %v665 = vunpack.c.l.b16 %v626
        %v666 = vunpack.c.h.b16 %v626
        %v667 = vunpack.c.l.b16 %v627
        %v668 = vunpack.c.h.b16 %v627
        %v669 = vunpack.c.l.b16 %v628
        %v670 = vunpack.c.h.b16 %v628
        %v671 = vunpack.c.l.b16 %v629
        %v672 = vunpack.c.h.b16 %v629
        %v673 = vunpack.c.l.b16 %v630
        %v674 = vunpack.c.h.b16 %v630
        %v675 = vunpack.c.l.b16 %v631
        %v676 = vunpack.c.h.b16 %v631
        %v677 = vunpack.c.l.b16 %v632
        %v678 = vunpack.c.h.b16 %v632
        %v679 = vunpack.c.l.b16 %v633
        %v680 = vunpack.c.h.b16 %v633
        %v681 = vunpack.c.l.b16 %v634
        %v682 = vunpack.c.h.b16 %v634
        %v683 = vpack.c.b16 %v653, %v651
        %v684 = vpack.c.b16 %v654, %v652
        %v685 = vpack.c.b16 %v657, %v655
        %v686 = vpack.c.b16 %v658, %v656
        %v687 = vpack.c.b16 %v661, %v659
        %v688 = vpack.c.b16 %v662, %v660
        %v689 = vpack.c.b16 %v665, %v663
        %v690 = vpack.c.b16 %v666, %v664
        %v691 = vpack.c.b16 %v669, %v667
        %v692 = vpack.c.b16 %v670, %v668
        %v693 = vpack.c.b16 %v673, %v671
        %v694 = vpack.c.b16 %v674, %v672
        %v695 = vpack.c.b16 %v677, %v675
        %v696 = vpack.c.b16 %v678, %v676
        %v697 = vpack.c.b16 %v681, %v679
        %v698 = vpack.c.b16 %v682, %v680
        %v732 = vunpack.c.l.b16 %v594
        %v733 = vunpack.c.l.b16 %v595
        %v734 = vunpack.c.l.b16 %v596
        %v735 = vunpack.c.l.b16 %v597
        %v736 = vunpack.c.l.b16 %v598
        %v737 = vunpack.c.l.b16 %v599
        %v738 = vunpack.c.l.b16 %v600
        %v739 = vunpack.c.l.b16 %v601
        %v740 = vunpack.c.l.b16 %v602
        %v741 = vunpack.c.l.b16 %v603
        %v742 = vunpack.c.l.b16 %v604
        %v743 = vunpack.c.l.b16 %v605
        %v744 = vunpack.c.l.b16 %v606
        %v745 = vunpack.c.l.b16 %v607
        %v746 = vunpack.c.l.b16 %v608
        %v747 = vunpack.c.l.b16 %v609
        %v748 = vunpack.c.l.b16 %v610
        %v749 = vunpack.c.l.b16 %v611
        %v750 = vunpack.c.l.b16 %v612
        %v751 = vunpack.c.l.b16 %v613
        %v752 = vunpack.c.l.b16 %v614
        %v753 = vunpack.c.l.b16 %v615
        %v754 = vunpack.c.l.b16 %v616
        %v755 = vunpack.c.l.b16 %v617
        %v756 = vunpack.c.l.b16 %v618
        %v757 = vpack.c.b16 %v733, %v732
        %v758 = vpack.c.b16 %v735, %v734
        %v759 = vpack.c.b16 %v737, %v736
        %v760 = vpack.c.b16 %v739, %v738
        %v761 = vpack.c.b16 %v741, %v740
        %v762 = vpack.c.b16 %v743, %v742
        %v763 = vpack.c.b16 %v745, %v744
        %v764 = vpack.c.b16 %v747, %v746
        %v765 = vpack.c.b16 %v749, %v748
        %v766 = vpack.c.b16 %v751, %v750
        %v767 = vpack.c.b16 %v753, %v752
        %v768 = vpack.c.b16 %v755, %v754
        %v769 = vpack.c.b16 %v756, %v756
        %vm782 = vcmask 588800
        %v784 = vsel %vm782, %v684, 0
        %v787 = vsel %vm782, %v686, 0
        %v790 = vsel %vm782, %v688, 0
        %v793 = vsel %vm782, %v690, 0
        %v796 = vsel %vm782, %v692, 0
        %v799 = vsel %vm782, %v694, 0
        %v802 = vsel %vm782, %v696, 0
        %v805 = vsel %vm782, %v698, 0
        %vm807 = vcmask 1043456
        %v809 = vsel %vm807, %v769, 0
        %811 = vmatpush.bf16.msra.mxu0 %v764
        %812 = vmatpush.bf16.msra.mxu0 %v763
        %813 = vmatpush.bf16.msra.mxu0 %v762
        %814 = vmatpush.bf16.msra.mxu0 %v761
        %815 = vmatpush.bf16.msra.mxu0 %v760
        %816 = vmatpush.bf16.msra.mxu0 %v759
        %817 = vmatpush.bf16.msra.mxu0 %v758
        %818 = vmatpush.bf16.msra.mxu0 %v757
        %819 = vmatmul.bf16.gmra.mxu0 %v683
        %v820 = vpop.f32.mrf.mxu0
        %v821 = vadd.f32 0.0, %v820
        %v822 = vpop.f32.mrf.mxu0
        %v823 = vadd.f32 0.0, %v822
        %824 = vmatmul.bf16.gmra.mxu0 %v685
        %v825 = vpop.f32.mrf.mxu0
        %v826 = vadd.f32 0.0, %v825
        %v827 = vpop.f32.mrf.mxu0
        %v828 = vadd.f32 0.0, %v827
        %829 = vmatmul.bf16.gmra.mxu0 %v687
        %v830 = vpop.f32.mrf.mxu0
        %v831 = vadd.f32 0.0, %v830
        %v832 = vpop.f32.mrf.mxu0
        %v833 = vadd.f32 0.0, %v832
        %834 = vmatmul.bf16.gmra.mxu0 %v689
        %v835 = vpop.f32.mrf.mxu0
        %v836 = vadd.f32 0.0, %v835
        %v837 = vpop.f32.mrf.mxu0
        %v838 = vadd.f32 0.0, %v837
        %839 = vmatmul.bf16.gmra.mxu0 %v691
        %v840 = vpop.f32.mrf.mxu0
        %v841 = vadd.f32 0.0, %v840
        %v842 = vpop.f32.mrf.mxu0
        %v843 = vadd.f32 0.0, %v842
        %844 = vmatmul.bf16.gmra.mxu0 %v693
        %v845 = vpop.f32.mrf.mxu0
        %v846 = vadd.f32 0.0, %v845
        %v847 = vpop.f32.mrf.mxu0
        %v848 = vadd.f32 0.0, %v847
        %849 = vmatmul.bf16.gmra.mxu0 %v695
        %v850 = vpop.f32.mrf.mxu0
        %v851 = vadd.f32 0.0, %v850
        %v852 = vpop.f32.mrf.mxu0
        %v853 = vadd.f32 0.0, %v852
        %854 = vmatmul.bf16.gmra.mxu0 %v697
        %v855 = vpop.f32.mrf.mxu0
        %v856 = vadd.f32 0.0, %v855
        %v857 = vpop.f32.mrf.mxu0
        %v858 = vadd.f32 0.0, %v857
        %859 = vdwg.mxu0
        %860 = vmatpush.bf16.msra.mxu0 0
        %861 = vmatpush.bf16.msra.mxu0 0
        %862 = vmatpush.bf16.msra.mxu0 0
        %863 = vmatpush.bf16.msra.mxu0 %v809
        %864 = vmatpush.bf16.msra.mxu0 %v768
        %865 = vmatpush.bf16.msra.mxu0 %v767
        %866 = vmatpush.bf16.msra.mxu0 %v766
        %867 = vmatpush.bf16.msra.mxu0 %v765
        %868 = vmatmul.bf16.gmra.mxu0 %v784
        %v869 = vpop.f32.mrf.mxu0
        %v870 = vadd.f32 %v821, %v869
        %v871 = vpop.f32.mrf.mxu0
        %v872 = vadd.f32 %v823, %v871
        %873 = vmatmul.bf16.gmra.mxu0 %v787
        %v874 = vpop.f32.mrf.mxu0
        %v875 = vadd.f32 %v826, %v874
        %v876 = vpop.f32.mrf.mxu0
        %v877 = vadd.f32 %v828, %v876
        %878 = vmatmul.bf16.gmra.mxu0 %v790
        %v879 = vpop.f32.mrf.mxu0
        %v880 = vadd.f32 %v831, %v879
        %v881 = vpop.f32.mrf.mxu0
        %v882 = vadd.f32 %v833, %v881
        %883 = vmatmul.bf16.gmra.mxu0 %v793
        %v884 = vpop.f32.mrf.mxu0
        %v885 = vadd.f32 %v836, %v884
        %v886 = vpop.f32.mrf.mxu0
        %v887 = vadd.f32 %v838, %v886
        %888 = vmatmul.bf16.gmra.mxu0 %v796
        %v889 = vpop.f32.mrf.mxu0
        %v890 = vadd.f32 %v841, %v889
        %v891 = vpop.f32.mrf.mxu0
        %v892 = vadd.f32 %v843, %v891
        %893 = vmatmul.bf16.gmra.mxu0 %v799
        %v894 = vpop.f32.mrf.mxu0
        %v895 = vadd.f32 %v846, %v894
        %v896 = vpop.f32.mrf.mxu0
        %v897 = vadd.f32 %v848, %v896
        %898 = vmatmul.bf16.gmra.mxu0 %v802
        %v899 = vpop.f32.mrf.mxu0
        %v900 = vadd.f32 %v851, %v899
        %v901 = vpop.f32.mrf.mxu0
        %v902 = vadd.f32 %v853, %v901
        %903 = vmatmul.bf16.gmra.mxu0 %v805
        %v904 = vpop.f32.mrf.mxu0
        %v905 = vadd.f32 %v856, %v904
        %v906 = vpop.f32.mrf.mxu0
        %v907 = vadd.f32 %v858, %v906
        %908 = vdwg.mxu0
        %s909 = scalar_lea.vmem %s587, 128
        %v910 = vld [vmem:[%s909] sm:$0xff]
        %v911 = vld [vmem:[%s909 + $0x8] sm:$0xff]
        %v912 = vld [vmem:[%s909 + $0x10] sm:$0xff]
        %v913 = vld [vmem:[%s909 + $0x18] sm:$0xff]
        %v914 = vld [vmem:[%s909 + $0x20] sm:$0xff]
        %v915 = vld [vmem:[%s909 + $0x28] sm:$0xff]
        %v916 = vld [vmem:[%s909 + $0x30] sm:$0xff]
        %v917 = vld [vmem:[%s909 + $0x38] sm:$0xff]
        %v918 = vld [vmem:[%s909 + $0x40] sm:$0xff]
        %v919 = vld [vmem:[%s909 + $0x48] sm:$0xff]
        %v920 = vld [vmem:[%s909 + $0x50] sm:$0xff]
        %v921 = vld [vmem:[%s909 + $0x58] sm:$0xff]
        %v922 = vld [vmem:[%s909 + $0x60] sm:$0xff]
        %v923 = vld [vmem:[%s909 + $0x68] sm:$0xff]
        %v924 = vld [vmem:[%s909 + $0x70] sm:$0xff]
        %v925 = vld [vmem:[%s909 + $0x78] sm:$0xff]
        %v942 = vunpack.c.l.b16 %v910
        %v943 = vunpack.c.h.b16 %v910
        %v944 = vunpack.c.l.b16 %v911
        %v945 = vunpack.c.h.b16 %v911
        %v946 = vunpack.c.l.b16 %v912
        %v947 = vunpack.c.h.b16 %v912
        %v948 = vunpack.c.l.b16 %v913
        %v949 = vunpack.c.h.b16 %v913
        %v950 = vunpack.c.l.b16 %v914
        %v951 = vunpack.c.h.b16 %v914
        %v952 = vunpack.c.l.b16 %v915
        %v953 = vunpack.c.h.b16 %v915
        %v954 = vunpack.c.l.b16 %v916
        %v955 = vunpack.c.h.b16 %v916
        %v956 = vunpack.c.l.b16 %v917
        %v957 = vunpack.c.h.b16 %v917
        %v958 = vunpack.c.l.b16 %v918
        %v959 = vunpack.c.h.b16 %v918
        %v960 = vunpack.c.l.b16 %v919
        %v961 = vunpack.c.h.b16 %v919
        %v962 = vunpack.c.l.b16 %v920
        %v963 = vunpack.c.h.b16 %v920
        %v964 = vunpack.c.l.b16 %v921
        %v965 = vunpack.c.h.b16 %v921
        %v966 = vunpack.c.l.b16 %v922
        %v967 = vunpack.c.h.b16 %v922
        %v968 = vunpack.c.l.b16 %v923
        %v969 = vunpack.c.h.b16 %v923
        %v970 = vunpack.c.l.b16 %v924
        %v971 = vunpack.c.h.b16 %v924
        %v972 = vunpack.c.l.b16 %v925
        %v973 = vunpack.c.h.b16 %v925
        %v974 = vpack.c.b16 %v944, %v942
        %v975 = vpack.c.b16 %v945, %v943
        %v976 = vpack.c.b16 %v948, %v946
        %v977 = vpack.c.b16 %v949, %v947
        %v978 = vpack.c.b16 %v952, %v950
        %v979 = vpack.c.b16 %v953, %v951
        %v980 = vpack.c.b16 %v956, %v954
        %v981 = vpack.c.b16 %v957, %v955
        %v982 = vpack.c.b16 %v960, %v958
        %v983 = vpack.c.b16 %v961, %v959
        %v984 = vpack.c.b16 %v964, %v962
        %v985 = vpack.c.b16 %v965, %v963
        %v986 = vpack.c.b16 %v968, %v966
        %v987 = vpack.c.b16 %v969, %v967
        %v988 = vpack.c.b16 %v972, %v970
        %v989 = vpack.c.b16 %v973, %v971
        %v999 = vsel %vm782, %v975, 0
        %v1002 = vsel %vm782, %v977, 0
        %v1005 = vsel %vm782, %v979, 0
        %v1008 = vsel %vm782, %v981, 0
        %v1011 = vsel %vm782, %v983, 0
        %v1014 = vsel %vm782, %v985, 0
        %v1017 = vsel %vm782, %v987, 0
        %v1020 = vsel %vm782, %v989, 0
        %1022 = vmatpush.bf16.msra.mxu0 %v764
        %1023 = vmatpush.bf16.msra.mxu0 %v763
        %1024 = vmatpush.bf16.msra.mxu0 %v762
        %1025 = vmatpush.bf16.msra.mxu0 %v761
        %1026 = vmatpush.bf16.msra.mxu0 %v760
        %1027 = vmatpush.bf16.msra.mxu0 %v759
        %1028 = vmatpush.bf16.msra.mxu0 %v758
        %1029 = vmatpush.bf16.msra.mxu0 %v757
        %1030 = vmatmul.bf16.gmra.mxu0 %v974
        %v1031 = vpop.f32.mrf.mxu0
        %v1032 = vadd.f32 0.0, %v1031
        %v1033 = vpop.f32.mrf.mxu0
        %v1034 = vadd.f32 0.0, %v1033
        %1035 = vmatmul.bf16.gmra.mxu0 %v976
        %v1036 = vpop.f32.mrf.mxu0
        %v1037 = vadd.f32 0.0, %v1036
        %v1038 = vpop.f32.mrf.mxu0
        %v1039 = vadd.f32 0.0, %v1038
        %1040 = vmatmul.bf16.gmra.mxu0 %v978
        %v1041 = vpop.f32.mrf.mxu0
        %v1042 = vadd.f32 0.0, %v1041
        %v1043 = vpop.f32.mrf.mxu0
        %v1044 = vadd.f32 0.0, %v1043
        %1045 = vmatmul.bf16.gmra.mxu0 %v980
        %v1046 = vpop.f32.mrf.mxu0
        %v1047 = vadd.f32 0.0, %v1046
        %v1048 = vpop.f32.mrf.mxu0
        %v1049 = vadd.f32 0.0, %v1048
        %1050 = vmatmul.bf16.gmra.mxu0 %v982
        %v1051 = vpop.f32.mrf.mxu0
        %v1052 = vadd.f32 0.0, %v1051
        %v1053 = vpop.f32.mrf.mxu0
        %v1054 = vadd.f32 0.0, %v1053
        %1055 = vmatmul.bf16.gmra.mxu0 %v984
        %v1056 = vpop.f32.mrf.mxu0
        %v1057 = vadd.f32 0.0, %v1056
        %v1058 = vpop.f32.mrf.mxu0
        %v1059 = vadd.f32 0.0, %v1058
        %1060 = vmatmul.bf16.gmra.mxu0 %v986
        %v1061 = vpop.f32.mrf.mxu0
        %v1062 = vadd.f32 0.0, %v1061
        %v1063 = vpop.f32.mrf.mxu0
        %v1064 = vadd.f32 0.0, %v1063
        %1065 = vmatmul.bf16.gmra.mxu0 %v988
        %v1066 = vpop.f32.mrf.mxu0
        %v1067 = vadd.f32 0.0, %v1066
        %v1068 = vpop.f32.mrf.mxu0
        %v1069 = vadd.f32 0.0, %v1068
        %1070 = vdwg.mxu0
        %1071 = vmatpush.bf16.msra.mxu0 0
        %1072 = vmatpush.bf16.msra.mxu0 0
        %1073 = vmatpush.bf16.msra.mxu0 0
        %1074 = vmatpush.bf16.msra.mxu0 %v809
        %1075 = vmatpush.bf16.msra.mxu0 %v768
        %1076 = vmatpush.bf16.msra.mxu0 %v767
        %1077 = vmatpush.bf16.msra.mxu0 %v766
        %1078 = vmatpush.bf16.msra.mxu0 %v765
        %1079 = vmatmul.bf16.gmra.mxu0 %v999
        %v1080 = vpop.f32.mrf.mxu0
        %v1081 = vadd.f32 %v1032, %v1080
        %v1082 = vpop.f32.mrf.mxu0
        %v1083 = vadd.f32 %v1034, %v1082
        %1084 = vmatmul.bf16.gmra.mxu0 %v1002
        %v1085 = vpop.f32.mrf.mxu0
        %v1086 = vadd.f32 %v1037, %v1085
        %v1087 = vpop.f32.mrf.mxu0
        %v1088 = vadd.f32 %v1039, %v1087
        %1089 = vmatmul.bf16.gmra.mxu0 %v1005
        %v1090 = vpop.f32.mrf.mxu0
        %v1091 = vadd.f32 %v1042, %v1090
        %v1092 = vpop.f32.mrf.mxu0
        %v1093 = vadd.f32 %v1044, %v1092
        %1094 = vmatmul.bf16.gmra.mxu0 %v1008
        %v1095 = vpop.f32.mrf.mxu0
        %v1096 = vadd.f32 %v1047, %v1095
        %v1097 = vpop.f32.mrf.mxu0
        %v1098 = vadd.f32 %v1049, %v1097
        %1099 = vmatmul.bf16.gmra.mxu0 %v1011
        %v1100 = vpop.f32.mrf.mxu0
        %v1101 = vadd.f32 %v1052, %v1100
        %v1102 = vpop.f32.mrf.mxu0
        %v1103 = vadd.f32 %v1054, %v1102
        %1104 = vmatmul.bf16.gmra.mxu0 %v1014
        %v1105 = vpop.f32.mrf.mxu0
        %v1106 = vadd.f32 %v1057, %v1105
        %v1107 = vpop.f32.mrf.mxu0
        %v1108 = vadd.f32 %v1059, %v1107
        %1109 = vmatmul.bf16.gmra.mxu0 %v1017
        %v1110 = vpop.f32.mrf.mxu0
        %v1111 = vadd.f32 %v1062, %v1110
        %v1112 = vpop.f32.mrf.mxu0
        %v1113 = vadd.f32 %v1064, %v1112
        %1114 = vmatmul.bf16.gmra.mxu0 %v1020
        %v1115 = vpop.f32.mrf.mxu0
        %v1116 = vadd.f32 %v1067, %v1115
        %v1117 = vpop.f32.mrf.mxu0
        %v1118 = vadd.f32 %v1069, %v1117
        %1119 = vdwg.mxu0
        %v1120 = vmax.f32 %v870, %v1081
        %v1121 = vmax.f32 %v872, %v1083
        %v1122 = vmax.f32 %v875, %v1086
        %v1123 = vmax.f32 %v877, %v1088
        %v1124 = vmax.f32 %v880, %v1091
        %v1125 = vmax.f32 %v882, %v1093
        %v1126 = vmax.f32 %v885, %v1096
        %v1127 = vmax.f32 %v887, %v1098
        %v1128 = vmax.f32 %v890, %v1101
        %v1129 = vmax.f32 %v892, %v1103
        %v1130 = vmax.f32 %v895, %v1106
        %v1131 = vmax.f32 %v897, %v1108
        %v1132 = vmax.f32 %v900, %v1111
        %v1133 = vmax.f32 %v902, %v1113
        %v1134 = vmax.f32 %v905, %v1116
        %v1135 = vmax.f32 %v907, %v1118
        %s1136 = scalar_lea.vmem %s587, 256
        %v1137 = vld [vmem:[%s1136] sm:$0xff]
        %v1138 = vld [vmem:[%s1136 + $0x8] sm:$0xff]
        %v1139 = vld [vmem:[%s1136 + $0x10] sm:$0xff]
        %v1140 = vld [vmem:[%s1136 + $0x18] sm:$0xff]
        %v1141 = vld [vmem:[%s1136 + $0x20] sm:$0xff]
        %v1142 = vld [vmem:[%s1136 + $0x28] sm:$0xff]
        %v1143 = vld [vmem:[%s1136 + $0x30] sm:$0xff]
        %v1144 = vld [vmem:[%s1136 + $0x38] sm:$0xff]
        %v1145 = vld [vmem:[%s1136 + $0x40] sm:$0xff]
        %v1146 = vld [vmem:[%s1136 + $0x48] sm:$0xff]
        %v1147 = vld [vmem:[%s1136 + $0x50] sm:$0xff]
        %v1148 = vld [vmem:[%s1136 + $0x58] sm:$0xff]
        %v1149 = vld [vmem:[%s1136 + $0x60] sm:$0xff]
        %v1150 = vld [vmem:[%s1136 + $0x68] sm:$0xff]
        %v1151 = vld [vmem:[%s1136 + $0x70] sm:$0xff]
        %v1152 = vld [vmem:[%s1136 + $0x78] sm:$0xff]
        %v1169 = vunpack.c.l.b16 %v1137
        %v1170 = vunpack.c.h.b16 %v1137
        %v1171 = vunpack.c.l.b16 %v1138
        %v1172 = vunpack.c.h.b16 %v1138
        %v1173 = vunpack.c.l.b16 %v1139
        %v1174 = vunpack.c.h.b16 %v1139
        %v1175 = vunpack.c.l.b16 %v1140
        %v1176 = vunpack.c.h.b16 %v1140
        %v1177 = vunpack.c.l.b16 %v1141
        %v1178 = vunpack.c.h.b16 %v1141
        %v1179 = vunpack.c.l.b16 %v1142
        %v1180 = vunpack.c.h.b16 %v1142
        %v1181 = vunpack.c.l.b16 %v1143
        %v1182 = vunpack.c.h.b16 %v1143
        %v1183 = vunpack.c.l.b16 %v1144
        %v1184 = vunpack.c.h.b16 %v1144
        %v1185 = vunpack.c.l.b16 %v1145
        %v1186 = vunpack.c.h.b16 %v1145
        %v1187 = vunpack.c.l.b16 %v1146
        %v1188 = vunpack.c.h.b16 %v1146
        %v1189 = vunpack.c.l.b16 %v1147
        %v1190 = vunpack.c.h.b16 %v1147
        %v1191 = vunpack.c.l.b16 %v1148
        %v1192 = vunpack.c.h.b16 %v1148
        %v1193 = vunpack.c.l.b16 %v1149
        %v1194 = vunpack.c.h.b16 %v1149
        %v1195 = vunpack.c.l.b16 %v1150
        %v1196 = vunpack.c.h.b16 %v1150
        %v1197 = vunpack.c.l.b16 %v1151
        %v1198 = vunpack.c.h.b16 %v1151
        %v1199 = vunpack.c.l.b16 %v1152
        %v1200 = vunpack.c.h.b16 %v1152
        %v1201 = vpack.c.b16 %v1171, %v1169
        %v1202 = vpack.c.b16 %v1172, %v1170
        %v1203 = vpack.c.b16 %v1175, %v1173
        %v1204 = vpack.c.b16 %v1176, %v1174
        %v1205 = vpack.c.b16 %v1179, %v1177
        %v1206 = vpack.c.b16 %v1180, %v1178
        %v1207 = vpack.c.b16 %v1183, %v1181
        %v1208 = vpack.c.b16 %v1184, %v1182
        %v1209 = vpack.c.b16 %v1187, %v1185
        %v1210 = vpack.c.b16 %v1188, %v1186
        %v1211 = vpack.c.b16 %v1191, %v1189
        %v1212 = vpack.c.b16 %v1192, %v1190
        %v1213 = vpack.c.b16 %v1195, %v1193
        %v1214 = vpack.c.b16 %v1196, %v1194
        %v1215 = vpack.c.b16 %v1199, %v1197
        %v1216 = vpack.c.b16 %v1200, %v1198
        %v1226 = vsel %vm782, %v1202, 0
        %v1229 = vsel %vm782, %v1204, 0
        %v1232 = vsel %vm782, %v1206, 0
        %v1235 = vsel %vm782, %v1208, 0
        %v1238 = vsel %vm782, %v1210, 0
        %v1241 = vsel %vm782, %v1212, 0
        %v1244 = vsel %vm782, %v1214, 0
        %v1247 = vsel %vm782, %v1216, 0
        %1249 = vmatpush.bf16.msra.mxu0 %v764
        %1250 = vmatpush.bf16.msra.mxu0 %v763
        %1251 = vmatpush.bf16.msra.mxu0 %v762
        %1252 = vmatpush.bf16.msra.mxu0 %v761
        %1253 = vmatpush.bf16.msra.mxu0 %v760
        %1254 = vmatpush.bf16.msra.mxu0 %v759
        %1255 = vmatpush.bf16.msra.mxu0 %v758
        %1256 = vmatpush.bf16.msra.mxu0 %v757
        %1257 = vmatmul.bf16.gmra.mxu0 %v1201
        %v1258 = vpop.f32.mrf.mxu0
        %v1259 = vadd.f32 0.0, %v1258
        %v1260 = vpop.f32.mrf.mxu0
        %v1261 = vadd.f32 0.0, %v1260
        %1262 = vmatmul.bf16.gmra.mxu0 %v1203
        %v1263 = vpop.f32.mrf.mxu0
        %v1264 = vadd.f32 0.0, %v1263
        %v1265 = vpop.f32.mrf.mxu0
        %v1266 = vadd.f32 0.0, %v1265
        %1267 = vmatmul.bf16.gmra.mxu0 %v1205
        %v1268 = vpop.f32.mrf.mxu0
        %v1269 = vadd.f32 0.0, %v1268
        %v1270 = vpop.f32.mrf.mxu0
        %v1271 = vadd.f32 0.0, %v1270
        %1272 = vmatmul.bf16.gmra.mxu0 %v1207
        %v1273 = vpop.f32.mrf.mxu0
        %v1274 = vadd.f32 0.0, %v1273
        %v1275 = vpop.f32.mrf.mxu0
        %v1276 = vadd.f32 0.0, %v1275
        %1277 = vmatmul.bf16.gmra.mxu0 %v1209
        %v1278 = vpop.f32.mrf.mxu0
        %v1279 = vadd.f32 0.0, %v1278
        %v1280 = vpop.f32.mrf.mxu0
        %v1281 = vadd.f32 0.0, %v1280
        %1282 = vmatmul.bf16.gmra.mxu0 %v1211
        %v1283 = vpop.f32.mrf.mxu0
        %v1284 = vadd.f32 0.0, %v1283
        %v1285 = vpop.f32.mrf.mxu0
        %v1286 = vadd.f32 0.0, %v1285
        %1287 = vmatmul.bf16.gmra.mxu0 %v1213
        %v1288 = vpop.f32.mrf.mxu0
        %v1289 = vadd.f32 0.0, %v1288
        %v1290 = vpop.f32.mrf.mxu0
        %v1291 = vadd.f32 0.0, %v1290
        %1292 = vmatmul.bf16.gmra.mxu0 %v1215
        %v1293 = vpop.f32.mrf.mxu0
        %v1294 = vadd.f32 0.0, %v1293
        %v1295 = vpop.f32.mrf.mxu0
        %v1296 = vadd.f32 0.0, %v1295
        %1297 = vdwg.mxu0
        %1298 = vmatpush.bf16.msra.mxu0 0
        %1299 = vmatpush.bf16.msra.mxu0 0
        %1300 = vmatpush.bf16.msra.mxu0 0
        %1301 = vmatpush.bf16.msra.mxu0 %v809
        %1302 = vmatpush.bf16.msra.mxu0 %v768
        %1303 = vmatpush.bf16.msra.mxu0 %v767
        %1304 = vmatpush.bf16.msra.mxu0 %v766
        %1305 = vmatpush.bf16.msra.mxu0 %v765
        %1306 = vmatmul.bf16.gmra.mxu0 %v1226
        %v1307 = vpop.f32.mrf.mxu0
        %v1308 = vadd.f32 %v1259, %v1307
        %v1309 = vpop.f32.mrf.mxu0
        %v1310 = vadd.f32 %v1261, %v1309
        %1311 = vmatmul.bf16.gmra.mxu0 %v1229
        %v1312 = vpop.f32.mrf.mxu0
        %v1313 = vadd.f32 %v1264, %v1312
        %v1314 = vpop.f32.mrf.mxu0
        %v1315 = vadd.f32 %v1266, %v1314
        %1316 = vmatmul.bf16.gmra.mxu0 %v1232
        %v1317 = vpop.f32.mrf.mxu0
        %v1318 = vadd.f32 %v1269, %v1317
        %v1319 = vpop.f32.mrf.mxu0
        %v1320 = vadd.f32 %v1271, %v1319
        %1321 = vmatmul.bf16.gmra.mxu0 %v1235
        %v1322 = vpop.f32.mrf.mxu0
        %v1323 = vadd.f32 %v1274, %v1322
        %v1324 = vpop.f32.mrf.mxu0
        %v1325 = vadd.f32 %v1276, %v1324
        %1326 = vmatmul.bf16.gmra.mxu0 %v1238
        %v1327 = vpop.f32.mrf.mxu0
        %v1328 = vadd.f32 %v1279, %v1327
        %v1329 = vpop.f32.mrf.mxu0
        %v1330 = vadd.f32 %v1281, %v1329
        %1331 = vmatmul.bf16.gmra.mxu0 %v1241
        %v1332 = vpop.f32.mrf.mxu0
        %v1333 = vadd.f32 %v1284, %v1332
        %v1334 = vpop.f32.mrf.mxu0
        %v1335 = vadd.f32 %v1286, %v1334
        %1336 = vmatmul.bf16.gmra.mxu0 %v1244
        %v1337 = vpop.f32.mrf.mxu0
        %v1338 = vadd.f32 %v1289, %v1337
        %v1339 = vpop.f32.mrf.mxu0
        %v1340 = vadd.f32 %v1291, %v1339
        %1341 = vmatmul.bf16.gmra.mxu0 %v1247
        %v1342 = vpop.f32.mrf.mxu0
        %v1343 = vadd.f32 %v1294, %v1342
        %v1344 = vpop.f32.mrf.mxu0
        %v1345 = vadd.f32 %v1296, %v1344
        %1346 = vdwg.mxu0
        %v1347 = vmax.f32 %v1120, %v1308
        %v1348 = vmax.f32 %v1121, %v1310
        %v1349 = vmax.f32 %v1122, %v1313
        %v1350 = vmax.f32 %v1123, %v1315
        %v1351 = vmax.f32 %v1124, %v1318
        %v1352 = vmax.f32 %v1125, %v1320
        %v1353 = vmax.f32 %v1126, %v1323
        %v1354 = vmax.f32 %v1127, %v1325
        %v1355 = vmax.f32 %v1128, %v1328
        %v1356 = vmax.f32 %v1129, %v1330
        %v1357 = vmax.f32 %v1130, %v1333
        %v1358 = vmax.f32 %v1131, %v1335
        %v1359 = vmax.f32 %v1132, %v1338
        %v1360 = vmax.f32 %v1133, %v1340
        %v1361 = vmax.f32 %v1134, %v1343
        %v1362 = vmax.f32 %v1135, %v1345
        %s1363 = scalar_lea.vmem %s587, 384
        %v1364 = vld [vmem:[%s1363] sm:$0xff]
        %v1365 = vld [vmem:[%s1363 + $0x8] sm:$0xff]
        %v1366 = vld [vmem:[%s1363 + $0x10] sm:$0xff]
        %v1367 = vld [vmem:[%s1363 + $0x18] sm:$0xff]
        %v1368 = vld [vmem:[%s1363 + $0x20] sm:$0xff]
        %v1369 = vld [vmem:[%s1363 + $0x28] sm:$0xff]
        %v1370 = vld [vmem:[%s1363 + $0x30] sm:$0xff]
        %v1371 = vld [vmem:[%s1363 + $0x38] sm:$0xff]
        %v1372 = vld [vmem:[%s1363 + $0x40] sm:$0xff]
        %v1373 = vld [vmem:[%s1363 + $0x48] sm:$0xff]
        %v1374 = vld [vmem:[%s1363 + $0x50] sm:$0xff]
        %v1375 = vld [vmem:[%s1363 + $0x58] sm:$0xff]
        %v1376 = vld [vmem:[%s1363 + $0x60] sm:$0xff]
        %v1377 = vld [vmem:[%s1363 + $0x68] sm:$0xff]
        %v1378 = vld [vmem:[%s1363 + $0x70] sm:$0xff]
        %v1379 = vld [vmem:[%s1363 + $0x78] sm:$0xff]
        %v1396 = vunpack.c.l.b16 %v1364
        %v1397 = vunpack.c.h.b16 %v1364
        %v1398 = vunpack.c.l.b16 %v1365
        %v1399 = vunpack.c.h.b16 %v1365
        %v1400 = vunpack.c.l.b16 %v1366
        %v1401 = vunpack.c.h.b16 %v1366
        %v1402 = vunpack.c.l.b16 %v1367
        %v1403 = vunpack.c.h.b16 %v1367
        %v1404 = vunpack.c.l.b16 %v1368
        %v1405 = vunpack.c.h.b16 %v1368
        %v1406 = vunpack.c.l.b16 %v1369
        %v1407 = vunpack.c.h.b16 %v1369
        %v1408 = vunpack.c.l.b16 %v1370
        %v1409 = vunpack.c.h.b16 %v1370
        %v1410 = vunpack.c.l.b16 %v1371
        %v1411 = vunpack.c.h.b16 %v1371
        %v1412 = vunpack.c.l.b16 %v1372
        %v1413 = vunpack.c.h.b16 %v1372
        %v1414 = vunpack.c.l.b16 %v1373
        %v1415 = vunpack.c.h.b16 %v1373
        %v1416 = vunpack.c.l.b16 %v1374
        %v1417 = vunpack.c.h.b16 %v1374
        %v1418 = vunpack.c.l.b16 %v1375
        %v1419 = vunpack.c.h.b16 %v1375
        %v1420 = vunpack.c.l.b16 %v1376
        %v1421 = vunpack.c.h.b16 %v1376
        %v1422 = vunpack.c.l.b16 %v1377
        %v1423 = vunpack.c.h.b16 %v1377
        %v1424 = vunpack.c.l.b16 %v1378
        %v1425 = vunpack.c.h.b16 %v1378
        %v1426 = vunpack.c.l.b16 %v1379
        %v1427 = vunpack.c.h.b16 %v1379
        %v1428 = vpack.c.b16 %v1398, %v1396
        %v1429 = vpack.c.b16 %v1399, %v1397
        %v1430 = vpack.c.b16 %v1402, %v1400
        %v1431 = vpack.c.b16 %v1403, %v1401
        %v1432 = vpack.c.b16 %v1406, %v1404
        %v1433 = vpack.c.b16 %v1407, %v1405
        %v1434 = vpack.c.b16 %v1410, %v1408
        %v1435 = vpack.c.b16 %v1411, %v1409
        %v1436 = vpack.c.b16 %v1414, %v1412
        %v1437 = vpack.c.b16 %v1415, %v1413
        %v1438 = vpack.c.b16 %v1418, %v1416
        %v1439 = vpack.c.b16 %v1419, %v1417
        %v1440 = vpack.c.b16 %v1422, %v1420
        %v1441 = vpack.c.b16 %v1423, %v1421
        %v1442 = vpack.c.b16 %v1426, %v1424
        %v1443 = vpack.c.b16 %v1427, %v1425
        %v1453 = vsel %vm782, %v1429, 0
        %v1456 = vsel %vm782, %v1431, 0
        %v1459 = vsel %vm782, %v1433, 0
        %v1462 = vsel %vm782, %v1435, 0
        %v1465 = vsel %vm782, %v1437, 0
        %v1468 = vsel %vm782, %v1439, 0
        %v1471 = vsel %vm782, %v1441, 0
        %v1474 = vsel %vm782, %v1443, 0
        %1476 = vmatpush.bf16.msra.mxu0 %v764
        %1477 = vmatpush.bf16.msra.mxu0 %v763
        %1478 = vmatpush.bf16.msra.mxu0 %v762
        %1479 = vmatpush.bf16.msra.mxu0 %v761
        %1480 = vmatpush.bf16.msra.mxu0 %v760
        %1481 = vmatpush.bf16.msra.mxu0 %v759
        %1482 = vmatpush.bf16.msra.mxu0 %v758
        %1483 = vmatpush.bf16.msra.mxu0 %v757
        %1484 = vmatmul.bf16.gmra.mxu0 %v1428
        %v1485 = vpop.f32.mrf.mxu0
        %v1486 = vadd.f32 0.0, %v1485
        %v1487 = vpop.f32.mrf.mxu0
        %v1488 = vadd.f32 0.0, %v1487
        %1489 = vmatmul.bf16.gmra.mxu0 %v1430
        %v1490 = vpop.f32.mrf.mxu0
        %v1491 = vadd.f32 0.0, %v1490
        %v1492 = vpop.f32.mrf.mxu0
        %v1493 = vadd.f32 0.0, %v1492
        %1494 = vmatmul.bf16.gmra.mxu0 %v1432
        %v1495 = vpop.f32.mrf.mxu0
        %v1496 = vadd.f32 0.0, %v1495
        %v1497 = vpop.f32.mrf.mxu0
        %v1498 = vadd.f32 0.0, %v1497
        %1499 = vmatmul.bf16.gmra.mxu0 %v1434
        %v1500 = vpop.f32.mrf.mxu0
        %v1501 = vadd.f32 0.0, %v1500
        %v1502 = vpop.f32.mrf.mxu0
        %v1503 = vadd.f32 0.0, %v1502
        %1504 = vmatmul.bf16.gmra.mxu0 %v1436
        %v1505 = vpop.f32.mrf.mxu0
        %v1506 = vadd.f32 0.0, %v1505
        %v1507 = vpop.f32.mrf.mxu0
        %v1508 = vadd.f32 0.0, %v1507
        %1509 = vmatmul.bf16.gmra.mxu0 %v1438
        %v1510 = vpop.f32.mrf.mxu0
        %v1511 = vadd.f32 0.0, %v1510
        %v1512 = vpop.f32.mrf.mxu0
        %v1513 = vadd.f32 0.0, %v1512
        %1514 = vmatmul.bf16.gmra.mxu0 %v1440
        %v1515 = vpop.f32.mrf.mxu0
        %v1516 = vadd.f32 0.0, %v1515
        %v1517 = vpop.f32.mrf.mxu0
        %v1518 = vadd.f32 0.0, %v1517
        %1519 = vmatmul.bf16.gmra.mxu0 %v1442
        %v1520 = vpop.f32.mrf.mxu0
        %v1521 = vadd.f32 0.0, %v1520
        %v1522 = vpop.f32.mrf.mxu0
        %v1523 = vadd.f32 0.0, %v1522
        %1524 = vdwg.mxu0
        %1525 = vmatpush.bf16.msra.mxu0 0
        %1526 = vmatpush.bf16.msra.mxu0 0
        %1527 = vmatpush.bf16.msra.mxu0 0
        %1528 = vmatpush.bf16.msra.mxu0 %v809
        %1529 = vmatpush.bf16.msra.mxu0 %v768
        %1530 = vmatpush.bf16.msra.mxu0 %v767
        %1531 = vmatpush.bf16.msra.mxu0 %v766
        %1532 = vmatpush.bf16.msra.mxu0 %v765
        %1533 = vmatmul.bf16.gmra.mxu0 %v1453
        %v1534 = vpop.f32.mrf.mxu0
        %v1535 = vadd.f32 %v1486, %v1534
        %v1536 = vpop.f32.mrf.mxu0
        %v1537 = vadd.f32 %v1488, %v1536
        %1538 = vmatmul.bf16.gmra.mxu0 %v1456
        %v1539 = vpop.f32.mrf.mxu0
        %v1540 = vadd.f32 %v1491, %v1539
        %v1541 = vpop.f32.mrf.mxu0
        %v1542 = vadd.f32 %v1493, %v1541
        %1543 = vmatmul.bf16.gmra.mxu0 %v1459
        %v1544 = vpop.f32.mrf.mxu0
        %v1545 = vadd.f32 %v1496, %v1544
        %v1546 = vpop.f32.mrf.mxu0
        %v1547 = vadd.f32 %v1498, %v1546
        %1548 = vmatmul.bf16.gmra.mxu0 %v1462
        %v1549 = vpop.f32.mrf.mxu0
        %v1550 = vadd.f32 %v1501, %v1549
        %v1551 = vpop.f32.mrf.mxu0
        %v1552 = vadd.f32 %v1503, %v1551
        %1553 = vmatmul.bf16.gmra.mxu0 %v1465
        %v1554 = vpop.f32.mrf.mxu0
        %v1555 = vadd.f32 %v1506, %v1554
        %v1556 = vpop.f32.mrf.mxu0
        %v1557 = vadd.f32 %v1508, %v1556
        %1558 = vmatmul.bf16.gmra.mxu0 %v1468
        %v1559 = vpop.f32.mrf.mxu0
        %v1560 = vadd.f32 %v1511, %v1559
        %v1561 = vpop.f32.mrf.mxu0
        %v1562 = vadd.f32 %v1513, %v1561
        %1563 = vmatmul.bf16.gmra.mxu0 %v1471
        %v1564 = vpop.f32.mrf.mxu0
        %v1565 = vadd.f32 %v1516, %v1564
        %v1566 = vpop.f32.mrf.mxu0
        %v1567 = vadd.f32 %v1518, %v1566
        %1568 = vmatmul.bf16.gmra.mxu0 %v1474
        %v1569 = vpop.f32.mrf.mxu0
        %v1570 = vadd.f32 %v1521, %v1569
        %v1571 = vpop.f32.mrf.mxu0
        %v1572 = vadd.f32 %v1523, %v1571
        %1573 = vdwg.mxu0
        %v1574 = vmax.f32 %v1347, %v1535
        %v1575 = vmax.f32 %v1348, %v1537
        %v1576 = vmax.f32 %v1349, %v1540
        %v1577 = vmax.f32 %v1350, %v1542
        %v1578 = vmax.f32 %v1351, %v1545
        %v1579 = vmax.f32 %v1352, %v1547
        %v1580 = vmax.f32 %v1353, %v1550
        %v1581 = vmax.f32 %v1354, %v1552
        %v1582 = vmax.f32 %v1355, %v1555
        %v1583 = vmax.f32 %v1356, %v1557
        %v1584 = vmax.f32 %v1357, %v1560
        %v1585 = vmax.f32 %v1358, %v1562
        %v1586 = vmax.f32 %v1359, %v1565
        %v1587 = vmax.f32 %v1360, %v1567
        %v1588 = vmax.f32 %v1361, %v1570
        %v1589 = vmax.f32 %v1362, %v1572
        %v1590 = vld [vmem:[%s3] sm:$0x1]
        %v1592 = vperm.slane %v1590, 0
        %v1594 = vadd.f32 %v1574, %v1592
        %v1595 = vadd.f32 %v1575, %v1592
        %v1596 = vadd.f32 %v1576, %v1592
        %v1597 = vadd.f32 %v1577, %v1592
        %v1598 = vadd.f32 %v1578, %v1592
        %v1599 = vadd.f32 %v1579, %v1592
        %v1600 = vadd.f32 %v1580, %v1592
        %v1601 = vadd.f32 %v1581, %v1592
        %v1602 = vadd.f32 %v1582, %v1592
        %v1603 = vadd.f32 %v1583, %v1592
        %v1604 = vadd.f32 %v1584, %v1592
        %v1605 = vadd.f32 %v1585, %v1592
        %v1606 = vadd.f32 %v1586, %v1592
        %v1607 = vadd.f32 %v1587, %v1592
        %v1608 = vadd.f32 %v1588, %v1592
        %v1609 = vadd.f32 %v1589, %v1592
        %v1610 = vpack.c.bf16 %v1594, %v1594
        %v1611 = vpack.c.bf16 %v1595, %v1595
        %v1612 = vpack.c.bf16 %v1596, %v1596
        %v1613 = vpack.c.bf16 %v1597, %v1597
        %v1614 = vpack.c.bf16 %v1598, %v1598
        %v1615 = vpack.c.bf16 %v1599, %v1599
        %v1616 = vpack.c.bf16 %v1600, %v1600
        %v1617 = vpack.c.bf16 %v1601, %v1601
        %v1618 = vpack.c.bf16 %v1602, %v1602
        %v1619 = vpack.c.bf16 %v1603, %v1603
        %v1620 = vpack.c.bf16 %v1604, %v1604
        %v1621 = vpack.c.bf16 %v1605, %v1605
        %v1622 = vpack.c.bf16 %v1606, %v1606
        %v1623 = vpack.c.bf16 %v1607, %v1607
        %v1624 = vpack.c.bf16 %v1608, %v1608
        %v1625 = vpack.c.bf16 %v1609, %v1609
        %v1626 = vld [vmem:[%s4] sm:$0xf]
        %v1627 = vld [vmem:[%s4 + $0x4] sm:$0xf]
        %v1628 = vld [vmem:[%s4 + $0x8] sm:$0xf]
        %v1629 = vld [vmem:[%s4 + $0xc] sm:$0xf]
        %v1630 = vld [vmem:[%s4 + $0x10] sm:$0xf]
        %v1631 = vld [vmem:[%s4 + $0x14] sm:$0xf]
        %v1632 = vld [vmem:[%s4 + $0x18] sm:$0xf]
        %v1633 = vld [vmem:[%s4 + $0x1c] sm:$0xf]
        %v1634 = vld [vmem:[%s4 + $0x20] sm:$0xf]
        %v1635 = vld [vmem:[%s4 + $0x24] sm:$0xf]
        %v1636 = vld [vmem:[%s4 + $0x28] sm:$0xf]
        %v1637 = vld [vmem:[%s4 + $0x2c] sm:$0xf]
        %v1638 = vld [vmem:[%s4 + $0x30] sm:$0xf]
        %v1639 = vld [vmem:[%s4 + $0x34] sm:$0xf]
        %v1640 = vld [vmem:[%s4 + $0x38] sm:$0xf]
        %v1641 = vld [vmem:[%s4 + $0x3c] sm:$0xf]
        %s1642 = scalar_lea.vmem %s4, 64
        %v1643 = vld [vmem:[%s1642] sm:$0xf]
        %v1644 = vld [vmem:[%s1642 + $0x4] sm:$0xf]
        %v1645 = vld [vmem:[%s1642 + $0x8] sm:$0xf]
        %v1646 = vld [vmem:[%s1642 + $0xc] sm:$0xf]
        %v1647 = vld [vmem:[%s1642 + $0x10] sm:$0xf]
        %v1648 = vld [vmem:[%s1642 + $0x14] sm:$0xf]
        %v1649 = vld [vmem:[%s1642 + $0x18] sm:$0xf]
        %v1650 = vld [vmem:[%s1642 + $0x1c] sm:$0xf]
        %v1651 = vld [vmem:[%s1642 + $0x20] sm:$0xf]
        %v1652 = vld [vmem:[%s1642 + $0x24] sm:$0xf]
        %v1653 = vld [vmem:[%s1642 + $0x28] sm:$0xf]
        %v1654 = vld [vmem:[%s1642 + $0x2c] sm:$0xf]
        %v1655 = vld [vmem:[%s1642 + $0x30] sm:$0xf]
        %v1656 = vld [vmem:[%s1642 + $0x34] sm:$0xf]
        %v1657 = vld [vmem:[%s1642 + $0x38] sm:$0xf]
        %v1658 = vld [vmem:[%s1642 + $0x3c] sm:$0xf]
        %v1675 = vunpack.c.l.b16 %v1610
        %v1676 = vunpack.c.l.b16 %v1611
        %v1677 = vunpack.c.l.b16 %v1612
        %v1678 = vunpack.c.l.b16 %v1613
        %v1679 = vunpack.c.l.b16 %v1614
        %v1680 = vunpack.c.l.b16 %v1615
        %v1681 = vunpack.c.l.b16 %v1616
        %v1682 = vunpack.c.l.b16 %v1617
        %v1683 = vunpack.c.l.b16 %v1618
        %v1684 = vunpack.c.l.b16 %v1619
        %v1685 = vunpack.c.l.b16 %v1620
        %v1686 = vunpack.c.l.b16 %v1621
        %v1687 = vunpack.c.l.b16 %v1622
        %v1688 = vunpack.c.l.b16 %v1623
        %v1689 = vunpack.c.l.b16 %v1624
        %v1690 = vunpack.c.l.b16 %v1625
        %v1691 = vpack.c.b16 %v1676, %v1675
        %v1692 = vpack.c.b16 %v1678, %v1677
        %v1693 = vpack.c.b16 %v1680, %v1679
        %v1694 = vpack.c.b16 %v1682, %v1681
        %v1695 = vpack.c.b16 %v1684, %v1683
        %v1696 = vpack.c.b16 %v1686, %v1685
        %v1697 = vpack.c.b16 %v1688, %v1687
        %v1698 = vpack.c.b16 %v1690, %v1689
        %vm1699 = vsmask.f32 7424
        %v1701 = vshrl.u32 %v1691, 16
        %v1703 = vshll.u32 %v1691, 16
        %v1705 = vrot.slane %v1703, 1
        %v1706 = vor.u32 %v1701, %v1705
        %v1708 = vshll.u32 %v1692, 16
        %v1710 = vrot.slane %v1708, 1
        %v1711 = vsel %vm1699, %v1706, %v1710
        %v1712 = vshrl.u32 %v1692, 16
        %v1714 = vor.u32 %v1712, %v1710
        %v1716 = vshll.u32 %v1693, 16
        %v1718 = vrot.slane %v1716, 1
        %v1719 = vsel %vm1699, %v1714, %v1718
        %v1720 = vshrl.u32 %v1693, 16
        %v1722 = vor.u32 %v1720, %v1718
        %v1724 = vshll.u32 %v1694, 16
        %v1726 = vrot.slane %v1724, 1
        %v1727 = vsel %vm1699, %v1722, %v1726
        %v1728 = vshrl.u32 %v1694, 16
        %v1730 = vor.u32 %v1728, %v1726
        %v1732 = vshll.u32 %v1695, 16
        %v1734 = vrot.slane %v1732, 1
        %v1735 = vsel %vm1699, %v1730, %v1734
        %v1736 = vshrl.u32 %v1695, 16
        %v1738 = vor.u32 %v1736, %v1734
        %v1740 = vshll.u32 %v1696, 16
        %v1742 = vrot.slane %v1740, 1
        %v1743 = vsel %vm1699, %v1738, %v1742
        %v1744 = vshrl.u32 %v1696, 16
        %v1746 = vor.u32 %v1744, %v1742
        %v1748 = vshll.u32 %v1697, 16
        %v1750 = vrot.slane %v1748, 1
        %v1751 = vsel %vm1699, %v1746, %v1750
        %v1752 = vshrl.u32 %v1697, 16
        %v1754 = vor.u32 %v1752, %v1750
        %v1756 = vshll.u32 %v1698, 16
        %v1758 = vrot.slane %v1756, 1
        %v1759 = vsel %vm1699, %v1754, %v1758
        %v1760 = vshrl.u32 %v1698, 16
        %v1762 = vor.u32 %v1760, %v1758
        %v1787 = vunpack.c.l.b16 %v1643
        %v1788 = vunpack.c.l.b16 %v1644
        %v1789 = vunpack.c.l.b16 %v1645
        %v1790 = vunpack.c.l.b16 %v1646
        %v1791 = vunpack.c.l.b16 %v1647
        %v1792 = vunpack.c.l.b16 %v1648
        %v1793 = vunpack.c.l.b16 %v1649
        %v1794 = vunpack.c.l.b16 %v1650
        %v1795 = vunpack.c.l.b16 %v1651
        %v1796 = vunpack.c.l.b16 %v1652
        %v1797 = vunpack.c.l.b16 %v1653
        %v1798 = vunpack.c.l.b16 %v1654
        %v1799 = vunpack.c.l.b16 %v1655
        %v1800 = vunpack.c.l.b16 %v1656
        %v1801 = vunpack.c.l.b16 %v1657
        %v1802 = vunpack.c.l.b16 %v1658
        %v1803 = vpack.c.b16 %v1788, %v1787
        %v1804 = vpack.c.b16 %v1790, %v1789
        %v1805 = vpack.c.b16 %v1792, %v1791
        %v1806 = vpack.c.b16 %v1794, %v1793
        %v1807 = vpack.c.b16 %v1796, %v1795
        %v1808 = vpack.c.b16 %v1798, %v1797
        %v1809 = vpack.c.b16 %v1800, %v1799
        %v1810 = vpack.c.b16 %v1802, %v1801
        %1819 = vmatpush.bf16.msra.mxu0 %v1810
        %1820 = vmatpush.bf16.msra.mxu0 %v1809
        %1821 = vmatpush.bf16.msra.mxu0 %v1808
        %1822 = vmatpush.bf16.msra.mxu0 %v1807
        %1823 = vmatpush.bf16.msra.mxu0 %v1806
        %1824 = vmatpush.bf16.msra.mxu0 %v1805
        %1825 = vmatpush.bf16.msra.mxu0 %v1804
        %1826 = vmatpush.bf16.msra.mxu0 %v1803
        %1827 = vmatmul.bf16.gmra.mxu0 %v1711
        %v1828 = vpop.f32.mrf.mxu0
        %v1829 = vadd.f32 0.0, %v1828
        %v1830 = vpop.f32.mrf.mxu0
        %v1831 = vadd.f32 0.0, %v1830
        %1832 = vmatmul.bf16.gmra.mxu0 %v1719
        %v1833 = vpop.f32.mrf.mxu0
        %v1834 = vadd.f32 0.0, %v1833
        %v1835 = vpop.f32.mrf.mxu0
        %v1836 = vadd.f32 0.0, %v1835
        %1837 = vmatmul.bf16.gmra.mxu0 %v1727
        %v1838 = vpop.f32.mrf.mxu0
        %v1839 = vadd.f32 0.0, %v1838
        %v1840 = vpop.f32.mrf.mxu0
        %v1841 = vadd.f32 0.0, %v1840
        %1842 = vmatmul.bf16.gmra.mxu0 %v1735
        %v1843 = vpop.f32.mrf.mxu0
        %v1844 = vadd.f32 0.0, %v1843
        %v1845 = vpop.f32.mrf.mxu0
        %v1846 = vadd.f32 0.0, %v1845
        %1847 = vmatmul.bf16.gmra.mxu0 %v1743
        %v1848 = vpop.f32.mrf.mxu0
        %v1849 = vadd.f32 0.0, %v1848
        %v1850 = vpop.f32.mrf.mxu0
        %v1851 = vadd.f32 0.0, %v1850
        %1852 = vmatmul.bf16.gmra.mxu0 %v1751
        %v1853 = vpop.f32.mrf.mxu0
        %v1854 = vadd.f32 0.0, %v1853
        %v1855 = vpop.f32.mrf.mxu0
        %v1856 = vadd.f32 0.0, %v1855
        %1857 = vmatmul.bf16.gmra.mxu0 %v1759
        %v1858 = vpop.f32.mrf.mxu0
        %v1859 = vadd.f32 0.0, %v1858
        %v1860 = vpop.f32.mrf.mxu0
        %v1861 = vadd.f32 0.0, %v1860
        %1862 = vmatmul.bf16.gmra.mxu0 %v1762
        %v1863 = vpop.f32.mrf.mxu0
        %v1864 = vadd.f32 0.0, %v1863
        %v1865 = vpop.f32.mrf.mxu0
        %v1866 = vadd.f32 0.0, %v1865
        %1867 = vdwg.mxu0
        %v1892 = vunpack.c.l.b16 %v1626
        %v1893 = vunpack.c.l.b16 %v1627
        %v1894 = vunpack.c.l.b16 %v1628
        %v1895 = vunpack.c.l.b16 %v1629
        %v1896 = vunpack.c.l.b16 %v1630
        %v1897 = vunpack.c.l.b16 %v1631
        %v1898 = vunpack.c.l.b16 %v1632
        %v1899 = vunpack.c.l.b16 %v1633
        %v1900 = vunpack.c.l.b16 %v1634
        %v1901 = vunpack.c.l.b16 %v1635
        %v1902 = vunpack.c.l.b16 %v1636
        %v1903 = vunpack.c.l.b16 %v1637
        %v1904 = vunpack.c.l.b16 %v1638
        %v1905 = vunpack.c.l.b16 %v1639
        %v1906 = vunpack.c.l.b16 %v1640
        %v1907 = vunpack.c.l.b16 %v1641
        %v1908 = vpack.c.b16 %v1893, %v1892
        %v1909 = vpack.c.b16 %v1895, %v1894
        %v1910 = vpack.c.b16 %v1897, %v1896
        %v1911 = vpack.c.b16 %v1899, %v1898
        %v1912 = vpack.c.b16 %v1901, %v1900
        %v1913 = vpack.c.b16 %v1903, %v1902
        %v1914 = vpack.c.b16 %v1905, %v1904
        %v1915 = vpack.c.b16 %v1907, %v1906
        %1924 = vmatpush.bf16.msra.mxu0 %v1915
        %1925 = vmatpush.bf16.msra.mxu0 %v1914
        %1926 = vmatpush.bf16.msra.mxu0 %v1913
        %1927 = vmatpush.bf16.msra.mxu0 %v1912
        %1928 = vmatpush.bf16.msra.mxu0 %v1911
        %1929 = vmatpush.bf16.msra.mxu0 %v1910
        %1930 = vmatpush.bf16.msra.mxu0 %v1909
        %1931 = vmatpush.bf16.msra.mxu0 %v1908
        %1932 = vmatmul.bf16.gmra.mxu0 %v1691
        %v1933 = vpop.f32.mrf.mxu0
        %v1934 = vadd.f32 %v1829, %v1933
        %v1935 = vpop.f32.mrf.mxu0
        %v1936 = vadd.f32 %v1831, %v1935
        %1937 = vmatmul.bf16.gmra.mxu0 %v1692
        %v1938 = vpop.f32.mrf.mxu0
        %v1939 = vadd.f32 %v1834, %v1938
        %v1940 = vpop.f32.mrf.mxu0
        %v1941 = vadd.f32 %v1836, %v1940
        %1942 = vmatmul.bf16.gmra.mxu0 %v1693
        %v1943 = vpop.f32.mrf.mxu0
        %v1944 = vadd.f32 %v1839, %v1943
        %v1945 = vpop.f32.mrf.mxu0
        %v1946 = vadd.f32 %v1841, %v1945
        %1947 = vmatmul.bf16.gmra.mxu0 %v1694
        %v1948 = vpop.f32.mrf.mxu0
        %v1949 = vadd.f32 %v1844, %v1948
        %v1950 = vpop.f32.mrf.mxu0
        %v1951 = vadd.f32 %v1846, %v1950
        %1952 = vmatmul.bf16.gmra.mxu0 %v1695
        %v1953 = vpop.f32.mrf.mxu0
        %v1954 = vadd.f32 %v1849, %v1953
        %v1955 = vpop.f32.mrf.mxu0
        %v1956 = vadd.f32 %v1851, %v1955
        %1957 = vmatmul.bf16.gmra.mxu0 %v1696
        %v1958 = vpop.f32.mrf.mxu0
        %v1959 = vadd.f32 %v1854, %v1958
        %v1960 = vpop.f32.mrf.mxu0
        %v1961 = vadd.f32 %v1856, %v1960
        %1962 = vmatmul.bf16.gmra.mxu0 %v1697
        %v1963 = vpop.f32.mrf.mxu0
        %v1964 = vadd.f32 %v1859, %v1963
        %v1965 = vpop.f32.mrf.mxu0
        %v1966 = vadd.f32 %v1861, %v1965
        %1967 = vmatmul.bf16.gmra.mxu0 %v1698
        %v1968 = vpop.f32.mrf.mxu0
        %v1969 = vadd.f32 %v1864, %v1968
        %v1970 = vpop.f32.mrf.mxu0
        %v1971 = vadd.f32 %v1866, %v1970
        %1972 = vdwg.mxu0
        %s1973 = scalar_lea.vmem %s4, 128
        %v1974 = vld [vmem:[%s1973] sm:$0xf]
        %v1975 = vld [vmem:[%s1973 + $0x4] sm:$0xf]
        %v1976 = vld [vmem:[%s1973 + $0x8] sm:$0xf]
        %v1977 = vld [vmem:[%s1973 + $0xc] sm:$0xf]
        %v1978 = vld [vmem:[%s1973 + $0x10] sm:$0xf]
        %v1979 = vld [vmem:[%s1973 + $0x14] sm:$0xf]
        %v1980 = vld [vmem:[%s1973 + $0x18] sm:$0xf]
        %v1981 = vld [vmem:[%s1973 + $0x1c] sm:$0xf]
        %v1982 = vld [vmem:[%s1973 + $0x20] sm:$0xf]
        %v1983 = vld [vmem:[%s1973 + $0x24] sm:$0xf]
        %v1984 = vld [vmem:[%s1973 + $0x28] sm:$0xf]
        %v1985 = vld [vmem:[%s1973 + $0x2c] sm:$0xf]
        %v1986 = vld [vmem:[%s1973 + $0x30] sm:$0xf]
        %v1987 = vld [vmem:[%s1973 + $0x34] sm:$0xf]
        %v1988 = vld [vmem:[%s1973 + $0x38] sm:$0xf]
        %v1989 = vld [vmem:[%s1973 + $0x3c] sm:$0xf]
        %vm1990 = vcmask 1046528
        %v1991 = vrot.slane %v1691, 1
        %v1992 = vrot.slane %v1692, 1
        %v1993 = vsel %vm1990, %v1991, %v1992
        %v1994 = vrot.slane %v1693, 1
        %v1995 = vsel %vm1990, %v1992, %v1994
        %v1996 = vrot.slane %v1694, 1
        %v1997 = vsel %vm1990, %v1994, %v1996
        %v1998 = vrot.slane %v1695, 1
        %v1999 = vsel %vm1990, %v1996, %v1998
        %v2000 = vrot.slane %v1696, 1
        %v2001 = vsel %vm1990, %v1998, %v2000
        %v2002 = vrot.slane %v1697, 1
        %v2003 = vsel %vm1990, %v2000, %v2002
        %v2004 = vrot.slane %v1698, 1
        %v2005 = vsel %vm1990, %v2002, %v2004
        %v2030 = vunpack.c.l.b16 %v1974
        %v2031 = vunpack.c.l.b16 %v1975
        %v2032 = vunpack.c.l.b16 %v1976
        %v2033 = vunpack.c.l.b16 %v1977
        %v2034 = vunpack.c.l.b16 %v1978
        %v2035 = vunpack.c.l.b16 %v1979
        %v2036 = vunpack.c.l.b16 %v1980
        %v2037 = vunpack.c.l.b16 %v1981
        %v2038 = vunpack.c.l.b16 %v1982
        %v2039 = vunpack.c.l.b16 %v1983
        %v2040 = vunpack.c.l.b16 %v1984
        %v2041 = vunpack.c.l.b16 %v1985
        %v2042 = vunpack.c.l.b16 %v1986
        %v2043 = vunpack.c.l.b16 %v1987
        %v2044 = vunpack.c.l.b16 %v1988
        %v2045 = vunpack.c.l.b16 %v1989
        %v2046 = vpack.c.b16 %v2031, %v2030
        %v2047 = vpack.c.b16 %v2033, %v2032
        %v2048 = vpack.c.b16 %v2035, %v2034
        %v2049 = vpack.c.b16 %v2037, %v2036
        %v2050 = vpack.c.b16 %v2039, %v2038
        %v2051 = vpack.c.b16 %v2041, %v2040
        %v2052 = vpack.c.b16 %v2043, %v2042
        %v2053 = vpack.c.b16 %v2045, %v2044
        %2062 = vmatpush.bf16.msra.mxu0 %v2053
        %2063 = vmatpush.bf16.msra.mxu0 %v2052
        %2064 = vmatpush.bf16.msra.mxu0 %v2051
        %2065 = vmatpush.bf16.msra.mxu0 %v2050
        %2066 = vmatpush.bf16.msra.mxu0 %v2049
        %2067 = vmatpush.bf16.msra.mxu0 %v2048
        %2068 = vmatpush.bf16.msra.mxu0 %v2047
        %2069 = vmatpush.bf16.msra.mxu0 %v2046
        %2070 = vmatmul.bf16.gmra.mxu0 %v1993
        %v2071 = vpop.f32.mrf.mxu0
        %v2072 = vadd.f32 0.0, %v2071
        %v2073 = vpop.f32.mrf.mxu0
        %v2074 = vadd.f32 0.0, %v2073
        %2075 = vmatmul.bf16.gmra.mxu0 %v1995
        %v2076 = vpop.f32.mrf.mxu0
        %v2077 = vadd.f32 0.0, %v2076
        %v2078 = vpop.f32.mrf.mxu0
        %v2079 = vadd.f32 0.0, %v2078
        %2080 = vmatmul.bf16.gmra.mxu0 %v1997
        %v2081 = vpop.f32.mrf.mxu0
        %v2082 = vadd.f32 0.0, %v2081
        %v2083 = vpop.f32.mrf.mxu0
        %v2084 = vadd.f32 0.0, %v2083
        %2085 = vmatmul.bf16.gmra.mxu0 %v1999
        %v2086 = vpop.f32.mrf.mxu0
        %v2087 = vadd.f32 0.0, %v2086
        %v2088 = vpop.f32.mrf.mxu0
        %v2089 = vadd.f32 0.0, %v2088
        %2090 = vmatmul.bf16.gmra.mxu0 %v2001
        %v2091 = vpop.f32.mrf.mxu0
        %v2092 = vadd.f32 0.0, %v2091
        %v2093 = vpop.f32.mrf.mxu0
        %v2094 = vadd.f32 0.0, %v2093
        %2095 = vmatmul.bf16.gmra.mxu0 %v2003
        %v2096 = vpop.f32.mrf.mxu0
        %v2097 = vadd.f32 0.0, %v2096
        %v2098 = vpop.f32.mrf.mxu0
        %v2099 = vadd.f32 0.0, %v2098
        %2100 = vmatmul.bf16.gmra.mxu0 %v2005
        %v2101 = vpop.f32.mrf.mxu0
        %v2102 = vadd.f32 0.0, %v2101
        %v2103 = vpop.f32.mrf.mxu0
        %v2104 = vadd.f32 0.0, %v2103
        %2105 = vmatmul.bf16.gmra.mxu0 %v2004
        %v2106 = vpop.f32.mrf.mxu0
        %v2107 = vadd.f32 0.0, %v2106
        %v2108 = vpop.f32.mrf.mxu0
        %v2109 = vadd.f32 0.0, %v2108
        %2110 = vdwg.mxu0
        %v2111 = vadd.f32 %v1934, %v2072
        %v2112 = vadd.f32 %v1936, %v2074
        %v2113 = vadd.f32 %v1939, %v2077
        %v2114 = vadd.f32 %v1941, %v2079
        %v2115 = vadd.f32 %v1944, %v2082
        %v2116 = vadd.f32 %v1946, %v2084
        %v2117 = vadd.f32 %v1949, %v2087
        %v2118 = vadd.f32 %v1951, %v2089
        %v2119 = vadd.f32 %v1954, %v2092
        %v2120 = vadd.f32 %v1956, %v2094
        %v2121 = vadd.f32 %v1959, %v2097
        %v2122 = vadd.f32 %v1961, %v2099
        %v2123 = vadd.f32 %v1964, %v2102
        %v2124 = vadd.f32 %v1966, %v2104
        %v2125 = vadd.f32 %v1969, %v2107
        %v2126 = vadd.f32 %v1971, %v2109
        %s2127 = scalar_lea.vmem %s4, 192
        %v2128 = vld [vmem:[%s2127] sm:$0xf]
        %v2129 = vld [vmem:[%s2127 + $0x4] sm:$0xf]
        %v2130 = vld [vmem:[%s2127 + $0x8] sm:$0xf]
        %v2131 = vld [vmem:[%s2127 + $0xc] sm:$0xf]
        %v2132 = vld [vmem:[%s2127 + $0x10] sm:$0xf]
        %v2133 = vld [vmem:[%s2127 + $0x14] sm:$0xf]
        %v2134 = vld [vmem:[%s2127 + $0x18] sm:$0xf]
        %v2135 = vld [vmem:[%s2127 + $0x1c] sm:$0xf]
        %v2136 = vld [vmem:[%s2127 + $0x20] sm:$0xf]
        %v2137 = vld [vmem:[%s2127 + $0x24] sm:$0xf]
        %v2138 = vld [vmem:[%s2127 + $0x28] sm:$0xf]
        %v2139 = vld [vmem:[%s2127 + $0x2c] sm:$0xf]
        %v2140 = vld [vmem:[%s2127 + $0x30] sm:$0xf]
        %v2141 = vld [vmem:[%s2127 + $0x34] sm:$0xf]
        %v2142 = vld [vmem:[%s2127 + $0x38] sm:$0xf]
        %v2143 = vld [vmem:[%s2127 + $0x3c] sm:$0xf]
        %vm2144 = vsmask.f32 6400
        %v2145 = vrot.slane %v1701, 1
        %v2146 = vrot.slane %v1703, 2
        %v2147 = vor.u32 %v2145, %v2146
        %v2148 = vrot.slane %v1712, 1
        %v2149 = vrot.slane %v1708, 2
        %v2150 = vor.u32 %v2148, %v2149
        %v2151 = vsel %vm2144, %v2147, %v2150
        %v2152 = vrot.slane %v1720, 1
        %v2153 = vrot.slane %v1716, 2
        %v2154 = vor.u32 %v2152, %v2153
        %v2155 = vsel %vm2144, %v2150, %v2154
        %v2156 = vrot.slane %v1728, 1
        %v2157 = vrot.slane %v1724, 2
        %v2158 = vor.u32 %v2156, %v2157
        %v2159 = vsel %vm2144, %v2154, %v2158
        %v2160 = vrot.slane %v1736, 1
        %v2161 = vrot.slane %v1732, 2
        %v2162 = vor.u32 %v2160, %v2161
        %v2163 = vsel %vm2144, %v2158, %v2162
        %v2164 = vrot.slane %v1744, 1
        %v2165 = vrot.slane %v1740, 2
        %v2166 = vor.u32 %v2164, %v2165
        %v2167 = vsel %vm2144, %v2162, %v2166
        %v2168 = vrot.slane %v1752, 1
        %v2169 = vrot.slane %v1748, 2
        %v2170 = vor.u32 %v2168, %v2169
        %v2171 = vsel %vm2144, %v2166, %v2170
        %v2172 = vrot.slane %v1760, 1
        %v2173 = vrot.slane %v1756, 2
        %v2174 = vor.u32 %v2172, %v2173
        %v2175 = vsel %vm2144, %v2170, %v2174
        %v2200 = vunpack.c.l.b16 %v2128
        %v2201 = vunpack.c.l.b16 %v2129
        %v2202 = vunpack.c.l.b16 %v2130
        %v2203 = vunpack.c.l.b16 %v2131
        %v2204 = vunpack.c.l.b16 %v2132
        %v2205 = vunpack.c.l.b16 %v2133
        %v2206 = vunpack.c.l.b16 %v2134
        %v2207 = vunpack.c.l.b16 %v2135
        %v2208 = vunpack.c.l.b16 %v2136
        %v2209 = vunpack.c.l.b16 %v2137
        %v2210 = vunpack.c.l.b16 %v2138
        %v2211 = vunpack.c.l.b16 %v2139
        %v2212 = vunpack.c.l.b16 %v2140
        %v2213 = vunpack.c.l.b16 %v2141
        %v2214 = vunpack.c.l.b16 %v2142
        %v2215 = vunpack.c.l.b16 %v2143
        %v2216 = vpack.c.b16 %v2201, %v2200
        %v2217 = vpack.c.b16 %v2203, %v2202
        %v2218 = vpack.c.b16 %v2205, %v2204
        %v2219 = vpack.c.b16 %v2207, %v2206
        %v2220 = vpack.c.b16 %v2209, %v2208
        %v2221 = vpack.c.b16 %v2211, %v2210
        %v2222 = vpack.c.b16 %v2213, %v2212
        %v2223 = vpack.c.b16 %v2215, %v2214
        %2232 = vmatpush.bf16.msra.mxu0 %v2223
        %2233 = vmatpush.bf16.msra.mxu0 %v2222
        %2234 = vmatpush.bf16.msra.mxu0 %v2221
        %2235 = vmatpush.bf16.msra.mxu0 %v2220
        %2236 = vmatpush.bf16.msra.mxu0 %v2219
        %2237 = vmatpush.bf16.msra.mxu0 %v2218
        %2238 = vmatpush.bf16.msra.mxu0 %v2217
        %2239 = vmatpush.bf16.msra.mxu0 %v2216
        %2240 = vmatmul.bf16.gmra.mxu0 %v2151
        %v2241 = vpop.f32.mrf.mxu0
        %v2242 = vadd.f32 0.0, %v2241
        %v2243 = vpop.f32.mrf.mxu0
        %v2244 = vadd.f32 0.0, %v2243
        %2245 = vmatmul.bf16.gmra.mxu0 %v2155
        %v2246 = vpop.f32.mrf.mxu0
        %v2247 = vadd.f32 0.0, %v2246
        %v2248 = vpop.f32.mrf.mxu0
        %v2249 = vadd.f32 0.0, %v2248
        %2250 = vmatmul.bf16.gmra.mxu0 %v2159
        %v2251 = vpop.f32.mrf.mxu0
        %v2252 = vadd.f32 0.0, %v2251
        %v2253 = vpop.f32.mrf.mxu0
        %v2254 = vadd.f32 0.0, %v2253
        %2255 = vmatmul.bf16.gmra.mxu0 %v2163
        %v2256 = vpop.f32.mrf.mxu0
        %v2257 = vadd.f32 0.0, %v2256
        %v2258 = vpop.f32.mrf.mxu0
        %v2259 = vadd.f32 0.0, %v2258
        %2260 = vmatmul.bf16.gmra.mxu0 %v2167
        %v2261 = vpop.f32.mrf.mxu0
        %v2262 = vadd.f32 0.0, %v2261
        %v2263 = vpop.f32.mrf.mxu0
        %v2264 = vadd.f32 0.0, %v2263
        %2265 = vmatmul.bf16.gmra.mxu0 %v2171
        %v2266 = vpop.f32.mrf.mxu0
        %v2267 = vadd.f32 0.0, %v2266
        %v2268 = vpop.f32.mrf.mxu0
        %v2269 = vadd.f32 0.0, %v2268
        %2270 = vmatmul.bf16.gmra.mxu0 %v2175
        %v2271 = vpop.f32.mrf.mxu0
        %v2272 = vadd.f32 0.0, %v2271
        %v2273 = vpop.f32.mrf.mxu0
        %v2274 = vadd.f32 0.0, %v2273
        %2275 = vmatmul.bf16.gmra.mxu0 %v2174
        %v2276 = vpop.f32.mrf.mxu0
        %v2277 = vadd.f32 0.0, %v2276
        %v2278 = vpop.f32.mrf.mxu0
        %v2279 = vadd.f32 0.0, %v2278
        %2280 = vdwg.mxu0
        %v2281 = vadd.f32 %v2111, %v2242
        %v2282 = vadd.f32 %v2112, %v2244
        %v2283 = vadd.f32 %v2113, %v2247
        %v2284 = vadd.f32 %v2114, %v2249
        %v2285 = vadd.f32 %v2115, %v2252
        %v2286 = vadd.f32 %v2116, %v2254
        %v2287 = vadd.f32 %v2117, %v2257
        %v2288 = vadd.f32 %v2118, %v2259
        %v2289 = vadd.f32 %v2119, %v2262
        %v2290 = vadd.f32 %v2120, %v2264
        %v2291 = vadd.f32 %v2121, %v2267
        %v2292 = vadd.f32 %v2122, %v2269
        %v2293 = vadd.f32 %v2123, %v2272
        %v2294 = vadd.f32 %v2124, %v2274
        %v2295 = vadd.f32 %v2125, %v2277
        %v2296 = vadd.f32 %v2126, %v2279
        %s2297 = scalar_lea.vmem %s4, 256
        %v2298 = vld [vmem:[%s2297] sm:$0xf]
        %v2299 = vld [vmem:[%s2297 + $0x4] sm:$0xf]
        %v2300 = vld [vmem:[%s2297 + $0x8] sm:$0xf]
        %v2301 = vld [vmem:[%s2297 + $0xc] sm:$0xf]
        %v2302 = vld [vmem:[%s2297 + $0x10] sm:$0xf]
        %v2303 = vld [vmem:[%s2297 + $0x14] sm:$0xf]
        %v2304 = vld [vmem:[%s2297 + $0x18] sm:$0xf]
        %v2305 = vld [vmem:[%s2297 + $0x1c] sm:$0xf]
        %v2306 = vld [vmem:[%s2297 + $0x20] sm:$0xf]
        %v2307 = vld [vmem:[%s2297 + $0x24] sm:$0xf]
        %v2308 = vld [vmem:[%s2297 + $0x28] sm:$0xf]
        %v2309 = vld [vmem:[%s2297 + $0x2c] sm:$0xf]
        %v2310 = vld [vmem:[%s2297 + $0x30] sm:$0xf]
        %v2311 = vld [vmem:[%s2297 + $0x34] sm:$0xf]
        %v2312 = vld [vmem:[%s2297 + $0x38] sm:$0xf]
        %v2313 = vld [vmem:[%s2297 + $0x3c] sm:$0xf]
        %vm2314 = vcmask 1045504
        %v2315 = vrot.slane %v1691, 2
        %v2316 = vrot.slane %v1692, 2
        %v2317 = vsel %vm2314, %v2315, %v2316
        %v2318 = vrot.slane %v1693, 2
        %v2319 = vsel %vm2314, %v2316, %v2318
        %v2320 = vrot.slane %v1694, 2
        %v2321 = vsel %vm2314, %v2318, %v2320
        %v2322 = vrot.slane %v1695, 2
        %v2323 = vsel %vm2314, %v2320, %v2322
        %v2324 = vrot.slane %v1696, 2
        %v2325 = vsel %vm2314, %v2322, %v2324
        %v2326 = vrot.slane %v1697, 2
        %v2327 = vsel %vm2314, %v2324, %v2326
        %v2328 = vrot.slane %v1698, 2
        %v2329 = vsel %vm2314, %v2326, %v2328
        %v2354 = vunpack.c.l.b16 %v2298
        %v2355 = vunpack.c.l.b16 %v2299
        %v2356 = vunpack.c.l.b16 %v2300
        %v2357 = vunpack.c.l.b16 %v2301
        %v2358 = vunpack.c.l.b16 %v2302
        %v2359 = vunpack.c.l.b16 %v2303
        %v2360 = vunpack.c.l.b16 %v2304
        %v2361 = vunpack.c.l.b16 %v2305
        %v2362 = vunpack.c.l.b16 %v2306
        %v2363 = vunpack.c.l.b16 %v2307
        %v2364 = vunpack.c.l.b16 %v2308
        %v2365 = vunpack.c.l.b16 %v2309
        %v2366 = vunpack.c.l.b16 %v2310
        %v2367 = vunpack.c.l.b16 %v2311
        %v2368 = vunpack.c.l.b16 %v2312
        %v2369 = vunpack.c.l.b16 %v2313
        %v2370 = vpack.c.b16 %v2355, %v2354
        %v2371 = vpack.c.b16 %v2357, %v2356
        %v2372 = vpack.c.b16 %v2359, %v2358
        %v2373 = vpack.c.b16 %v2361, %v2360
        %v2374 = vpack.c.b16 %v2363, %v2362
        %v2375 = vpack.c.b16 %v2365, %v2364
        %v2376 = vpack.c.b16 %v2367, %v2366
        %v2377 = vpack.c.b16 %v2369, %v2368
        %2386 = vmatpush.bf16.msra.mxu0 %v2377
        %2387 = vmatpush.bf16.msra.mxu0 %v2376
        %2388 = vmatpush.bf16.msra.mxu0 %v2375
        %2389 = vmatpush.bf16.msra.mxu0 %v2374
        %2390 = vmatpush.bf16.msra.mxu0 %v2373
        %2391 = vmatpush.bf16.msra.mxu0 %v2372
        %2392 = vmatpush.bf16.msra.mxu0 %v2371
        %2393 = vmatpush.bf16.msra.mxu0 %v2370
        %2394 = vmatmul.bf16.gmra.mxu0 %v2317
        %v2395 = vpop.f32.mrf.mxu0
        %v2396 = vadd.f32 0.0, %v2395
        %v2397 = vpop.f32.mrf.mxu0
        %v2398 = vadd.f32 0.0, %v2397
        %2399 = vmatmul.bf16.gmra.mxu0 %v2319
        %v2400 = vpop.f32.mrf.mxu0
        %v2401 = vadd.f32 0.0, %v2400
        %v2402 = vpop.f32.mrf.mxu0
        %v2403 = vadd.f32 0.0, %v2402
        %2404 = vmatmul.bf16.gmra.mxu0 %v2321
        %v2405 = vpop.f32.mrf.mxu0
        %v2406 = vadd.f32 0.0, %v2405
        %v2407 = vpop.f32.mrf.mxu0
        %v2408 = vadd.f32 0.0, %v2407
        %2409 = vmatmul.bf16.gmra.mxu0 %v2323
        %v2410 = vpop.f32.mrf.mxu0
        %v2411 = vadd.f32 0.0, %v2410
        %v2412 = vpop.f32.mrf.mxu0
        %v2413 = vadd.f32 0.0, %v2412
        %2414 = vmatmul.bf16.gmra.mxu0 %v2325
        %v2415 = vpop.f32.mrf.mxu0
        %v2416 = vadd.f32 0.0, %v2415
        %v2417 = vpop.f32.mrf.mxu0
        %v2418 = vadd.f32 0.0, %v2417
        %2419 = vmatmul.bf16.gmra.mxu0 %v2327
        %v2420 = vpop.f32.mrf.mxu0
        %v2421 = vadd.f32 0.0, %v2420
        %v2422 = vpop.f32.mrf.mxu0
        %v2423 = vadd.f32 0.0, %v2422
        %2424 = vmatmul.bf16.gmra.mxu0 %v2329
        %v2425 = vpop.f32.mrf.mxu0
        %v2426 = vadd.f32 0.0, %v2425
        %v2427 = vpop.f32.mrf.mxu0
        %v2428 = vadd.f32 0.0, %v2427
        %2429 = vmatmul.bf16.gmra.mxu0 %v2328
        %v2430 = vpop.f32.mrf.mxu0
        %v2431 = vadd.f32 0.0, %v2430
        %v2432 = vpop.f32.mrf.mxu0
        %v2433 = vadd.f32 0.0, %v2432
        %2434 = vdwg.mxu0
        %v2435 = vadd.f32 %v2281, %v2396
        %v2436 = vadd.f32 %v2282, %v2398
        %v2437 = vadd.f32 %v2283, %v2401
        %v2438 = vadd.f32 %v2284, %v2403
        %v2439 = vadd.f32 %v2285, %v2406
        %v2440 = vadd.f32 %v2286, %v2408
        %v2441 = vadd.f32 %v2287, %v2411
        %v2442 = vadd.f32 %v2288, %v2413
        %v2443 = vadd.f32 %v2289, %v2416
        %v2444 = vadd.f32 %v2290, %v2418
        %v2445 = vadd.f32 %v2291, %v2421
        %v2446 = vadd.f32 %v2292, %v2423
        %v2447 = vadd.f32 %v2293, %v2426
        %v2448 = vadd.f32 %v2294, %v2428
        %v2449 = vadd.f32 %v2295, %v2431
        %v2450 = vadd.f32 %v2296, %v2433
        %s2451 = scalar_lea.vmem %s4, 320
        %v2452 = vld [vmem:[%s2451] sm:$0xf]
        %v2453 = vld [vmem:[%s2451 + $0x4] sm:$0xf]
        %v2454 = vld [vmem:[%s2451 + $0x8] sm:$0xf]
        %v2455 = vld [vmem:[%s2451 + $0xc] sm:$0xf]
        %v2456 = vld [vmem:[%s2451 + $0x10] sm:$0xf]
        %v2457 = vld [vmem:[%s2451 + $0x14] sm:$0xf]
        %v2458 = vld [vmem:[%s2451 + $0x18] sm:$0xf]
        %v2459 = vld [vmem:[%s2451 + $0x1c] sm:$0xf]
        %v2460 = vld [vmem:[%s2451 + $0x20] sm:$0xf]
        %v2461 = vld [vmem:[%s2451 + $0x24] sm:$0xf]
        %v2462 = vld [vmem:[%s2451 + $0x28] sm:$0xf]
        %v2463 = vld [vmem:[%s2451 + $0x2c] sm:$0xf]
        %v2464 = vld [vmem:[%s2451 + $0x30] sm:$0xf]
        %v2465 = vld [vmem:[%s2451 + $0x34] sm:$0xf]
        %v2466 = vld [vmem:[%s2451 + $0x38] sm:$0xf]
        %v2467 = vld [vmem:[%s2451 + $0x3c] sm:$0xf]
        %vm2468 = vsmask.f32 5376
        %v2469 = vrot.slane %v1701, 2
        %v2470 = vrot.slane %v1703, 3
        %v2471 = vor.u32 %v2469, %v2470
        %v2472 = vrot.slane %v1712, 2
        %v2473 = vrot.slane %v1708, 3
        %v2474 = vor.u32 %v2472, %v2473
        %v2475 = vsel %vm2468, %v2471, %v2474
        %v2476 = vrot.slane %v1720, 2
        %v2477 = vrot.slane %v1716, 3
        %v2478 = vor.u32 %v2476, %v2477
        %v2479 = vsel %vm2468, %v2474, %v2478
        %v2480 = vrot.slane %v1728, 2
        %v2481 = vrot.slane %v1724, 3
        %v2482 = vor.u32 %v2480, %v2481
        %v2483 = vsel %vm2468, %v2478, %v2482
        %v2484 = vrot.slane %v1736, 2
        %v2485 = vrot.slane %v1732, 3
        %v2486 = vor.u32 %v2484, %v2485
        %v2487 = vsel %vm2468, %v2482, %v2486
        %v2488 = vrot.slane %v1744, 2
        %v2489 = vrot.slane %v1740, 3
        %v2490 = vor.u32 %v2488, %v2489
        %v2491 = vsel %vm2468, %v2486, %v2490
        %v2492 = vrot.slane %v1752, 2
        %v2493 = vrot.slane %v1748, 3
        %v2494 = vor.u32 %v2492, %v2493
        %v2495 = vsel %vm2468, %v2490, %v2494
        %v2496 = vrot.slane %v1760, 2
        %v2497 = vrot.slane %v1756, 3
        %v2498 = vor.u32 %v2496, %v2497
        %v2499 = vsel %vm2468, %v2494, %v2498
        %v2524 = vunpack.c.l.b16 %v2452
        %v2525 = vunpack.c.l.b16 %v2453
        %v2526 = vunpack.c.l.b16 %v2454
        %v2527 = vunpack.c.l.b16 %v2455
        %v2528 = vunpack.c.l.b16 %v2456
        %v2529 = vunpack.c.l.b16 %v2457
        %v2530 = vunpack.c.l.b16 %v2458
        %v2531 = vunpack.c.l.b16 %v2459
        %v2532 = vunpack.c.l.b16 %v2460
        %v2533 = vunpack.c.l.b16 %v2461
        %v2534 = vunpack.c.l.b16 %v2462
        %v2535 = vunpack.c.l.b16 %v2463
        %v2536 = vunpack.c.l.b16 %v2464
        %v2537 = vunpack.c.l.b16 %v2465
        %v2538 = vunpack.c.l.b16 %v2466
        %v2539 = vunpack.c.l.b16 %v2467
        %v2540 = vpack.c.b16 %v2525, %v2524
        %v2541 = vpack.c.b16 %v2527, %v2526
        %v2542 = vpack.c.b16 %v2529, %v2528
        %v2543 = vpack.c.b16 %v2531, %v2530
        %v2544 = vpack.c.b16 %v2533, %v2532
        %v2545 = vpack.c.b16 %v2535, %v2534
        %v2546 = vpack.c.b16 %v2537, %v2536
        %v2547 = vpack.c.b16 %v2539, %v2538
        %2556 = vmatpush.bf16.msra.mxu0 %v2547
        %2557 = vmatpush.bf16.msra.mxu0 %v2546
        %2558 = vmatpush.bf16.msra.mxu0 %v2545
        %2559 = vmatpush.bf16.msra.mxu0 %v2544
        %2560 = vmatpush.bf16.msra.mxu0 %v2543
        %2561 = vmatpush.bf16.msra.mxu0 %v2542
        %2562 = vmatpush.bf16.msra.mxu0 %v2541
        %2563 = vmatpush.bf16.msra.mxu0 %v2540
        %2564 = vmatmul.bf16.gmra.mxu0 %v2475
        %v2565 = vpop.f32.mrf.mxu0
        %v2566 = vadd.f32 0.0, %v2565
        %v2567 = vpop.f32.mrf.mxu0
        %v2568 = vadd.f32 0.0, %v2567
        %2569 = vmatmul.bf16.gmra.mxu0 %v2479
        %v2570 = vpop.f32.mrf.mxu0
        %v2571 = vadd.f32 0.0, %v2570
        %v2572 = vpop.f32.mrf.mxu0
        %v2573 = vadd.f32 0.0, %v2572
        %2574 = vmatmul.bf16.gmra.mxu0 %v2483
        %v2575 = vpop.f32.mrf.mxu0
        %v2576 = vadd.f32 0.0, %v2575
        %v2577 = vpop.f32.mrf.mxu0
        %v2578 = vadd.f32 0.0, %v2577
        %2579 = vmatmul.bf16.gmra.mxu0 %v2487
        %v2580 = vpop.f32.mrf.mxu0
        %v2581 = vadd.f32 0.0, %v2580
        %v2582 = vpop.f32.mrf.mxu0
        %v2583 = vadd.f32 0.0, %v2582
        %2584 = vmatmul.bf16.gmra.mxu0 %v2491
        %v2585 = vpop.f32.mrf.mxu0
        %v2586 = vadd.f32 0.0, %v2585
        %v2587 = vpop.f32.mrf.mxu0
        %v2588 = vadd.f32 0.0, %v2587
        %2589 = vmatmul.bf16.gmra.mxu0 %v2495
        %v2590 = vpop.f32.mrf.mxu0
        %v2591 = vadd.f32 0.0, %v2590
        %v2592 = vpop.f32.mrf.mxu0
        %v2593 = vadd.f32 0.0, %v2592
        %2594 = vmatmul.bf16.gmra.mxu0 %v2499
        %v2595 = vpop.f32.mrf.mxu0
        %v2596 = vadd.f32 0.0, %v2595
        %v2597 = vpop.f32.mrf.mxu0
        %v2598 = vadd.f32 0.0, %v2597
        %2599 = vmatmul.bf16.gmra.mxu0 %v2498
        %v2600 = vpop.f32.mrf.mxu0
        %v2601 = vadd.f32 0.0, %v2600
        %v2602 = vpop.f32.mrf.mxu0
        %v2603 = vadd.f32 0.0, %v2602
        %2604 = vdwg.mxu0
        %v2605 = vadd.f32 %v2435, %v2566
        %v2606 = vadd.f32 %v2436, %v2568
        %v2607 = vadd.f32 %v2437, %v2571
        %v2608 = vadd.f32 %v2438, %v2573
        %v2609 = vadd.f32 %v2439, %v2576
        %v2610 = vadd.f32 %v2440, %v2578
        %v2611 = vadd.f32 %v2441, %v2581
        %v2612 = vadd.f32 %v2442, %v2583
        %v2613 = vadd.f32 %v2443, %v2586
        %v2614 = vadd.f32 %v2444, %v2588
        %v2615 = vadd.f32 %v2445, %v2591
        %v2616 = vadd.f32 %v2446, %v2593
        %v2617 = vadd.f32 %v2447, %v2596
        %v2618 = vadd.f32 %v2448, %v2598
        %v2619 = vadd.f32 %v2449, %v2601
        %v2620 = vadd.f32 %v2450, %v2603
        %s2621 = scalar_lea.vmem %s4, 384
        %v2622 = vld [vmem:[%s2621] sm:$0xf]
        %v2623 = vld [vmem:[%s2621 + $0x4] sm:$0xf]
        %v2624 = vld [vmem:[%s2621 + $0x8] sm:$0xf]
        %v2625 = vld [vmem:[%s2621 + $0xc] sm:$0xf]
        %v2626 = vld [vmem:[%s2621 + $0x10] sm:$0xf]
        %v2627 = vld [vmem:[%s2621 + $0x14] sm:$0xf]
        %v2628 = vld [vmem:[%s2621 + $0x18] sm:$0xf]
        %v2629 = vld [vmem:[%s2621 + $0x1c] sm:$0xf]
        %v2630 = vld [vmem:[%s2621 + $0x20] sm:$0xf]
        %v2631 = vld [vmem:[%s2621 + $0x24] sm:$0xf]
        %v2632 = vld [vmem:[%s2621 + $0x28] sm:$0xf]
        %v2633 = vld [vmem:[%s2621 + $0x2c] sm:$0xf]
        %v2634 = vld [vmem:[%s2621 + $0x30] sm:$0xf]
        %v2635 = vld [vmem:[%s2621 + $0x34] sm:$0xf]
        %v2636 = vld [vmem:[%s2621 + $0x38] sm:$0xf]
        %v2637 = vld [vmem:[%s2621 + $0x3c] sm:$0xf]
        %vm2638 = vcmask 1044480
        %v2639 = vrot.slane %v1691, 3
        %v2640 = vrot.slane %v1692, 3
        %v2641 = vsel %vm2638, %v2639, %v2640
        %v2642 = vrot.slane %v1693, 3
        %v2643 = vsel %vm2638, %v2640, %v2642
        %v2644 = vrot.slane %v1694, 3
        %v2645 = vsel %vm2638, %v2642, %v2644
        %v2646 = vrot.slane %v1695, 3
        %v2647 = vsel %vm2638, %v2644, %v2646
        %v2648 = vrot.slane %v1696, 3
        %v2649 = vsel %vm2638, %v2646, %v2648
        %v2650 = vrot.slane %v1697, 3
        %v2651 = vsel %vm2638, %v2648, %v2650
        %v2652 = vrot.slane %v1698, 3
        %v2653 = vsel %vm2638, %v2650, %v2652
        %v2678 = vunpack.c.l.b16 %v2622
        %v2679 = vunpack.c.l.b16 %v2623
        %v2680 = vunpack.c.l.b16 %v2624
        %v2681 = vunpack.c.l.b16 %v2625
        %v2682 = vunpack.c.l.b16 %v2626
        %v2683 = vunpack.c.l.b16 %v2627
        %v2684 = vunpack.c.l.b16 %v2628
        %v2685 = vunpack.c.l.b16 %v2629
        %v2686 = vunpack.c.l.b16 %v2630
        %v2687 = vunpack.c.l.b16 %v2631
        %v2688 = vunpack.c.l.b16 %v2632
        %v2689 = vunpack.c.l.b16 %v2633
        %v2690 = vunpack.c.l.b16 %v2634
        %v2691 = vunpack.c.l.b16 %v2635
        %v2692 = vunpack.c.l.b16 %v2636
        %v2693 = vunpack.c.l.b16 %v2637
        %v2694 = vpack.c.b16 %v2679, %v2678
        %v2695 = vpack.c.b16 %v2681, %v2680
        %v2696 = vpack.c.b16 %v2683, %v2682
        %v2697 = vpack.c.b16 %v2685, %v2684
        %v2698 = vpack.c.b16 %v2687, %v2686
        %v2699 = vpack.c.b16 %v2689, %v2688
        %v2700 = vpack.c.b16 %v2691, %v2690
        %v2701 = vpack.c.b16 %v2693, %v2692
        %2710 = vmatpush.bf16.msra.mxu0 %v2701
        %2711 = vmatpush.bf16.msra.mxu0 %v2700
        %2712 = vmatpush.bf16.msra.mxu0 %v2699
        %2713 = vmatpush.bf16.msra.mxu0 %v2698
        %2714 = vmatpush.bf16.msra.mxu0 %v2697
        %2715 = vmatpush.bf16.msra.mxu0 %v2696
        %2716 = vmatpush.bf16.msra.mxu0 %v2695
        %2717 = vmatpush.bf16.msra.mxu0 %v2694
        %2718 = vmatmul.bf16.gmra.mxu0 %v2641
        %v2719 = vpop.f32.mrf.mxu0
        %v2720 = vadd.f32 0.0, %v2719
        %v2721 = vpop.f32.mrf.mxu0
        %v2722 = vadd.f32 0.0, %v2721
        %2723 = vmatmul.bf16.gmra.mxu0 %v2643
        %v2724 = vpop.f32.mrf.mxu0
        %v2725 = vadd.f32 0.0, %v2724
        %v2726 = vpop.f32.mrf.mxu0
        %v2727 = vadd.f32 0.0, %v2726
        %2728 = vmatmul.bf16.gmra.mxu0 %v2645
        %v2729 = vpop.f32.mrf.mxu0
        %v2730 = vadd.f32 0.0, %v2729
        %v2731 = vpop.f32.mrf.mxu0
        %v2732 = vadd.f32 0.0, %v2731
        %2733 = vmatmul.bf16.gmra.mxu0 %v2647
        %v2734 = vpop.f32.mrf.mxu0
        %v2735 = vadd.f32 0.0, %v2734
        %v2736 = vpop.f32.mrf.mxu0
        %v2737 = vadd.f32 0.0, %v2736
        %2738 = vmatmul.bf16.gmra.mxu0 %v2649
        %v2739 = vpop.f32.mrf.mxu0
        %v2740 = vadd.f32 0.0, %v2739
        %v2741 = vpop.f32.mrf.mxu0
        %v2742 = vadd.f32 0.0, %v2741
        %2743 = vmatmul.bf16.gmra.mxu0 %v2651
        %v2744 = vpop.f32.mrf.mxu0
        %v2745 = vadd.f32 0.0, %v2744
        %v2746 = vpop.f32.mrf.mxu0
        %v2747 = vadd.f32 0.0, %v2746
        %2748 = vmatmul.bf16.gmra.mxu0 %v2653
        %v2749 = vpop.f32.mrf.mxu0
        %v2750 = vadd.f32 0.0, %v2749
        %v2751 = vpop.f32.mrf.mxu0
        %v2752 = vadd.f32 0.0, %v2751
        %2753 = vmatmul.bf16.gmra.mxu0 %v2652
        %v2754 = vpop.f32.mrf.mxu0
        %v2755 = vadd.f32 0.0, %v2754
        %v2756 = vpop.f32.mrf.mxu0
        %v2757 = vadd.f32 0.0, %v2756
        %2758 = vdwg.mxu0
        %v2759 = vadd.f32 %v2605, %v2720
        %v2760 = vadd.f32 %v2606, %v2722
        %v2761 = vadd.f32 %v2607, %v2725
        %v2762 = vadd.f32 %v2608, %v2727
        %v2763 = vadd.f32 %v2609, %v2730
        %v2764 = vadd.f32 %v2610, %v2732
        %v2765 = vadd.f32 %v2611, %v2735
        %v2766 = vadd.f32 %v2612, %v2737
        %v2767 = vadd.f32 %v2613, %v2740
        %v2768 = vadd.f32 %v2614, %v2742
        %v2769 = vadd.f32 %v2615, %v2745
        %v2770 = vadd.f32 %v2616, %v2747
        %v2771 = vadd.f32 %v2617, %v2750
        %v2772 = vadd.f32 %v2618, %v2752
        %v2773 = vadd.f32 %v2619, %v2755
        %v2774 = vadd.f32 %v2620, %v2757
        %s2775 = scalar_lea.vmem %s4, 448
        %v2776 = vld [vmem:[%s2775] sm:$0xf]
        %v2777 = vld [vmem:[%s2775 + $0x4] sm:$0xf]
        %v2778 = vld [vmem:[%s2775 + $0x8] sm:$0xf]
        %v2779 = vld [vmem:[%s2775 + $0xc] sm:$0xf]
        %v2780 = vld [vmem:[%s2775 + $0x10] sm:$0xf]
        %v2781 = vld [vmem:[%s2775 + $0x14] sm:$0xf]
        %v2782 = vld [vmem:[%s2775 + $0x18] sm:$0xf]
        %v2783 = vld [vmem:[%s2775 + $0x1c] sm:$0xf]
        %v2784 = vld [vmem:[%s2775 + $0x20] sm:$0xf]
        %v2785 = vld [vmem:[%s2775 + $0x24] sm:$0xf]
        %v2786 = vld [vmem:[%s2775 + $0x28] sm:$0xf]
        %v2787 = vld [vmem:[%s2775 + $0x2c] sm:$0xf]
        %v2788 = vld [vmem:[%s2775 + $0x30] sm:$0xf]
        %v2789 = vld [vmem:[%s2775 + $0x34] sm:$0xf]
        %v2790 = vld [vmem:[%s2775 + $0x38] sm:$0xf]
        %v2791 = vld [vmem:[%s2775 + $0x3c] sm:$0xf]
        %vm2792 = vsmask.f32 4352
        %v2793 = vrot.slane %v1701, 3
        %v2794 = vrot.slane %v1703, 4
        %v2795 = vor.u32 %v2793, %v2794
        %v2796 = vrot.slane %v1712, 3
        %v2797 = vrot.slane %v1708, 4
        %v2798 = vor.u32 %v2796, %v2797
        %v2799 = vsel %vm2792, %v2795, %v2798
        %v2800 = vrot.slane %v1720, 3
        %v2801 = vrot.slane %v1716, 4
        %v2802 = vor.u32 %v2800, %v2801
        %v2803 = vsel %vm2792, %v2798, %v2802
        %v2804 = vrot.slane %v1728, 3
        %v2805 = vrot.slane %v1724, 4
        %v2806 = vor.u32 %v2804, %v2805
        %v2807 = vsel %vm2792, %v2802, %v2806
        %v2808 = vrot.slane %v1736, 3
        %v2809 = vrot.slane %v1732, 4
        %v2810 = vor.u32 %v2808, %v2809
        %v2811 = vsel %vm2792, %v2806, %v2810
        %v2812 = vrot.slane %v1744, 3
        %v2813 = vrot.slane %v1740, 4
        %v2814 = vor.u32 %v2812, %v2813
        %v2815 = vsel %vm2792, %v2810, %v2814
        %v2816 = vrot.slane %v1752, 3
        %v2817 = vrot.slane %v1748, 4
        %v2818 = vor.u32 %v2816, %v2817
        %v2819 = vsel %vm2792, %v2814, %v2818
        %v2820 = vrot.slane %v1760, 3
        %v2821 = vrot.slane %v1756, 4
        %v2822 = vor.u32 %v2820, %v2821
        %v2823 = vsel %vm2792, %v2818, %v2822
        %v2848 = vunpack.c.l.b16 %v2776
        %v2849 = vunpack.c.l.b16 %v2777
        %v2850 = vunpack.c.l.b16 %v2778
        %v2851 = vunpack.c.l.b16 %v2779
        %v2852 = vunpack.c.l.b16 %v2780
        %v2853 = vunpack.c.l.b16 %v2781
        %v2854 = vunpack.c.l.b16 %v2782
        %v2855 = vunpack.c.l.b16 %v2783
        %v2856 = vunpack.c.l.b16 %v2784
        %v2857 = vunpack.c.l.b16 %v2785
        %v2858 = vunpack.c.l.b16 %v2786
        %v2859 = vunpack.c.l.b16 %v2787
        %v2860 = vunpack.c.l.b16 %v2788
        %v2861 = vunpack.c.l.b16 %v2789
        %v2862 = vunpack.c.l.b16 %v2790
        %v2863 = vunpack.c.l.b16 %v2791
        %v2864 = vpack.c.b16 %v2849, %v2848
        %v2865 = vpack.c.b16 %v2851, %v2850
        %v2866 = vpack.c.b16 %v2853, %v2852
        %v2867 = vpack.c.b16 %v2855, %v2854
        %v2868 = vpack.c.b16 %v2857, %v2856
        %v2869 = vpack.c.b16 %v2859, %v2858
        %v2870 = vpack.c.b16 %v2861, %v2860
        %v2871 = vpack.c.b16 %v2863, %v2862
        %2880 = vmatpush.bf16.msra.mxu0 %v2871
        %2881 = vmatpush.bf16.msra.mxu0 %v2870
        %2882 = vmatpush.bf16.msra.mxu0 %v2869
        %2883 = vmatpush.bf16.msra.mxu0 %v2868
        %2884 = vmatpush.bf16.msra.mxu0 %v2867
        %2885 = vmatpush.bf16.msra.mxu0 %v2866
        %2886 = vmatpush.bf16.msra.mxu0 %v2865
        %2887 = vmatpush.bf16.msra.mxu0 %v2864
        %2888 = vmatmul.bf16.gmra.mxu0 %v2799
        %v2889 = vpop.f32.mrf.mxu0
        %v2890 = vadd.f32 0.0, %v2889
        %v2891 = vpop.f32.mrf.mxu0
        %v2892 = vadd.f32 0.0, %v2891
        %2893 = vmatmul.bf16.gmra.mxu0 %v2803
        %v2894 = vpop.f32.mrf.mxu0
        %v2895 = vadd.f32 0.0, %v2894
        %v2896 = vpop.f32.mrf.mxu0
        %v2897 = vadd.f32 0.0, %v2896
        %2898 = vmatmul.bf16.gmra.mxu0 %v2807
        %v2899 = vpop.f32.mrf.mxu0
        %v2900 = vadd.f32 0.0, %v2899
        %v2901 = vpop.f32.mrf.mxu0
        %v2902 = vadd.f32 0.0, %v2901
        %2903 = vmatmul.bf16.gmra.mxu0 %v2811
        %v2904 = vpop.f32.mrf.mxu0
        %v2905 = vadd.f32 0.0, %v2904
        %v2906 = vpop.f32.mrf.mxu0
        %v2907 = vadd.f32 0.0, %v2906
        %2908 = vmatmul.bf16.gmra.mxu0 %v2815
        %v2909 = vpop.f32.mrf.mxu0
        %v2910 = vadd.f32 0.0, %v2909
        %v2911 = vpop.f32.mrf.mxu0
        %v2912 = vadd.f32 0.0, %v2911
        %2913 = vmatmul.bf16.gmra.mxu0 %v2819
        %v2914 = vpop.f32.mrf.mxu0
        %v2915 = vadd.f32 0.0, %v2914
        %v2916 = vpop.f32.mrf.mxu0
        %v2917 = vadd.f32 0.0, %v2916
        %2918 = vmatmul.bf16.gmra.mxu0 %v2823
        %v2919 = vpop.f32.mrf.mxu0
        %v2920 = vadd.f32 0.0, %v2919
        %v2921 = vpop.f32.mrf.mxu0
        %v2922 = vadd.f32 0.0, %v2921
        %2923 = vmatmul.bf16.gmra.mxu0 %v2822
        %v2924 = vpop.f32.mrf.mxu0
        %v2925 = vadd.f32 0.0, %v2924
        %v2926 = vpop.f32.mrf.mxu0
        %v2927 = vadd.f32 0.0, %v2926
        %2928 = vdwg.mxu0
        %v2929 = vadd.f32 %v2759, %v2890
        %v2930 = vadd.f32 %v2760, %v2892
        %v2931 = vadd.f32 %v2761, %v2895
        %v2932 = vadd.f32 %v2762, %v2897
        %v2933 = vadd.f32 %v2763, %v2900
        %v2934 = vadd.f32 %v2764, %v2902
        %v2935 = vadd.f32 %v2765, %v2905
        %v2936 = vadd.f32 %v2766, %v2907
        %v2937 = vadd.f32 %v2767, %v2910
        %v2938 = vadd.f32 %v2768, %v2912
        %v2939 = vadd.f32 %v2769, %v2915
        %v2940 = vadd.f32 %v2770, %v2917
        %v2941 = vadd.f32 %v2771, %v2920
        %v2942 = vadd.f32 %v2772, %v2922
        %v2943 = vadd.f32 %v2773, %v2925
        %v2944 = vadd.f32 %v2774, %v2927
        %v2945 = vld [vmem:[%s5] sm:$0x1]
        %v2947 = vperm.slane %v2945, 0
        %v2949 = vadd.f32 %v2929, %v2947
        %v2950 = vadd.f32 %v2930, %v2947
        %v2951 = vadd.f32 %v2931, %v2947
        %v2952 = vadd.f32 %v2932, %v2947
        %v2953 = vadd.f32 %v2933, %v2947
        %v2954 = vadd.f32 %v2934, %v2947
        %v2955 = vadd.f32 %v2935, %v2947
        %v2956 = vadd.f32 %v2936, %v2947
        %v2957 = vadd.f32 %v2937, %v2947
        %v2958 = vadd.f32 %v2938, %v2947
        %v2959 = vadd.f32 %v2939, %v2947
        %v2960 = vadd.f32 %v2940, %v2947
        %v2961 = vadd.f32 %v2941, %v2947
        %v2962 = vadd.f32 %v2942, %v2947
        %v2963 = vadd.f32 %v2943, %v2947
        %v2964 = vadd.f32 %v2944, %v2947
        %vm2965 = vcmask 523264
        %2966 = vst.msk [vmem:[#allocation2] sm:$0xff] %vm2965, %v2949
        %2967 = vst.msk [vmem:[#allocation2 + $0x8] sm:$0xff] %vm2965, %v2950
        %2968 = vst.msk [vmem:[#allocation2 + $0x10] sm:$0xff] %vm2965, %v2951
        %2969 = vst.msk [vmem:[#allocation2 + $0x18] sm:$0xff] %vm2965, %v2952
        %2970 = vst.msk [vmem:[#allocation2 + $0x20] sm:$0xff] %vm2965, %v2953
        %2971 = vst.msk [vmem:[#allocation2 + $0x28] sm:$0xff] %vm2965, %v2954
        %2972 = vst.msk [vmem:[#allocation2 + $0x30] sm:$0xff] %vm2965, %v2955
        %2973 = vst.msk [vmem:[#allocation2 + $0x38] sm:$0xff] %vm2965, %v2956
        %2974 = vst.msk [vmem:[#allocation2 + $0x40] sm:$0xff] %vm2965, %v2957
        %2975 = vst.msk [vmem:[#allocation2 + $0x48] sm:$0xff] %vm2965, %v2958
        %2976 = vst.msk [vmem:[#allocation2 + $0x50] sm:$0xff] %vm2965, %v2959
        %2977 = vst.msk [vmem:[#allocation2 + $0x58] sm:$0xff] %vm2965, %v2960
        %2978 = vst.msk [vmem:[#allocation2 + $0x60] sm:$0xff] %vm2965, %v2961
        %2979 = vst.msk [vmem:[#allocation2 + $0x68] sm:$0xff] %vm2965, %v2962
        %2980 = vst.msk [vmem:[#allocation2 + $0x70] sm:$0xff] %vm2965, %v2963
        %vm2981 = vcmask 516096
        %2982 = vst.msk [vmem:[#allocation2 + $0x78] sm:$0x1] %vm2981, %v2964
        %vm2983 = vcmask 522240
        %2984 = vst.msk [vmem:[#allocation2 + $0x79] sm:$0x7f] %vm2983, 0.0
        %v2985 = vld [vmem:[#allocation2] ss:$4 sm:$0xff]
        %s2986 = scalar_lea.vmem [#allocation2], 32
        %v2987 = vld [vmem:[%s2986] ss:$4 sm:$0xff]
        %s2988 = scalar_lea.vmem [#allocation2], 64
        %v2989 = vld [vmem:[%s2988] ss:$4 sm:$0xff]
        %s2990 = scalar_lea.vmem [#allocation2], 96
        %v2991 = vld [vmem:[%s2990] ss:$4 sm:$0xff]
        %s2992 = scalar_lea.vmem [#allocation2], 1
        %v2993 = vld [vmem:[%s2992] ss:$4 sm:$0xff]
        %s2994 = scalar_lea.vmem [#allocation2], 33
        %v2995 = vld [vmem:[%s2994] ss:$4 sm:$0xff]
        %s2996 = scalar_lea.vmem [#allocation2], 65
        %v2997 = vld [vmem:[%s2996] ss:$4 sm:$0xff]
        %s2998 = scalar_lea.vmem [#allocation2], 97
        %v2999 = vld [vmem:[%s2998] ss:$4 sm:$0xff]
        %v3000 = vmax.f32 %v2985, %v2993
        %v3001 = vmax.f32 %v2987, %v2995
        %v3002 = vmax.f32 %v2989, %v2997
        %v3003 = vmax.f32 %v2991, %v2999
        %s3004 = scalar_lea.vmem [#allocation2], 2
        %v3005 = vld [vmem:[%s3004] ss:$4 sm:$0xff]
        %s3006 = scalar_lea.vmem [#allocation2], 34
        %v3007 = vld [vmem:[%s3006] ss:$4 sm:$0xff]
        %s3008 = scalar_lea.vmem [#allocation2], 66
        %v3009 = vld [vmem:[%s3008] ss:$4 sm:$0xff]
        %s3010 = scalar_lea.vmem [#allocation2], 98
        %v3011 = vld [vmem:[%s3010] ss:$4 sm:$0xff]
        %v3012 = vmax.f32 %v3000, %v3005
        %v3013 = vmax.f32 %v3001, %v3007
        %v3014 = vmax.f32 %v3002, %v3009
        %v3015 = vmax.f32 %v3003, %v3011
        %s3016 = scalar_lea.vmem [#allocation2], 3
        %v3017 = vld [vmem:[%s3016] ss:$4 sm:$0xff]
        %s3018 = scalar_lea.vmem [#allocation2], 35
        %v3019 = vld [vmem:[%s3018] ss:$4 sm:$0xff]
        %s3020 = scalar_lea.vmem [#allocation2], 67
        %v3021 = vld [vmem:[%s3020] ss:$4 sm:$0xff]
        %s3022 = scalar_lea.vmem [#allocation2], 99
        %v3023 = vld [vmem:[%s3022] ss:$4 sm:$0xff]
        %v3024 = vmax.f32 %v3012, %v3017
        %v3025 = vmax.f32 %v3013, %v3019
        %v3026 = vmax.f32 %v3014, %v3021
        %v3027 = vmax.f32 %v3015, %v3023
        %v3028 = vpack.c.bf16 %v3024, %v3024
        %v3029 = vpack.c.bf16 %v3025, %v3025
        %v3030 = vpack.c.bf16 %v3026, %v3026
        %v3031 = vpack.c.bf16 %v3027, %v3027
        %v3032 = vld [vmem:[%s6] sm:$0xf]
        %v3033 = vld [vmem:[%s6 + $0x4] sm:$0xf]
        %v3034 = vld [vmem:[%s6 + $0x8] sm:$0xf]
        %v3035 = vld [vmem:[%s6 + $0xc] sm:$0xf]
        %v3036 = vld [vmem:[%s6 + $0x10] sm:$0xf]
        %v3037 = vld [vmem:[%s6 + $0x14] sm:$0xf]
        %v3038 = vld [vmem:[%s6 + $0x18] sm:$0xf]
        %v3039 = vld [vmem:[%s6 + $0x1c] sm:$0xf]
        %s3040 = scalar_lea.vmem %s6, 32
        %v3041 = vld [vmem:[%s3040] sm:$0xf]
        %v3042 = vld [vmem:[%s3040 + $0x4] sm:$0xf]
        %v3043 = vld [vmem:[%s3040 + $0x8] sm:$0xf]
        %v3044 = vld [vmem:[%s3040 + $0xc] sm:$0xf]
        %v3045 = vld [vmem:[%s3040 + $0x10] sm:$0xf]
        %v3046 = vld [vmem:[%s3040 + $0x14] sm:$0xf]
        %v3047 = vld [vmem:[%s3040 + $0x18] sm:$0xf]
        %v3048 = vld [vmem:[%s3040 + $0x1c] sm:$0xf]
        %v3053 = vunpack.c.l.b16 %v3028
        %v3054 = vunpack.c.l.b16 %v3029
        %v3055 = vunpack.c.l.b16 %v3030
        %v3056 = vunpack.c.l.b16 %v3031
        %v3057 = vpack.c.b16 %v3054, %v3053
        %v3058 = vpack.c.b16 %v3056, %v3055
        %v3060 = vshrl.u32 %v3057, 16
        %v3062 = vshll.u32 %v3057, 16
        %v3064 = vrot.slane %v3062, 1
        %v3065 = vor.u32 %v3060, %v3064
        %v3067 = vshll.u32 %v3058, 16
        %v3069 = vrot.slane %v3067, 1
        %v3070 = vsel %vm1699, %v3065, %v3069
        %v3071 = vshrl.u32 %v3058, 16
        %v3073 = vor.u32 %v3071, %v3069
        %v3082 = vunpack.c.l.b16 %v3041
        %v3083 = vunpack.c.l.b16 %v3042
        %v3084 = vunpack.c.l.b16 %v3043
        %v3085 = vunpack.c.l.b16 %v3044
        %v3086 = vunpack.c.l.b16 %v3045
        %v3087 = vunpack.c.l.b16 %v3046
        %v3088 = vunpack.c.l.b16 %v3047
        %v3089 = vunpack.c.l.b16 %v3048
        %v3090 = vpack.c.b16 %v3083, %v3082
        %v3091 = vpack.c.b16 %v3085, %v3084
        %v3092 = vpack.c.b16 %v3087, %v3086
        %v3093 = vpack.c.b16 %v3089, %v3088
        %v3099 = vsel %vm2965, %v3070, 0
        %v3102 = vsel %vm2965, %v3073, 0
        %3104 = vmatpush.bf16.msra.mxu0 0
        %3105 = vmatpush.bf16.msra.mxu0 0
        %3106 = vmatpush.bf16.msra.mxu0 0
        %3107 = vmatpush.bf16.msra.mxu0 0
        %3108 = vmatpush.bf16.msra.mxu0 %v3093
        %3109 = vmatpush.bf16.msra.mxu0 %v3092
        %3110 = vmatpush.bf16.msra.mxu0 %v3091
        %3111 = vmatpush.bf16.msra.mxu0 %v3090
        %3112 = vmatmul.bf16.gmra.mxu0 %v3099
        %v3113 = vpop.f32.mrf.mxu0
        %v3114 = vadd.f32 0.0, %v3113
        %v3115 = vpop.f32.mrf.mxu0
        %v3116 = vadd.f32 0.0, %v3115
        %3117 = vmatmul.bf16.gmra.mxu0 %v3102
        %v3118 = vpop.f32.mrf.mxu0
        %v3119 = vadd.f32 0.0, %v3118
        %v3120 = vpop.f32.mrf.mxu0
        %v3121 = vadd.f32 0.0, %v3120
        %3122 = vdwg.mxu0
        %v3131 = vunpack.c.l.b16 %v3032
        %v3132 = vunpack.c.l.b16 %v3033
        %v3133 = vunpack.c.l.b16 %v3034
        %v3134 = vunpack.c.l.b16 %v3035
        %v3135 = vunpack.c.l.b16 %v3036
        %v3136 = vunpack.c.l.b16 %v3037
        %v3137 = vunpack.c.l.b16 %v3038
        %v3138 = vunpack.c.l.b16 %v3039
        %v3139 = vpack.c.b16 %v3132, %v3131
        %v3140 = vpack.c.b16 %v3134, %v3133
        %v3141 = vpack.c.b16 %v3136, %v3135
        %v3142 = vpack.c.b16 %v3138, %v3137
        %v3147 = vsel %vm2965, %v3057, 0
        %v3149 = vsel %vm2965, %v3058, 0
        %3151 = vmatpush.bf16.msra.mxu0 0
        %3152 = vmatpush.bf16.msra.mxu0 0
        %3153 = vmatpush.bf16.msra.mxu0 0
        %3154 = vmatpush.bf16.msra.mxu0 0
        %3155 = vmatpush.bf16.msra.mxu0 %v3142
        %3156 = vmatpush.bf16.msra.mxu0 %v3141
        %3157 = vmatpush.bf16.msra.mxu0 %v3140
        %3158 = vmatpush.bf16.msra.mxu0 %v3139
        %3159 = vmatmul.bf16.gmra.mxu0 %v3147
        %v3160 = vpop.f32.mrf.mxu0
        %v3161 = vadd.f32 %v3114, %v3160
        %v3162 = vpop.f32.mrf.mxu0
        %v3163 = vadd.f32 %v3116, %v3162
        %3164 = vmatmul.bf16.gmra.mxu0 %v3149
        %v3165 = vpop.f32.mrf.mxu0
        %v3166 = vadd.f32 %v3119, %v3165
        %v3167 = vpop.f32.mrf.mxu0
        %v3168 = vadd.f32 %v3121, %v3167
        %3169 = vdwg.mxu0
        %s3170 = scalar_lea.vmem %s6, 64
        %v3171 = vld [vmem:[%s3170] sm:$0xf]
        %v3172 = vld [vmem:[%s3170 + $0x4] sm:$0xf]
        %v3173 = vld [vmem:[%s3170 + $0x8] sm:$0xf]
        %v3174 = vld [vmem:[%s3170 + $0xc] sm:$0xf]
        %v3175 = vld [vmem:[%s3170 + $0x10] sm:$0xf]
        %v3176 = vld [vmem:[%s3170 + $0x14] sm:$0xf]
        %v3177 = vld [vmem:[%s3170 + $0x18] sm:$0xf]
        %v3178 = vld [vmem:[%s3170 + $0x1c] sm:$0xf]
        %v3179 = vrot.slane %v3057, 1
        %v3180 = vrot.slane %v3058, 1
        %v3181 = vsel %vm1990, %v3179, %v3180
        %v3190 = vunpack.c.l.b16 %v3171
        %v3191 = vunpack.c.l.b16 %v3172
        %v3192 = vunpack.c.l.b16 %v3173
        %v3193 = vunpack.c.l.b16 %v3174
        %v3194 = vunpack.c.l.b16 %v3175
        %v3195 = vunpack.c.l.b16 %v3176
        %v3196 = vunpack.c.l.b16 %v3177
        %v3197 = vunpack.c.l.b16 %v3178
        %v3198 = vpack.c.b16 %v3191, %v3190
        %v3199 = vpack.c.b16 %v3193, %v3192
        %v3200 = vpack.c.b16 %v3195, %v3194
        %v3201 = vpack.c.b16 %v3197, %v3196
        %v3207 = vsel %vm2965, %v3181, 0
        %v3210 = vsel %vm2965, %v3180, 0
        %3212 = vmatpush.bf16.msra.mxu0 0
        %3213 = vmatpush.bf16.msra.mxu0 0
        %3214 = vmatpush.bf16.msra.mxu0 0
        %3215 = vmatpush.bf16.msra.mxu0 0
        %3216 = vmatpush.bf16.msra.mxu0 %v3201
        %3217 = vmatpush.bf16.msra.mxu0 %v3200
        %3218 = vmatpush.bf16.msra.mxu0 %v3199
        %3219 = vmatpush.bf16.msra.mxu0 %v3198
        %3220 = vmatmul.bf16.gmra.mxu0 %v3207
        %v3221 = vpop.f32.mrf.mxu0
        %v3222 = vadd.f32 0.0, %v3221
        %v3223 = vpop.f32.mrf.mxu0
        %v3224 = vadd.f32 0.0, %v3223
        %3225 = vmatmul.bf16.gmra.mxu0 %v3210
        %v3226 = vpop.f32.mrf.mxu0
        %v3227 = vadd.f32 0.0, %v3226
        %v3228 = vpop.f32.mrf.mxu0
        %v3229 = vadd.f32 0.0, %v3228
        %3230 = vdwg.mxu0
        %v3231 = vadd.f32 %v3161, %v3222
        %v3232 = vadd.f32 %v3163, %v3224
        %v3233 = vadd.f32 %v3166, %v3227
        %v3234 = vadd.f32 %v3168, %v3229
        %s3235 = scalar_lea.vmem %s6, 96
        %v3236 = vld [vmem:[%s3235] sm:$0xf]
        %v3237 = vld [vmem:[%s3235 + $0x4] sm:$0xf]
        %v3238 = vld [vmem:[%s3235 + $0x8] sm:$0xf]
        %v3239 = vld [vmem:[%s3235 + $0xc] sm:$0xf]
        %v3240 = vld [vmem:[%s3235 + $0x10] sm:$0xf]
        %v3241 = vld [vmem:[%s3235 + $0x14] sm:$0xf]
        %v3242 = vld [vmem:[%s3235 + $0x18] sm:$0xf]
        %v3243 = vld [vmem:[%s3235 + $0x1c] sm:$0xf]
        %v3244 = vrot.slane %v3060, 1
        %v3245 = vrot.slane %v3062, 2
        %v3246 = vor.u32 %v3244, %v3245
        %v3247 = vrot.slane %v3071, 1
        %v3248 = vrot.slane %v3067, 2
        %v3249 = vor.u32 %v3247, %v3248
        %v3250 = vsel %vm2144, %v3246, %v3249
        %v3259 = vunpack.c.l.b16 %v3236
        %v3260 = vunpack.c.l.b16 %v3237
        %v3261 = vunpack.c.l.b16 %v3238
        %v3262 = vunpack.c.l.b16 %v3239
        %v3263 = vunpack.c.l.b16 %v3240
        %v3264 = vunpack.c.l.b16 %v3241
        %v3265 = vunpack.c.l.b16 %v3242
        %v3266 = vunpack.c.l.b16 %v3243
        %v3267 = vpack.c.b16 %v3260, %v3259
        %v3268 = vpack.c.b16 %v3262, %v3261
        %v3269 = vpack.c.b16 %v3264, %v3263
        %v3270 = vpack.c.b16 %v3266, %v3265
        %v3276 = vsel %vm2965, %v3250, 0
        %v3279 = vsel %vm2965, %v3249, 0
        %3281 = vmatpush.bf16.msra.mxu0 0
        %3282 = vmatpush.bf16.msra.mxu0 0
        %3283 = vmatpush.bf16.msra.mxu0 0
        %3284 = vmatpush.bf16.msra.mxu0 0
        %3285 = vmatpush.bf16.msra.mxu0 %v3270
        %3286 = vmatpush.bf16.msra.mxu0 %v3269
        %3287 = vmatpush.bf16.msra.mxu0 %v3268
        %3288 = vmatpush.bf16.msra.mxu0 %v3267
        %3289 = vmatmul.bf16.gmra.mxu0 %v3276
        %v3290 = vpop.f32.mrf.mxu0
        %v3291 = vadd.f32 0.0, %v3290
        %v3292 = vpop.f32.mrf.mxu0
        %v3293 = vadd.f32 0.0, %v3292
        %3294 = vmatmul.bf16.gmra.mxu0 %v3279
        %v3295 = vpop.f32.mrf.mxu0
        %v3296 = vadd.f32 0.0, %v3295
        %v3297 = vpop.f32.mrf.mxu0
        %v3298 = vadd.f32 0.0, %v3297
        %3299 = vdwg.mxu0
        %v3300 = vadd.f32 %v3231, %v3291
        %v3301 = vadd.f32 %v3232, %v3293
        %v3302 = vadd.f32 %v3233, %v3296
        %v3303 = vadd.f32 %v3234, %v3298
        %s3304 = scalar_lea.vmem %s6, 128
        %v3305 = vld [vmem:[%s3304] sm:$0xf]
        %v3306 = vld [vmem:[%s3304 + $0x4] sm:$0xf]
        %v3307 = vld [vmem:[%s3304 + $0x8] sm:$0xf]
        %v3308 = vld [vmem:[%s3304 + $0xc] sm:$0xf]
        %v3309 = vld [vmem:[%s3304 + $0x10] sm:$0xf]
        %v3310 = vld [vmem:[%s3304 + $0x14] sm:$0xf]
        %v3311 = vld [vmem:[%s3304 + $0x18] sm:$0xf]
        %v3312 = vld [vmem:[%s3304 + $0x1c] sm:$0xf]
        %v3313 = vrot.slane %v3057, 2
        %v3314 = vrot.slane %v3058, 2
        %v3315 = vsel %vm2314, %v3313, %v3314
        %v3324 = vunpack.c.l.b16 %v3305
        %v3325 = vunpack.c.l.b16 %v3306
        %v3326 = vunpack.c.l.b16 %v3307
        %v3327 = vunpack.c.l.b16 %v3308
        %v3328 = vunpack.c.l.b16 %v3309
        %v3329 = vunpack.c.l.b16 %v3310
        %v3330 = vunpack.c.l.b16 %v3311
        %v3331 = vunpack.c.l.b16 %v3312
        %v3332 = vpack.c.b16 %v3325, %v3324
        %v3333 = vpack.c.b16 %v3327, %v3326
        %v3334 = vpack.c.b16 %v3329, %v3328
        %v3335 = vpack.c.b16 %v3331, %v3330
        %v3341 = vsel %vm2965, %v3315, 0
        %v3344 = vsel %vm2965, %v3314, 0
        %3346 = vmatpush.bf16.msra.mxu0 0
        %3347 = vmatpush.bf16.msra.mxu0 0
        %3348 = vmatpush.bf16.msra.mxu0 0
        %3349 = vmatpush.bf16.msra.mxu0 0
        %3350 = vmatpush.bf16.msra.mxu0 %v3335
        %3351 = vmatpush.bf16.msra.mxu0 %v3334
        %3352 = vmatpush.bf16.msra.mxu0 %v3333
        %3353 = vmatpush.bf16.msra.mxu0 %v3332
        %3354 = vmatmul.bf16.gmra.mxu0 %v3341
        %v3355 = vpop.f32.mrf.mxu0
        %v3356 = vadd.f32 0.0, %v3355
        %v3357 = vpop.f32.mrf.mxu0
        %v3358 = vadd.f32 0.0, %v3357
        %3359 = vmatmul.bf16.gmra.mxu0 %v3344
        %v3360 = vpop.f32.mrf.mxu0
        %v3361 = vadd.f32 0.0, %v3360
        %v3362 = vpop.f32.mrf.mxu0
        %v3363 = vadd.f32 0.0, %v3362
        %3364 = vdwg.mxu0
        %v3365 = vadd.f32 %v3300, %v3356
        %v3366 = vadd.f32 %v3301, %v3358
        %v3367 = vadd.f32 %v3302, %v3361
        %v3368 = vadd.f32 %v3303, %v3363
        %s3369 = scalar_lea.vmem %s6, 160
        %v3370 = vld [vmem:[%s3369] sm:$0xf]
        %v3371 = vld [vmem:[%s3369 + $0x4] sm:$0xf]
        %v3372 = vld [vmem:[%s3369 + $0x8] sm:$0xf]
        %v3373 = vld [vmem:[%s3369 + $0xc] sm:$0xf]
        %v3374 = vld [vmem:[%s3369 + $0x10] sm:$0xf]
        %v3375 = vld [vmem:[%s3369 + $0x14] sm:$0xf]
        %v3376 = vld [vmem:[%s3369 + $0x18] sm:$0xf]
        %v3377 = vld [vmem:[%s3369 + $0x1c] sm:$0xf]
        %v3378 = vrot.slane %v3060, 2
        %v3379 = vrot.slane %v3062, 3
        %v3380 = vor.u32 %v3378, %v3379
        %v3381 = vrot.slane %v3071, 2
        %v3382 = vrot.slane %v3067, 3
        %v3383 = vor.u32 %v3381, %v3382
        %v3384 = vsel %vm2468, %v3380, %v3383
        %v3393 = vunpack.c.l.b16 %v3370
        %v3394 = vunpack.c.l.b16 %v3371
        %v3395 = vunpack.c.l.b16 %v3372
        %v3396 = vunpack.c.l.b16 %v3373
        %v3397 = vunpack.c.l.b16 %v3374
        %v3398 = vunpack.c.l.b16 %v3375
        %v3399 = vunpack.c.l.b16 %v3376
        %v3400 = vunpack.c.l.b16 %v3377
        %v3401 = vpack.c.b16 %v3394, %v3393
        %v3402 = vpack.c.b16 %v3396, %v3395
        %v3403 = vpack.c.b16 %v3398, %v3397
        %v3404 = vpack.c.b16 %v3400, %v3399
        %v3410 = vsel %vm2965, %v3384, 0
        %v3413 = vsel %vm2965, %v3383, 0
        %3415 = vmatpush.bf16.msra.mxu0 0
        %3416 = vmatpush.bf16.msra.mxu0 0
        %3417 = vmatpush.bf16.msra.mxu0 0
        %3418 = vmatpush.bf16.msra.mxu0 0
        %3419 = vmatpush.bf16.msra.mxu0 %v3404
        %3420 = vmatpush.bf16.msra.mxu0 %v3403
        %3421 = vmatpush.bf16.msra.mxu0 %v3402
        %3422 = vmatpush.bf16.msra.mxu0 %v3401
        %3423 = vmatmul.bf16.gmra.mxu0 %v3410
        %v3424 = vpop.f32.mrf.mxu0
        %v3425 = vadd.f32 0.0, %v3424
        %v3426 = vpop.f32.mrf.mxu0
        %v3427 = vadd.f32 0.0, %v3426
        %3428 = vmatmul.bf16.gmra.mxu0 %v3413
        %v3429 = vpop.f32.mrf.mxu0
        %v3430 = vadd.f32 0.0, %v3429
        %v3431 = vpop.f32.mrf.mxu0
        %v3432 = vadd.f32 0.0, %v3431
        %3433 = vdwg.mxu0
        %v3434 = vadd.f32 %v3365, %v3425
        %v3435 = vadd.f32 %v3366, %v3427
        %v3436 = vadd.f32 %v3367, %v3430
        %v3437 = vadd.f32 %v3368, %v3432
        %s3438 = scalar_lea.vmem %s6, 192
        %v3439 = vld [vmem:[%s3438] sm:$0xf]
        %v3440 = vld [vmem:[%s3438 + $0x4] sm:$0xf]
        %v3441 = vld [vmem:[%s3438 + $0x8] sm:$0xf]
        %v3442 = vld [vmem:[%s3438 + $0xc] sm:$0xf]
        %v3443 = vld [vmem:[%s3438 + $0x10] sm:$0xf]
        %v3444 = vld [vmem:[%s3438 + $0x14] sm:$0xf]
        %v3445 = vld [vmem:[%s3438 + $0x18] sm:$0xf]
        %v3446 = vld [vmem:[%s3438 + $0x1c] sm:$0xf]
        %v3447 = vrot.slane %v3057, 3
        %v3448 = vrot.slane %v3058, 3
        %v3449 = vsel %vm2638, %v3447, %v3448
        %v3458 = vunpack.c.l.b16 %v3439
        %v3459 = vunpack.c.l.b16 %v3440
        %v3460 = vunpack.c.l.b16 %v3441
        %v3461 = vunpack.c.l.b16 %v3442
        %v3462 = vunpack.c.l.b16 %v3443
        %v3463 = vunpack.c.l.b16 %v3444
        %v3464 = vunpack.c.l.b16 %v3445
        %v3465 = vunpack.c.l.b16 %v3446
        %v3466 = vpack.c.b16 %v3459, %v3458
        %v3467 = vpack.c.b16 %v3461, %v3460
        %v3468 = vpack.c.b16 %v3463, %v3462
        %v3469 = vpack.c.b16 %v3465, %v3464
        %v3475 = vsel %vm2965, %v3449, 0
        %v3478 = vsel %vm2965, %v3448, 0
        %3480 = vmatpush.bf16.msra.mxu0 0
        %3481 = vmatpush.bf16.msra.mxu0 0
        %3482 = vmatpush.bf16.msra.mxu0 0
        %3483 = vmatpush.bf16.msra.mxu0 0
        %3484 = vmatpush.bf16.msra.mxu0 %v3469
        %3485 = vmatpush.bf16.msra.mxu0 %v3468
        %3486 = vmatpush.bf16.msra.mxu0 %v3467
        %3487 = vmatpush.bf16.msra.mxu0 %v3466
        %3488 = vmatmul.bf16.gmra.mxu0 %v3475
        %v3489 = vpop.f32.mrf.mxu0
        %v3490 = vadd.f32 0.0, %v3489
        %v3491 = vpop.f32.mrf.mxu0
        %v3492 = vadd.f32 0.0, %v3491
        %3493 = vmatmul.bf16.gmra.mxu0 %v3478
        %v3494 = vpop.f32.mrf.mxu0
        %v3495 = vadd.f32 0.0, %v3494
        %v3496 = vpop.f32.mrf.mxu0
        %v3497 = vadd.f32 0.0, %v3496
        %3498 = vdwg.mxu0
        %v3499 = vadd.f32 %v3434, %v3490
        %v3500 = vadd.f32 %v3435, %v3492
        %v3501 = vadd.f32 %v3436, %v3495
        %v3502 = vadd.f32 %v3437, %v3497
        %s3503 = scalar_lea.vmem %s6, 224
        %v3504 = vld [vmem:[%s3503] sm:$0xf]
        %v3505 = vld [vmem:[%s3503 + $0x4] sm:$0xf]
        %v3506 = vld [vmem:[%s3503 + $0x8] sm:$0xf]
        %v3507 = vld [vmem:[%s3503 + $0xc] sm:$0xf]
        %v3508 = vld [vmem:[%s3503 + $0x10] sm:$0xf]
        %v3509 = vld [vmem:[%s3503 + $0x14] sm:$0xf]
        %v3510 = vld [vmem:[%s3503 + $0x18] sm:$0xf]
        %v3511 = vld [vmem:[%s3503 + $0x1c] sm:$0xf]
        %v3512 = vrot.slane %v3060, 3
        %v3513 = vrot.slane %v3062, 4
        %v3514 = vor.u32 %v3512, %v3513
        %v3515 = vrot.slane %v3071, 3
        %v3516 = vrot.slane %v3067, 4
        %v3517 = vor.u32 %v3515, %v3516
        %v3518 = vsel %vm2792, %v3514, %v3517
        %v3527 = vunpack.c.l.b16 %v3504
        %v3528 = vunpack.c.l.b16 %v3505
        %v3529 = vunpack.c.l.b16 %v3506
        %v3530 = vunpack.c.l.b16 %v3507
        %v3531 = vunpack.c.l.b16 %v3508
        %v3532 = vunpack.c.l.b16 %v3509
        %v3533 = vunpack.c.l.b16 %v3510
        %v3534 = vunpack.c.l.b16 %v3511
        %v3535 = vpack.c.b16 %v3528, %v3527
        %v3536 = vpack.c.b16 %v3530, %v3529
        %v3537 = vpack.c.b16 %v3532, %v3531
        %v3538 = vpack.c.b16 %v3534, %v3533
        %v3544 = vsel %vm2965, %v3518, 0
        %v3547 = vsel %vm2965, %v3517, 0
        %3549 = vmatpush.bf16.msra.mxu0 0
        %3550 = vmatpush.bf16.msra.mxu0 0
        %3551 = vmatpush.bf16.msra.mxu0 0
        %3552 = vmatpush.bf16.msra.mxu0 0
        %3553 = vmatpush.bf16.msra.mxu0 %v3538
        %3554 = vmatpush.bf16.msra.mxu0 %v3537
        %3555 = vmatpush.bf16.msra.mxu0 %v3536
        %3556 = vmatpush.bf16.msra.mxu0 %v3535
        %3557 = vmatmul.bf16.gmra.mxu0 %v3544
        %v3558 = vpop.f32.mrf.mxu0
        %v3559 = vadd.f32 0.0, %v3558
        %v3560 = vpop.f32.mrf.mxu0
        %v3561 = vadd.f32 0.0, %v3560
        %3562 = vmatmul.bf16.gmra.mxu0 %v3547
        %v3563 = vpop.f32.mrf.mxu0
        %v3564 = vadd.f32 0.0, %v3563
        %v3565 = vpop.f32.mrf.mxu0
        %v3566 = vadd.f32 0.0, %v3565
        %3567 = vdwg.mxu0
        %v3568 = vadd.f32 %v3499, %v3559
        %v3569 = vadd.f32 %v3500, %v3561
        %v3570 = vadd.f32 %v3501, %v3564
        %v3571 = vadd.f32 %v3502, %v3566
        %v3572 = vld [vmem:[%s7] sm:$0x1]
        %v3574 = vperm.slane %v3572, 0
        %v3576 = vadd.f32 %v3568, %v3574
        %v3577 = vadd.f32 %v3569, %v3574
        %v3578 = vadd.f32 %v3570, %v3574
        %v3579 = vadd.f32 %v3571, %v3574
        %vm3580 = vcmask 261120
        %3581 = vst.msk [vmem:[#allocation3] sm:$0xff] %vm3580, %v3576
        %3582 = vst.msk [vmem:[#allocation3 + $0x8] sm:$0xff] %vm3580, %v3577
        %3583 = vst.msk [vmem:[#allocation3 + $0x10] sm:$0xff] %vm3580, %v3578
        %vm3584 = vcmask 253952
        %3585 = vst.msk [vmem:[#allocation3 + $0x18] sm:$0x1] %vm3584, %v3579
        %vm3586 = vcmask 260096
        %3587 = vst.msk [vmem:[#allocation3 + $0x19] sm:$0x7f] %vm3586, 0.0
        %v3588 = vld [vmem:[%s8] sm:$0xf]
        %v3589 = vld [vmem:[%s8 + $0x4] sm:$0xf]
        %v3590 = vld [vmem:[%s8 + $0x8] sm:$0xf]
        %v3591 = vld [vmem:[%s8 + $0xc] sm:$0xf]
        %v3592 = vld [vmem:[%s8 + $0x10] sm:$0xf]
        %v3593 = vld [vmem:[%s8 + $0x14] sm:$0xf]
        %v3594 = vld [vmem:[%s8 + $0x18] sm:$0xf]
        %v3595 = vld [vmem:[%s8 + $0x1c] sm:$0xf]
        %v3596 = vld [vmem:[%s8 + $0x20] sm:$0xf]
        %v3597 = vld [vmem:[%s8 + $0x24] sm:$0xf]
        %v3598 = vld [vmem:[%s8 + $0x28] sm:$0xf]
        %v3599 = vld [vmem:[%s8 + $0x2c] sm:$0xf]
        %v3600 = vld [vmem:[%s8 + $0x30] sm:$0xf]
        %v3601 = vld [vmem:[%s8 + $0x34] sm:$0xf]
        %v3602 = vld [vmem:[%s8 + $0x38] sm:$0xf]
        %v3603 = vld [vmem:[%s8 + $0x3c] sm:$0xf]
        %v3604 = vld [vmem:[%s8 + $0x40] sm:$0xf]
        %v3605 = vld [vmem:[%s8 + $0x44] sm:$0xf]
        %v3606 = vld [vmem:[%s8 + $0x48] sm:$0xf]
        %v3607 = vld [vmem:[%s8 + $0x4c] sm:$0xf]
        %v3608 = vld [vmem:[%s8 + $0x50] sm:$0xf]
        %v3609 = vld [vmem:[%s8 + $0x54] sm:$0xf]
        %v3610 = vld [vmem:[%s8 + $0x58] sm:$0xf]
        %v3611 = vld [vmem:[%s8 + $0x5c] sm:$0xf]
        %v3612 = vld [vmem:[%s8 + $0x60] sm:$0xf]
        %v3613 = vld [vmem:[%s8 + $0x64] sm:$0xf]
        %v3614 = vld [vmem:[%s8 + $0x68] sm:$0xf]
        %v3615 = vld [vmem:[%s8 + $0x6c] sm:$0xf]
        %v3616 = vld [vmem:[%s8 + $0x70] sm:$0xf]
        %v3617 = vld [vmem:[%s8 + $0x74] sm:$0xf]
        %v3618 = vld [vmem:[%s8 + $0x78] sm:$0xf]
        %v3619 = vld [vmem:[%s8 + $0x7c] sm:$0xf]
        %v3620 = vld [vmem:[%s8 + $0x80] sm:$0xf]
        %v3621 = vld [vmem:[%s8 + $0x84] sm:$0xf]
        %v3622 = vld [vmem:[%s8 + $0x88] sm:$0xf]
        %v3623 = vld [vmem:[%s8 + $0x8c] sm:$0xf]
        %v3624 = vld [vmem:[%s8 + $0x90] sm:$0xf]
        %v3625 = vld [vmem:[%s8 + $0x94] sm:$0xf]
        %v3626 = vld [vmem:[%s8 + $0x98] sm:$0xf]
        %v3627 = vld [vmem:[%s8 + $0x9c] sm:$0xf]
        %v3628 = vld [vmem:[%s8 + $0xa0] sm:$0xf]
        %v3629 = vld [vmem:[%s8 + $0xa4] sm:$0xf]
        %v3630 = vld [vmem:[%s8 + $0xa8] sm:$0xf]
        %v3631 = vld [vmem:[%s8 + $0xac] sm:$0xf]
        %v3632 = vld [vmem:[%s8 + $0xb0] sm:$0xf]
        %v3633 = vld [vmem:[%s8 + $0xb4] sm:$0xf]
        %v3634 = vld [vmem:[%s8 + $0xb8] sm:$0xf]
        %v3635 = vld [vmem:[%s8 + $0xbc] sm:$0xf]
        %v3636 = vld [vmem:[%s8 + $0xc0] sm:$0xf]
        %v3637 = vld [vmem:[%s8 + $0xc4] sm:$0xf]
        %v3638 = vld [vmem:[%s592] sm:$0xff]
        %v3639 = vld [vmem:[%s592 + $0x8] sm:$0xff]
        %v3640 = vld [vmem:[%s592 + $0x10] sm:$0xff]
        %v3641 = vld [vmem:[%s592 + $0x18] sm:$0xff]
        %v3642 = vld [vmem:[%s592 + $0x20] sm:$0xff]
        %v3643 = vld [vmem:[%s592 + $0x28] sm:$0xff]
        %v3644 = vld [vmem:[%s592 + $0x30] sm:$0xff]
        %v3645 = vld [vmem:[%s592 + $0x38] sm:$0xff]
        %v3654 = vunpack.c.l.b16 %v3638
        %v3655 = vunpack.c.h.b16 %v3638
        %v3656 = vunpack.c.l.b16 %v3639
        %v3657 = vunpack.c.h.b16 %v3639
        %v3658 = vunpack.c.l.b16 %v3640
        %v3659 = vunpack.c.h.b16 %v3640
        %v3660 = vunpack.c.l.b16 %v3641
        %v3661 = vunpack.c.h.b16 %v3641
        %v3662 = vunpack.c.l.b16 %v3642
        %v3663 = vunpack.c.h.b16 %v3642
        %v3664 = vunpack.c.l.b16 %v3643
        %v3665 = vunpack.c.h.b16 %v3643
        %v3666 = vunpack.c.l.b16 %v3644
        %v3667 = vunpack.c.h.b16 %v3644
        %v3668 = vunpack.c.l.b16 %v3645
        %v3669 = vunpack.c.h.b16 %v3645
        %v3670 = vpack.c.b16 %v3658, %v3654
        %v3671 = vpack.c.b16 %v3659, %v3655
        %v3672 = vpack.c.b16 %v3660, %v3656
        %v3673 = vpack.c.b16 %v3661, %v3657
        %v3674 = vpack.c.b16 %v3666, %v3662
        %v3675 = vpack.c.b16 %v3667, %v3663
        %v3676 = vpack.c.b16 %v3668, %v3664
        %v3677 = vpack.c.b16 %v3669, %v3665
        %v3734 = vunpack.c.l.b16 %v3588
        %v3735 = vunpack.c.l.b16 %v3589
        %v3736 = vunpack.c.l.b16 %v3590
        %v3737 = vunpack.c.l.b16 %v3591
        %v3738 = vunpack.c.l.b16 %v3592
        %v3739 = vunpack.c.l.b16 %v3593
        %v3740 = vunpack.c.l.b16 %v3594
        %v3741 = vunpack.c.l.b16 %v3595
        %v3742 = vunpack.c.l.b16 %v3596
        %v3743 = vunpack.c.l.b16 %v3597
        %v3744 = vunpack.c.l.b16 %v3598
        %v3745 = vunpack.c.l.b16 %v3599
        %v3746 = vunpack.c.l.b16 %v3600
        %v3747 = vunpack.c.l.b16 %v3601
        %v3748 = vunpack.c.l.b16 %v3602
        %v3749 = vunpack.c.l.b16 %v3603
        %v3750 = vunpack.c.l.b16 %v3604
        %v3751 = vunpack.c.l.b16 %v3605
        %v3752 = vunpack.c.l.b16 %v3606
        %v3753 = vunpack.c.l.b16 %v3607
        %v3754 = vunpack.c.l.b16 %v3608
        %v3755 = vunpack.c.l.b16 %v3609
        %v3756 = vunpack.c.l.b16 %v3610
        %v3757 = vunpack.c.l.b16 %v3611
        %v3758 = vunpack.c.l.b16 %v3612
        %v3759 = vunpack.c.l.b16 %v3613
        %v3760 = vunpack.c.l.b16 %v3614
        %v3761 = vunpack.c.l.b16 %v3615
        %v3762 = vunpack.c.l.b16 %v3616
        %v3763 = vunpack.c.l.b16 %v3617
        %v3764 = vunpack.c.l.b16 %v3618
        %v3765 = vunpack.c.l.b16 %v3619
        %v3766 = vunpack.c.l.b16 %v3620
        %v3767 = vunpack.c.l.b16 %v3621
        %v3768 = vunpack.c.l.b16 %v3622
        %v3769 = vunpack.c.l.b16 %v3623
        %v3770 = vunpack.c.l.b16 %v3624
        %v3771 = vunpack.c.l.b16 %v3625
        %v3772 = vunpack.c.l.b16 %v3626
        %v3773 = vunpack.c.l.b16 %v3627
        %v3774 = vunpack.c.l.b16 %v3628
        %v3775 = vunpack.c.l.b16 %v3629
        %v3776 = vunpack.c.l.b16 %v3630
        %v3777 = vunpack.c.l.b16 %v3631
        %v3778 = vunpack.c.l.b16 %v3632
        %v3779 = vunpack.c.l.b16 %v3633
        %v3780 = vunpack.c.l.b16 %v3634
        %v3781 = vunpack.c.l.b16 %v3635
        %v3782 = vunpack.c.l.b16 %v3636
        %v3783 = vunpack.c.l.b16 %v3637
        %v3784 = vpack.c.b16 %v3735, %v3734
        %v3785 = vpack.c.b16 %v3737, %v3736
        %v3786 = vpack.c.b16 %v3739, %v3738
        %v3787 = vpack.c.b16 %v3741, %v3740
        %v3788 = vpack.c.b16 %v3743, %v3742
        %v3789 = vpack.c.b16 %v3745, %v3744
        %v3790 = vpack.c.b16 %v3747, %v3746
        %v3791 = vpack.c.b16 %v3749, %v3748
        %v3792 = vpack.c.b16 %v3751, %v3750
        %v3793 = vpack.c.b16 %v3753, %v3752
        %v3794 = vpack.c.b16 %v3755, %v3754
        %v3795 = vpack.c.b16 %v3757, %v3756
        %v3796 = vpack.c.b16 %v3759, %v3758
        %v3797 = vpack.c.b16 %v3761, %v3760
        %v3798 = vpack.c.b16 %v3763, %v3762
        %v3799 = vpack.c.b16 %v3765, %v3764
        %v3800 = vpack.c.b16 %v3767, %v3766
        %v3801 = vpack.c.b16 %v3769, %v3768
        %v3802 = vpack.c.b16 %v3771, %v3770
        %v3803 = vpack.c.b16 %v3773, %v3772
        %v3804 = vpack.c.b16 %v3775, %v3774
        %v3805 = vpack.c.b16 %v3777, %v3776
        %v3806 = vpack.c.b16 %v3779, %v3778
        %v3807 = vpack.c.b16 %v3781, %v3780
        %v3808 = vpack.c.b16 %v3783, %v3782
        %vm3834 = vcmask 130048
        %v3836 = vsel %vm3834, %v3673, 0
        %v3839 = vsel %vm3834, %v3677, 0
        %3841 = vmatpush.bf16.msra.mxu0 %v3791
        %3842 = vmatpush.bf16.msra.mxu0 %v3790
        %3843 = vmatpush.bf16.msra.mxu0 %v3789
        %3844 = vmatpush.bf16.msra.mxu0 %v3788
        %3845 = vmatpush.bf16.msra.mxu0 %v3787
        %3846 = vmatpush.bf16.msra.mxu0 %v3786
        %3847 = vmatpush.bf16.msra.mxu0 %v3785
        %3848 = vmatpush.bf16.msra.mxu0 %v3784
        %3849 = vmatmul.bf16.gmra.mxu0 %v3670
        %v3850 = vpop.f32.mrf.mxu0
        %v3851 = vadd.f32 0.0, %v3850
        %v3852 = vpop.f32.mrf.mxu0
        %v3853 = vadd.f32 0.0, %v3852
        %3854 = vmatmul.bf16.gmra.mxu0 %v3674
        %v3855 = vpop.f32.mrf.mxu0
        %v3856 = vadd.f32 0.0, %v3855
        %v3857 = vpop.f32.mrf.mxu0
        %v3858 = vadd.f32 0.0, %v3857
        %3859 = vdwg.mxu0
        %3860 = vmatpush.bf16.msra.mxu0 %v3799
        %3861 = vmatpush.bf16.msra.mxu0 %v3798
        %3862 = vmatpush.bf16.msra.mxu0 %v3797
        %3863 = vmatpush.bf16.msra.mxu0 %v3796
        %3864 = vmatpush.bf16.msra.mxu0 %v3795
        %3865 = vmatpush.bf16.msra.mxu0 %v3794
        %3866 = vmatpush.bf16.msra.mxu0 %v3793
        %3867 = vmatpush.bf16.msra.mxu0 %v3792
        %3868 = vmatmul.bf16.gmra.mxu0 %v3671
        %v3869 = vpop.f32.mrf.mxu0
        %v3870 = vadd.f32 %v3851, %v3869
        %v3871 = vpop.f32.mrf.mxu0
        %v3872 = vadd.f32 %v3853, %v3871
        %3873 = vmatmul.bf16.gmra.mxu0 %v3675
        %v3874 = vpop.f32.mrf.mxu0
        %v3875 = vadd.f32 %v3856, %v3874
        %v3876 = vpop.f32.mrf.mxu0
        %v3877 = vadd.f32 %v3858, %v3876
        %3878 = vdwg.mxu0
        %3879 = vmatpush.bf16.msra.mxu0 %v3807
        %3880 = vmatpush.bf16.msra.mxu0 %v3806
        %3881 = vmatpush.bf16.msra.mxu0 %v3805
        %3882 = vmatpush.bf16.msra.mxu0 %v3804
        %3883 = vmatpush.bf16.msra.mxu0 %v3803
        %3884 = vmatpush.bf16.msra.mxu0 %v3802
        %3885 = vmatpush.bf16.msra.mxu0 %v3801
        %3886 = vmatpush.bf16.msra.mxu0 %v3800
        %3887 = vmatmul.bf16.gmra.mxu0 %v3672
        %v3888 = vpop.f32.mrf.mxu0
        %v3889 = vadd.f32 %v3870, %v3888
        %v3890 = vpop.f32.mrf.mxu0
        %v3891 = vadd.f32 %v3872, %v3890
        %3892 = vmatmul.bf16.gmra.mxu0 %v3676
        %v3893 = vpop.f32.mrf.mxu0
        %v3894 = vadd.f32 %v3875, %v3893
        %v3895 = vpop.f32.mrf.mxu0
        %v3896 = vadd.f32 %v3877, %v3895
        %3897 = vdwg.mxu0
        %3898 = vmatpush.bf16.msra.mxu0 0
        %3899 = vmatpush.bf16.msra.mxu0 0
        %3900 = vmatpush.bf16.msra.mxu0 0
        %3901 = vmatpush.bf16.msra.mxu0 0
        %3902 = vmatpush.bf16.msra.mxu0 0
        %3903 = vmatpush.bf16.msra.mxu0 0
        %3904 = vmatpush.bf16.msra.mxu0 0
        %3905 = vmatpush.bf16.msra.mxu0 %v3808
        %3906 = vmatmul.bf16.gmra.mxu0 %v3836
        %v3907 = vpop.f32.mrf.mxu0
        %v3908 = vadd.f32 %v3889, %v3907
        %v3909 = vpop.f32.mrf.mxu0
        %v3910 = vadd.f32 %v3891, %v3909
        %3911 = vmatmul.bf16.gmra.mxu0 %v3839
        %v3912 = vpop.f32.mrf.mxu0
        %v3913 = vadd.f32 %v3894, %v3912
        %v3914 = vpop.f32.mrf.mxu0
        %v3915 = vadd.f32 %v3896, %v3914
        %3916 = vdwg.mxu0
        %s3917 = scalar_lea.vmem %s592, 64
        %v3918 = vld [vmem:[%s3917] sm:$0xff]
        %v3919 = vld [vmem:[%s3917 + $0x8] sm:$0xff]
        %v3920 = vld [vmem:[%s3917 + $0x10] sm:$0xff]
        %v3921 = vld [vmem:[%s3917 + $0x18] sm:$0xff]
        %v3922 = vld [vmem:[%s3917 + $0x20] sm:$0xff]
        %v3923 = vld [vmem:[%s3917 + $0x28] sm:$0xff]
        %v3924 = vld [vmem:[%s3917 + $0x30] sm:$0xff]
        %v3925 = vld [vmem:[%s3917 + $0x38] sm:$0xff]
        %v3934 = vunpack.c.l.b16 %v3918
        %v3935 = vunpack.c.h.b16 %v3918
        %v3936 = vunpack.c.l.b16 %v3919
        %v3937 = vunpack.c.h.b16 %v3919
        %v3938 = vunpack.c.l.b16 %v3920
        %v3939 = vunpack.c.h.b16 %v3920
        %v3940 = vunpack.c.l.b16 %v3921
        %v3941 = vunpack.c.h.b16 %v3921
        %v3942 = vunpack.c.l.b16 %v3922
        %v3943 = vunpack.c.h.b16 %v3922
        %v3944 = vunpack.c.l.b16 %v3923
        %v3945 = vunpack.c.h.b16 %v3923
        %v3946 = vunpack.c.l.b16 %v3924
        %v3947 = vunpack.c.h.b16 %v3924
        %v3948 = vunpack.c.l.b16 %v3925
        %v3949 = vunpack.c.h.b16 %v3925
        %v3950 = vpack.c.b16 %v3938, %v3934
        %v3951 = vpack.c.b16 %v3939, %v3935
        %v3952 = vpack.c.b16 %v3940, %v3936
        %v3953 = vpack.c.b16 %v3941, %v3937
        %v3954 = vpack.c.b16 %v3946, %v3942
        %v3955 = vpack.c.b16 %v3947, %v3943
        %v3956 = vpack.c.b16 %v3948, %v3944
        %v3957 = vpack.c.b16 %v3949, %v3945
        %v3965 = vsel %vm3834, %v3953, 0
        %v3968 = vsel %vm3834, %v3957, 0
        %3970 = vmatpush.bf16.msra.mxu0 %v3791
        %3971 = vmatpush.bf16.msra.mxu0 %v3790
        %3972 = vmatpush.bf16.msra.mxu0 %v3789
        %3973 = vmatpush.bf16.msra.mxu0 %v3788
        %3974 = vmatpush.bf16.msra.mxu0 %v3787
        %3975 = vmatpush.bf16.msra.mxu0 %v3786
        %3976 = vmatpush.bf16.msra.mxu0 %v3785
        %3977 = vmatpush.bf16.msra.mxu0 %v3784
        %3978 = vmatmul.bf16.gmra.mxu0 %v3950
        %v3979 = vpop.f32.mrf.mxu0
        %v3980 = vadd.f32 0.0, %v3979
        %v3981 = vpop.f32.mrf.mxu0
        %v3982 = vadd.f32 0.0, %v3981
        %3983 = vmatmul.bf16.gmra.mxu0 %v3954
        %v3984 = vpop.f32.mrf.mxu0
        %v3985 = vadd.f32 0.0, %v3984
        %v3986 = vpop.f32.mrf.mxu0
        %v3987 = vadd.f32 0.0, %v3986
        %3988 = vdwg.mxu0
        %3989 = vmatpush.bf16.msra.mxu0 %v3799
        %3990 = vmatpush.bf16.msra.mxu0 %v3798
        %3991 = vmatpush.bf16.msra.mxu0 %v3797
        %3992 = vmatpush.bf16.msra.mxu0 %v3796
        %3993 = vmatpush.bf16.msra.mxu0 %v3795
        %3994 = vmatpush.bf16.msra.mxu0 %v3794
        %3995 = vmatpush.bf16.msra.mxu0 %v3793
        %3996 = vmatpush.bf16.msra.mxu0 %v3792
        %3997 = vmatmul.bf16.gmra.mxu0 %v3951
        %v3998 = vpop.f32.mrf.mxu0
        %v3999 = vadd.f32 %v3980, %v3998
        %v4000 = vpop.f32.mrf.mxu0
        %v4001 = vadd.f32 %v3982, %v4000
        %4002 = vmatmul.bf16.gmra.mxu0 %v3955
        %v4003 = vpop.f32.mrf.mxu0
        %v4004 = vadd.f32 %v3985, %v4003
        %v4005 = vpop.f32.mrf.mxu0
        %v4006 = vadd.f32 %v3987, %v4005
        %4007 = vdwg.mxu0
        %4008 = vmatpush.bf16.msra.mxu0 %v3807
        %4009 = vmatpush.bf16.msra.mxu0 %v3806
        %4010 = vmatpush.bf16.msra.mxu0 %v3805
        %4011 = vmatpush.bf16.msra.mxu0 %v3804
        %4012 = vmatpush.bf16.msra.mxu0 %v3803
        %4013 = vmatpush.bf16.msra.mxu0 %v3802
        %4014 = vmatpush.bf16.msra.mxu0 %v3801
        %4015 = vmatpush.bf16.msra.mxu0 %v3800
        %4016 = vmatmul.bf16.gmra.mxu0 %v3952
        %v4017 = vpop.f32.mrf.mxu0
        %v4018 = vadd.f32 %v3999, %v4017
        %v4019 = vpop.f32.mrf.mxu0
        %v4020 = vadd.f32 %v4001, %v4019
        %4021 = vmatmul.bf16.gmra.mxu0 %v3956
        %v4022 = vpop.f32.mrf.mxu0
        %v4023 = vadd.f32 %v4004, %v4022
        %v4024 = vpop.f32.mrf.mxu0
        %v4025 = vadd.f32 %v4006, %v4024
        %4026 = vdwg.mxu0
        %4027 = vmatpush.bf16.msra.mxu0 0
        %4028 = vmatpush.bf16.msra.mxu0 0
        %4029 = vmatpush.bf16.msra.mxu0 0
        %4030 = vmatpush.bf16.msra.mxu0 0
        %4031 = vmatpush.bf16.msra.mxu0 0
        %4032 = vmatpush.bf16.msra.mxu0 0
        %4033 = vmatpush.bf16.msra.mxu0 0
        %4034 = vmatpush.bf16.msra.mxu0 %v3808
        %4035 = vmatmul.bf16.gmra.mxu0 %v3965
        %v4036 = vpop.f32.mrf.mxu0
        %v4037 = vadd.f32 %v4018, %v4036
        %v4038 = vpop.f32.mrf.mxu0
        %v4039 = vadd.f32 %v4020, %v4038
        %4040 = vmatmul.bf16.gmra.mxu0 %v3968
        %v4041 = vpop.f32.mrf.mxu0
        %v4042 = vadd.f32 %v4023, %v4041
        %v4043 = vpop.f32.mrf.mxu0
        %v4044 = vadd.f32 %v4025, %v4043
        %4045 = vdwg.mxu0
        %v4046 = vmax.f32 %v3908, %v4037
        %v4047 = vmax.f32 %v3910, %v4039
        %v4048 = vmax.f32 %v3913, %v4042
        %v4049 = vmax.f32 %v3915, %v4044
        %s4050 = scalar_lea.vmem %s592, 128
        %v4051 = vld [vmem:[%s4050] sm:$0xff]
        %v4052 = vld [vmem:[%s4050 + $0x8] sm:$0xff]
        %v4053 = vld [vmem:[%s4050 + $0x10] sm:$0xff]
        %v4054 = vld [vmem:[%s4050 + $0x18] sm:$0xff]
        %v4055 = vld [vmem:[%s4050 + $0x20] sm:$0xff]
        %v4056 = vld [vmem:[%s4050 + $0x28] sm:$0xff]
        %v4057 = vld [vmem:[%s4050 + $0x30] sm:$0xff]
        %v4058 = vld [vmem:[%s4050 + $0x38] sm:$0xff]
        %v4067 = vunpack.c.l.b16 %v4051
        %v4068 = vunpack.c.h.b16 %v4051
        %v4069 = vunpack.c.l.b16 %v4052
        %v4070 = vunpack.c.h.b16 %v4052
        %v4071 = vunpack.c.l.b16 %v4053
        %v4072 = vunpack.c.h.b16 %v4053
        %v4073 = vunpack.c.l.b16 %v4054
        %v4074 = vunpack.c.h.b16 %v4054
        %v4075 = vunpack.c.l.b16 %v4055
        %v4076 = vunpack.c.h.b16 %v4055
        %v4077 = vunpack.c.l.b16 %v4056
        %v4078 = vunpack.c.h.b16 %v4056
        %v4079 = vunpack.c.l.b16 %v4057
        %v4080 = vunpack.c.h.b16 %v4057
        %v4081 = vunpack.c.l.b16 %v4058
        %v4082 = vunpack.c.h.b16 %v4058
        %v4083 = vpack.c.b16 %v4071, %v4067
        %v4084 = vpack.c.b16 %v4072, %v4068
        %v4085 = vpack.c.b16 %v4073, %v4069
        %v4086 = vpack.c.b16 %v4074, %v4070
        %v4087 = vpack.c.b16 %v4079, %v4075
        %v4088 = vpack.c.b16 %v4080, %v4076
        %v4089 = vpack.c.b16 %v4081, %v4077
        %v4090 = vpack.c.b16 %v4082, %v4078
        %v4098 = vsel %vm3834, %v4086, 0
        %v4101 = vsel %vm3834, %v4090, 0
        %4103 = vmatpush.bf16.msra.mxu0 %v3791
        %4104 = vmatpush.bf16.msra.mxu0 %v3790
        %4105 = vmatpush.bf16.msra.mxu0 %v3789
        %4106 = vmatpush.bf16.msra.mxu0 %v3788
        %4107 = vmatpush.bf16.msra.mxu0 %v3787
        %4108 = vmatpush.bf16.msra.mxu0 %v3786
        %4109 = vmatpush.bf16.msra.mxu0 %v3785
        %4110 = vmatpush.bf16.msra.mxu0 %v3784
        %4111 = vmatmul.bf16.gmra.mxu0 %v4083
        %v4112 = vpop.f32.mrf.mxu0
        %v4113 = vadd.f32 0.0, %v4112
        %v4114 = vpop.f32.mrf.mxu0
        %v4115 = vadd.f32 0.0, %v4114
        %4116 = vmatmul.bf16.gmra.mxu0 %v4087
        %v4117 = vpop.f32.mrf.mxu0
        %v4118 = vadd.f32 0.0, %v4117
        %v4119 = vpop.f32.mrf.mxu0
        %v4120 = vadd.f32 0.0, %v4119
        %4121 = vdwg.mxu0
        %4122 = vmatpush.bf16.msra.mxu0 %v3799
        %4123 = vmatpush.bf16.msra.mxu0 %v3798
        %4124 = vmatpush.bf16.msra.mxu0 %v3797
        %4125 = vmatpush.bf16.msra.mxu0 %v3796
        %4126 = vmatpush.bf16.msra.mxu0 %v3795
        %4127 = vmatpush.bf16.msra.mxu0 %v3794
        %4128 = vmatpush.bf16.msra.mxu0 %v3793
        %4129 = vmatpush.bf16.msra.mxu0 %v3792
        %4130 = vmatmul.bf16.gmra.mxu0 %v4084
        %v4131 = vpop.f32.mrf.mxu0
        %v4132 = vadd.f32 %v4113, %v4131
        %v4133 = vpop.f32.mrf.mxu0
        %v4134 = vadd.f32 %v4115, %v4133
        %4135 = vmatmul.bf16.gmra.mxu0 %v4088
        %v4136 = vpop.f32.mrf.mxu0
        %v4137 = vadd.f32 %v4118, %v4136
        %v4138 = vpop.f32.mrf.mxu0
        %v4139 = vadd.f32 %v4120, %v4138
        %4140 = vdwg.mxu0
        %4141 = vmatpush.bf16.msra.mxu0 %v3807
        %4142 = vmatpush.bf16.msra.mxu0 %v3806
        %4143 = vmatpush.bf16.msra.mxu0 %v3805
        %4144 = vmatpush.bf16.msra.mxu0 %v3804
        %4145 = vmatpush.bf16.msra.mxu0 %v3803
        %4146 = vmatpush.bf16.msra.mxu0 %v3802
        %4147 = vmatpush.bf16.msra.mxu0 %v3801
        %4148 = vmatpush.bf16.msra.mxu0 %v3800
        %4149 = vmatmul.bf16.gmra.mxu0 %v4085
        %v4150 = vpop.f32.mrf.mxu0
        %v4151 = vadd.f32 %v4132, %v4150
        %v4152 = vpop.f32.mrf.mxu0
        %v4153 = vadd.f32 %v4134, %v4152
        %4154 = vmatmul.bf16.gmra.mxu0 %v4089
        %v4155 = vpop.f32.mrf.mxu0
        %v4156 = vadd.f32 %v4137, %v4155
        %v4157 = vpop.f32.mrf.mxu0
        %v4158 = vadd.f32 %v4139, %v4157
        %4159 = vdwg.mxu0
        %4160 = vmatpush.bf16.msra.mxu0 0
        %4161 = vmatpush.bf16.msra.mxu0 0
        %4162 = vmatpush.bf16.msra.mxu0 0
        %4163 = vmatpush.bf16.msra.mxu0 0
        %4164 = vmatpush.bf16.msra.mxu0 0
        %4165 = vmatpush.bf16.msra.mxu0 0
        %4166 = vmatpush.bf16.msra.mxu0 0
        %4167 = vmatpush.bf16.msra.mxu0 %v3808
        %4168 = vmatmul.bf16.gmra.mxu0 %v4098
        %v4169 = vpop.f32.mrf.mxu0
        %v4170 = vadd.f32 %v4151, %v4169
        %v4171 = vpop.f32.mrf.mxu0
        %v4172 = vadd.f32 %v4153, %v4171
        %4173 = vmatmul.bf16.gmra.mxu0 %v4101
        %v4174 = vpop.f32.mrf.mxu0
        %v4175 = vadd.f32 %v4156, %v4174
        %v4176 = vpop.f32.mrf.mxu0
        %v4177 = vadd.f32 %v4158, %v4176
        %4178 = vdwg.mxu0
        %v4179 = vmax.f32 %v4046, %v4170
        %v4180 = vmax.f32 %v4047, %v4172
        %v4181 = vmax.f32 %v4048, %v4175
        %v4182 = vmax.f32 %v4049, %v4177
        %s4183 = scalar_lea.vmem %s592, 192
        %v4184 = vld [vmem:[%s4183] sm:$0xff]
        %v4185 = vld [vmem:[%s4183 + $0x8] sm:$0xff]
        %v4186 = vld [vmem:[%s4183 + $0x10] sm:$0xff]
        %v4187 = vld [vmem:[%s4183 + $0x18] sm:$0xff]
        %v4188 = vld [vmem:[%s4183 + $0x20] sm:$0xff]
        %v4189 = vld [vmem:[%s4183 + $0x28] sm:$0xff]
        %v4190 = vld [vmem:[%s4183 + $0x30] sm:$0xff]
        %v4191 = vld [vmem:[%s4183 + $0x38] sm:$0xff]
        %v4200 = vunpack.c.l.b16 %v4184
        %v4201 = vunpack.c.h.b16 %v4184
        %v4202 = vunpack.c.l.b16 %v4185
        %v4203 = vunpack.c.h.b16 %v4185
        %v4204 = vunpack.c.l.b16 %v4186
        %v4205 = vunpack.c.h.b16 %v4186
        %v4206 = vunpack.c.l.b16 %v4187
        %v4207 = vunpack.c.h.b16 %v4187
        %v4208 = vunpack.c.l.b16 %v4188
        %v4209 = vunpack.c.h.b16 %v4188
        %v4210 = vunpack.c.l.b16 %v4189
        %v4211 = vunpack.c.h.b16 %v4189
        %v4212 = vunpack.c.l.b16 %v4190
        %v4213 = vunpack.c.h.b16 %v4190
        %v4214 = vunpack.c.l.b16 %v4191
        %v4215 = vunpack.c.h.b16 %v4191
        %v4216 = vpack.c.b16 %v4204, %v4200
        %v4217 = vpack.c.b16 %v4205, %v4201
        %v4218 = vpack.c.b16 %v4206, %v4202
        %v4219 = vpack.c.b16 %v4207, %v4203
        %v4220 = vpack.c.b16 %v4212, %v4208
        %v4221 = vpack.c.b16 %v4213, %v4209
        %v4222 = vpack.c.b16 %v4214, %v4210
        %v4223 = vpack.c.b16 %v4215, %v4211
        %v4231 = vsel %vm3834, %v4219, 0
        %v4234 = vsel %vm3834, %v4223, 0
        %4236 = vmatpush.bf16.msra.mxu0 %v3791
        %4237 = vmatpush.bf16.msra.mxu0 %v3790
        %4238 = vmatpush.bf16.msra.mxu0 %v3789
        %4239 = vmatpush.bf16.msra.mxu0 %v3788
        %4240 = vmatpush.bf16.msra.mxu0 %v3787
        %4241 = vmatpush.bf16.msra.mxu0 %v3786
        %4242 = vmatpush.bf16.msra.mxu0 %v3785
        %4243 = vmatpush.bf16.msra.mxu0 %v3784
        %4244 = vmatmul.bf16.gmra.mxu0 %v4216
        %v4245 = vpop.f32.mrf.mxu0
        %v4246 = vadd.f32 0.0, %v4245
        %v4247 = vpop.f32.mrf.mxu0
        %v4248 = vadd.f32 0.0, %v4247
        %4249 = vmatmul.bf16.gmra.mxu0 %v4220
        %v4250 = vpop.f32.mrf.mxu0
        %v4251 = vadd.f32 0.0, %v4250
        %v4252 = vpop.f32.mrf.mxu0
        %v4253 = vadd.f32 0.0, %v4252
        %4254 = vdwg.mxu0
        %4255 = vmatpush.bf16.msra.mxu0 %v3799
        %4256 = vmatpush.bf16.msra.mxu0 %v3798
        %4257 = vmatpush.bf16.msra.mxu0 %v3797
        %4258 = vmatpush.bf16.msra.mxu0 %v3796
        %4259 = vmatpush.bf16.msra.mxu0 %v3795
        %4260 = vmatpush.bf16.msra.mxu0 %v3794
        %4261 = vmatpush.bf16.msra.mxu0 %v3793
        %4262 = vmatpush.bf16.msra.mxu0 %v3792
        %4263 = vmatmul.bf16.gmra.mxu0 %v4217
        %v4264 = vpop.f32.mrf.mxu0
        %v4265 = vadd.f32 %v4246, %v4264
        %v4266 = vpop.f32.mrf.mxu0
        %v4267 = vadd.f32 %v4248, %v4266
        %4268 = vmatmul.bf16.gmra.mxu0 %v4221
        %v4269 = vpop.f32.mrf.mxu0
        %v4270 = vadd.f32 %v4251, %v4269
        %v4271 = vpop.f32.mrf.mxu0
        %v4272 = vadd.f32 %v4253, %v4271
        %4273 = vdwg.mxu0
        %4274 = vmatpush.bf16.msra.mxu0 %v3807
        %4275 = vmatpush.bf16.msra.mxu0 %v3806
        %4276 = vmatpush.bf16.msra.mxu0 %v3805
        %4277 = vmatpush.bf16.msra.mxu0 %v3804
        %4278 = vmatpush.bf16.msra.mxu0 %v3803
        %4279 = vmatpush.bf16.msra.mxu0 %v3802
        %4280 = vmatpush.bf16.msra.mxu0 %v3801
        %4281 = vmatpush.bf16.msra.mxu0 %v3800
        %4282 = vmatmul.bf16.gmra.mxu0 %v4218
        %v4283 = vpop.f32.mrf.mxu0
        %v4284 = vadd.f32 %v4265, %v4283
        %v4285 = vpop.f32.mrf.mxu0
        %v4286 = vadd.f32 %v4267, %v4285
        %4287 = vmatmul.bf16.gmra.mxu0 %v4222
        %v4288 = vpop.f32.mrf.mxu0
        %v4289 = vadd.f32 %v4270, %v4288
        %v4290 = vpop.f32.mrf.mxu0
        %v4291 = vadd.f32 %v4272, %v4290
        %4292 = vdwg.mxu0
        %4293 = vmatpush.bf16.msra.mxu0 0
        %4294 = vmatpush.bf16.msra.mxu0 0
        %4295 = vmatpush.bf16.msra.mxu0 0
        %4296 = vmatpush.bf16.msra.mxu0 0
        %4297 = vmatpush.bf16.msra.mxu0 0
        %4298 = vmatpush.bf16.msra.mxu0 0
        %4299 = vmatpush.bf16.msra.mxu0 0
        %4300 = vmatpush.bf16.msra.mxu0 %v3808
        %4301 = vmatmul.bf16.gmra.mxu0 %v4231
        %v4302 = vpop.f32.mrf.mxu0
        %v4303 = vadd.f32 %v4284, %v4302
        %v4304 = vpop.f32.mrf.mxu0
        %v4305 = vadd.f32 %v4286, %v4304
        %4306 = vmatmul.bf16.gmra.mxu0 %v4234
        %v4307 = vpop.f32.mrf.mxu0
        %v4308 = vadd.f32 %v4289, %v4307
        %v4309 = vpop.f32.mrf.mxu0
        %v4310 = vadd.f32 %v4291, %v4309
        %4311 = vdwg.mxu0
        %v4312 = vmax.f32 %v4179, %v4303
        %v4313 = vmax.f32 %v4180, %v4305
        %v4314 = vmax.f32 %v4181, %v4308
        %v4315 = vmax.f32 %v4182, %v4310
        %v4316 = vld [vmem:[%s9] sm:$0x1]
        %v4318 = vperm.slane %v4316, 0
        %v4320 = vadd.f32 %v4312, %v4318
        %v4321 = vadd.f32 %v4313, %v4318
        %v4322 = vadd.f32 %v4314, %v4318
        %v4323 = vadd.f32 %v4315, %v4318
        %v4324 = vpack.c.bf16 %v4320, %v4320
        %v4325 = vpack.c.bf16 %v4321, %v4321
        %v4326 = vpack.c.bf16 %v4322, %v4322
        %v4327 = vpack.c.bf16 %v4323, %v4323
        %v4328 = vld [vmem:[%s10] sm:$0xf]
        %v4329 = vld [vmem:[%s10 + $0x4] sm:$0xf]
        %v4330 = vld [vmem:[%s10 + $0x8] sm:$0xf]
        %v4331 = vld [vmem:[%s10 + $0xc] sm:$0xf]
        %v4332 = vld [vmem:[%s10 + $0x10] sm:$0xf]
        %v4333 = vld [vmem:[%s10 + $0x14] sm:$0xf]
        %v4334 = vld [vmem:[%s10 + $0x18] sm:$0xf]
        %v4335 = vld [vmem:[%s10 + $0x1c] sm:$0xf]
        %s4336 = scalar_lea.vmem %s10, 32
        %v4337 = vld [vmem:[%s4336] sm:$0xf]
        %v4338 = vld [vmem:[%s4336 + $0x4] sm:$0xf]
        %v4339 = vld [vmem:[%s4336 + $0x8] sm:$0xf]
        %v4340 = vld [vmem:[%s4336 + $0xc] sm:$0xf]
        %v4341 = vld [vmem:[%s4336 + $0x10] sm:$0xf]
        %v4342 = vld [vmem:[%s4336 + $0x14] sm:$0xf]
        %v4343 = vld [vmem:[%s4336 + $0x18] sm:$0xf]
        %v4344 = vld [vmem:[%s4336 + $0x1c] sm:$0xf]
        %v4349 = vunpack.c.l.b16 %v4324
        %v4350 = vunpack.c.l.b16 %v4325
        %v4351 = vunpack.c.l.b16 %v4326
        %v4352 = vunpack.c.l.b16 %v4327
        %v4353 = vpack.c.b16 %v4350, %v4349
        %v4354 = vpack.c.b16 %v4352, %v4351
        %v4356 = vshrl.u32 %v4353, 16
        %v4358 = vshll.u32 %v4353, 16
        %v4360 = vrot.slane %v4358, 1
        %v4361 = vor.u32 %v4356, %v4360
        %v4363 = vshll.u32 %v4354, 16
        %v4365 = vrot.slane %v4363, 1
        %v4366 = vsel %vm1699, %v4361, %v4365
        %v4367 = vshrl.u32 %v4354, 16
        %v4369 = vor.u32 %v4367, %v4365
        %v4378 = vunpack.c.l.b16 %v4337
        %v4379 = vunpack.c.l.b16 %v4338
        %v4380 = vunpack.c.l.b16 %v4339
        %v4381 = vunpack.c.l.b16 %v4340
        %v4382 = vunpack.c.l.b16 %v4341
        %v4383 = vunpack.c.l.b16 %v4342
        %v4384 = vunpack.c.l.b16 %v4343
        %v4385 = vunpack.c.l.b16 %v4344
        %v4386 = vpack.c.b16 %v4379, %v4378
        %v4387 = vpack.c.b16 %v4381, %v4380
        %v4388 = vpack.c.b16 %v4383, %v4382
        %v4389 = vpack.c.b16 %v4385, %v4384
        %v4395 = vsel %vm2965, %v4366, 0
        %v4398 = vsel %vm2965, %v4369, 0
        %4400 = vmatpush.bf16.msra.mxu0 0
        %4401 = vmatpush.bf16.msra.mxu0 0
        %4402 = vmatpush.bf16.msra.mxu0 0
        %4403 = vmatpush.bf16.msra.mxu0 0
        %4404 = vmatpush.bf16.msra.mxu0 %v4389
        %4405 = vmatpush.bf16.msra.mxu0 %v4388
        %4406 = vmatpush.bf16.msra.mxu0 %v4387
        %4407 = vmatpush.bf16.msra.mxu0 %v4386
        %4408 = vmatmul.bf16.gmra.mxu0 %v4395
        %v4409 = vpop.f32.mrf.mxu0
        %v4410 = vadd.f32 0.0, %v4409
        %v4411 = vpop.f32.mrf.mxu0
        %v4412 = vadd.f32 0.0, %v4411
        %4413 = vmatmul.bf16.gmra.mxu0 %v4398
        %v4414 = vpop.f32.mrf.mxu0
        %v4415 = vadd.f32 0.0, %v4414
        %v4416 = vpop.f32.mrf.mxu0
        %v4417 = vadd.f32 0.0, %v4416
        %4418 = vdwg.mxu0
        %v4427 = vunpack.c.l.b16 %v4328
        %v4428 = vunpack.c.l.b16 %v4329
        %v4429 = vunpack.c.l.b16 %v4330
        %v4430 = vunpack.c.l.b16 %v4331
        %v4431 = vunpack.c.l.b16 %v4332
        %v4432 = vunpack.c.l.b16 %v4333
        %v4433 = vunpack.c.l.b16 %v4334
        %v4434 = vunpack.c.l.b16 %v4335
        %v4435 = vpack.c.b16 %v4428, %v4427
        %v4436 = vpack.c.b16 %v4430, %v4429
        %v4437 = vpack.c.b16 %v4432, %v4431
        %v4438 = vpack.c.b16 %v4434, %v4433
        %v4443 = vsel %vm2965, %v4353, 0
        %v4445 = vsel %vm2965, %v4354, 0
        %4447 = vmatpush.bf16.msra.mxu0 0
        %4448 = vmatpush.bf16.msra.mxu0 0
        %4449 = vmatpush.bf16.msra.mxu0 0
        %4450 = vmatpush.bf16.msra.mxu0 0
        %4451 = vmatpush.bf16.msra.mxu0 %v4438
        %4452 = vmatpush.bf16.msra.mxu0 %v4437
        %4453 = vmatpush.bf16.msra.mxu0 %v4436
        %4454 = vmatpush.bf16.msra.mxu0 %v4435
        %4455 = vmatmul.bf16.gmra.mxu0 %v4443
        %v4456 = vpop.f32.mrf.mxu0
        %v4457 = vadd.f32 %v4410, %v4456
        %v4458 = vpop.f32.mrf.mxu0
        %v4459 = vadd.f32 %v4412, %v4458
        %4460 = vmatmul.bf16.gmra.mxu0 %v4445
        %v4461 = vpop.f32.mrf.mxu0
        %v4462 = vadd.f32 %v4415, %v4461
        %v4463 = vpop.f32.mrf.mxu0
        %v4464 = vadd.f32 %v4417, %v4463
        %4465 = vdwg.mxu0
        %s4466 = scalar_lea.vmem %s10, 64
        %v4467 = vld [vmem:[%s4466] sm:$0xf]
        %v4468 = vld [vmem:[%s4466 + $0x4] sm:$0xf]
        %v4469 = vld [vmem:[%s4466 + $0x8] sm:$0xf]
        %v4470 = vld [vmem:[%s4466 + $0xc] sm:$0xf]
        %v4471 = vld [vmem:[%s4466 + $0x10] sm:$0xf]
        %v4472 = vld [vmem:[%s4466 + $0x14] sm:$0xf]
        %v4473 = vld [vmem:[%s4466 + $0x18] sm:$0xf]
        %v4474 = vld [vmem:[%s4466 + $0x1c] sm:$0xf]
        %v4475 = vrot.slane %v4353, 1
        %v4476 = vrot.slane %v4354, 1
        %v4477 = vsel %vm1990, %v4475, %v4476
        %v4486 = vunpack.c.l.b16 %v4467
        %v4487 = vunpack.c.l.b16 %v4468
        %v4488 = vunpack.c.l.b16 %v4469
        %v4489 = vunpack.c.l.b16 %v4470
        %v4490 = vunpack.c.l.b16 %v4471
        %v4491 = vunpack.c.l.b16 %v4472
        %v4492 = vunpack.c.l.b16 %v4473
        %v4493 = vunpack.c.l.b16 %v4474
        %v4494 = vpack.c.b16 %v4487, %v4486
        %v4495 = vpack.c.b16 %v4489, %v4488
        %v4496 = vpack.c.b16 %v4491, %v4490
        %v4497 = vpack.c.b16 %v4493, %v4492
        %v4503 = vsel %vm2965, %v4477, 0
        %v4506 = vsel %vm2965, %v4476, 0
        %4508 = vmatpush.bf16.msra.mxu0 0
        %4509 = vmatpush.bf16.msra.mxu0 0
        %4510 = vmatpush.bf16.msra.mxu0 0
        %4511 = vmatpush.bf16.msra.mxu0 0
        %4512 = vmatpush.bf16.msra.mxu0 %v4497
        %4513 = vmatpush.bf16.msra.mxu0 %v4496
        %4514 = vmatpush.bf16.msra.mxu0 %v4495
        %4515 = vmatpush.bf16.msra.mxu0 %v4494
        %4516 = vmatmul.bf16.gmra.mxu0 %v4503
        %v4517 = vpop.f32.mrf.mxu0
        %v4518 = vadd.f32 0.0, %v4517
        %v4519 = vpop.f32.mrf.mxu0
        %v4520 = vadd.f32 0.0, %v4519
        %4521 = vmatmul.bf16.gmra.mxu0 %v4506
        %v4522 = vpop.f32.mrf.mxu0
        %v4523 = vadd.f32 0.0, %v4522
        %v4524 = vpop.f32.mrf.mxu0
        %v4525 = vadd.f32 0.0, %v4524
        %4526 = vdwg.mxu0
        %v4527 = vadd.f32 %v4457, %v4518
        %v4528 = vadd.f32 %v4459, %v4520
        %v4529 = vadd.f32 %v4462, %v4523
        %v4530 = vadd.f32 %v4464, %v4525
        %s4531 = scalar_lea.vmem %s10, 96
        %v4532 = vld [vmem:[%s4531] sm:$0xf]
        %v4533 = vld [vmem:[%s4531 + $0x4] sm:$0xf]
        %v4534 = vld [vmem:[%s4531 + $0x8] sm:$0xf]
        %v4535 = vld [vmem:[%s4531 + $0xc] sm:$0xf]
        %v4536 = vld [vmem:[%s4531 + $0x10] sm:$0xf]
        %v4537 = vld [vmem:[%s4531 + $0x14] sm:$0xf]
        %v4538 = vld [vmem:[%s4531 + $0x18] sm:$0xf]
        %v4539 = vld [vmem:[%s4531 + $0x1c] sm:$0xf]
        %v4540 = vrot.slane %v4356, 1
        %v4541 = vrot.slane %v4358, 2
        %v4542 = vor.u32 %v4540, %v4541
        %v4543 = vrot.slane %v4367, 1
        %v4544 = vrot.slane %v4363, 2
        %v4545 = vor.u32 %v4543, %v4544
        %v4546 = vsel %vm2144, %v4542, %v4545
        %v4555 = vunpack.c.l.b16 %v4532
        %v4556 = vunpack.c.l.b16 %v4533
        %v4557 = vunpack.c.l.b16 %v4534
        %v4558 = vunpack.c.l.b16 %v4535
        %v4559 = vunpack.c.l.b16 %v4536
        %v4560 = vunpack.c.l.b16 %v4537
        %v4561 = vunpack.c.l.b16 %v4538
        %v4562 = vunpack.c.l.b16 %v4539
        %v4563 = vpack.c.b16 %v4556, %v4555
        %v4564 = vpack.c.b16 %v4558, %v4557
        %v4565 = vpack.c.b16 %v4560, %v4559
        %v4566 = vpack.c.b16 %v4562, %v4561
        %v4572 = vsel %vm2965, %v4546, 0
        %v4575 = vsel %vm2965, %v4545, 0
        %4577 = vmatpush.bf16.msra.mxu0 0
        %4578 = vmatpush.bf16.msra.mxu0 0
        %4579 = vmatpush.bf16.msra.mxu0 0
        %4580 = vmatpush.bf16.msra.mxu0 0
        %4581 = vmatpush.bf16.msra.mxu0 %v4566
        %4582 = vmatpush.bf16.msra.mxu0 %v4565
        %4583 = vmatpush.bf16.msra.mxu0 %v4564
        %4584 = vmatpush.bf16.msra.mxu0 %v4563
        %4585 = vmatmul.bf16.gmra.mxu0 %v4572
        %v4586 = vpop.f32.mrf.mxu0
        %v4587 = vadd.f32 0.0, %v4586
        %v4588 = vpop.f32.mrf.mxu0
        %v4589 = vadd.f32 0.0, %v4588
        %4590 = vmatmul.bf16.gmra.mxu0 %v4575
        %v4591 = vpop.f32.mrf.mxu0
        %v4592 = vadd.f32 0.0, %v4591
        %v4593 = vpop.f32.mrf.mxu0
        %v4594 = vadd.f32 0.0, %v4593
        %4595 = vdwg.mxu0
        %v4596 = vadd.f32 %v4527, %v4587
        %v4597 = vadd.f32 %v4528, %v4589
        %v4598 = vadd.f32 %v4529, %v4592
        %v4599 = vadd.f32 %v4530, %v4594
        %v4600 = vld [vmem:[%s11] sm:$0x1]
        %v4602 = vperm.slane %v4600, 0
        %v4604 = vadd.f32 %v4596, %v4602
        %v4605 = vadd.f32 %v4597, %v4602
        %v4606 = vadd.f32 %v4598, %v4602
        %v4607 = vadd.f32 %v4599, %v4602
        %4608 = vst.msk [vmem:[#allocation4] sm:$0xff] %vm3580, %v4604
        %4609 = vst.msk [vmem:[#allocation4 + $0x8] sm:$0xff] %vm3580, %v4605
        %4610 = vst.msk [vmem:[#allocation4 + $0x10] sm:$0xff] %vm3580, %v4606
        %vm4611 = vcmask 258048
        %4612 = vst.msk [vmem:[#allocation4 + $0x18] sm:$0x1f] %vm4611, %v4607
        %vm4613 = vcmask 256000
        %4614 = vst.msk [vmem:[#allocation4 + $0x1d] sm:$0x7] %vm4613, 0.0
        %v4615 = vld [vmem:[#allocation4] ss:$4 sm:$0xff]
        %s4616 = scalar_lea.vmem [#allocation4], 1
        %v4617 = vld [vmem:[%s4616] ss:$4 sm:$0xff]
        %v4618 = vmax.f32 %v4615, %v4617
        %s4619 = scalar_lea.vmem [#allocation4], 2
        %v4620 = vld [vmem:[%s4619] ss:$4 sm:$0xff]
        %v4621 = vmax.f32 %v4618, %v4620
        %s4622 = scalar_lea.vmem [#allocation4], 3
        %v4623 = vld [vmem:[%s4622] ss:$4 sm:$0xff]
        %v4624 = vmax.f32 %v4621, %v4623
        %v4625 = vpack.c.bf16 %v4624, %v4624
        %v4626 = vld [vmem:[%s12] sm:$0xf]
        %v4627 = vld [vmem:[%s12 + $0x4] sm:$0xf]
        %v4628 = vld [vmem:[%s12 + $0x8] sm:$0xf]
        %v4629 = vld [vmem:[%s12 + $0xc] sm:$0xf]
        %s4630 = scalar_lea.vmem %s12, 16
        %v4631 = vld [vmem:[%s4630] sm:$0xf]
        %v4632 = vld [vmem:[%s4630 + $0x4] sm:$0xf]
        %v4633 = vld [vmem:[%s4630 + $0x8] sm:$0xf]
        %v4634 = vld [vmem:[%s4630 + $0xc] sm:$0xf]
        %v4636 = vunpack.c.l.b16 %v4625
        %v4637 = vpack.c.b16 %v4636, %v4636
        %v4639 = vshrl.u32 %v4637, 16
        %v4641 = vshll.u32 %v4637, 16
        %v4643 = vrot.slane %v4641, 1
        %v4644 = vor.u32 %v4639, %v4643
        %v4649 = vunpack.c.l.b16 %v4631
        %v4650 = vunpack.c.l.b16 %v4632
        %v4651 = vunpack.c.l.b16 %v4633
        %v4652 = vunpack.c.l.b16 %v4634
        %v4653 = vpack.c.b16 %v4650, %v4649
        %v4654 = vpack.c.b16 %v4652, %v4651
        %v4658 = vsel %vm3580, %v4644, 0
        %4660 = vmatpush.bf16.msra.mxu0 0
        %4661 = vmatpush.bf16.msra.mxu0 0
        %4662 = vmatpush.bf16.msra.mxu0 0
        %4663 = vmatpush.bf16.msra.mxu0 0
        %4664 = vmatpush.bf16.msra.mxu0 0
        %4665 = vmatpush.bf16.msra.mxu0 0
        %4666 = vmatpush.bf16.msra.mxu0 %v4654
        %4667 = vmatpush.bf16.msra.mxu0 %v4653
        %4668 = vmatmul.bf16.gmra.mxu0 %v4658
        %v4669 = vpop.f32.mrf.mxu0
        %v4670 = vadd.f32 0.0, %v4669
        %v4671 = vpop.f32.mrf.mxu0
        %4672 = vdwg.mxu0
        %v4677 = vunpack.c.l.b16 %v4626
        %v4678 = vunpack.c.l.b16 %v4627
        %v4679 = vunpack.c.l.b16 %v4628
        %v4680 = vunpack.c.l.b16 %v4629
        %v4681 = vpack.c.b16 %v4678, %v4677
        %v4682 = vpack.c.b16 %v4680, %v4679
        %v4686 = vsel %vm3580, %v4625, 0
        %4688 = vmatpush.bf16.msra.mxu0 0
        %4689 = vmatpush.bf16.msra.mxu0 0
        %4690 = vmatpush.bf16.msra.mxu0 0
        %4691 = vmatpush.bf16.msra.mxu0 0
        %4692 = vmatpush.bf16.msra.mxu0 0
        %4693 = vmatpush.bf16.msra.mxu0 0
        %4694 = vmatpush.bf16.msra.mxu0 %v4682
        %4695 = vmatpush.bf16.msra.mxu0 %v4681
        %4696 = vmatmul.bf16.gmra.mxu0 %v4686
        %v4697 = vpop.f32.mrf.mxu0
        %v4698 = vadd.f32 %v4670, %v4697
        %v4699 = vpop.f32.mrf.mxu0
        %4700 = vdwg.mxu0
        %s4701 = scalar_lea.vmem %s12, 32
        %v4702 = vld [vmem:[%s4701] sm:$0xf]
        %v4703 = vld [vmem:[%s4701 + $0x4] sm:$0xf]
        %v4704 = vld [vmem:[%s4701 + $0x8] sm:$0xf]
        %v4705 = vld [vmem:[%s4701 + $0xc] sm:$0xf]
        %v4706 = vrot.slane %v4637, 1
        %v4711 = vunpack.c.l.b16 %v4702
        %v4712 = vunpack.c.l.b16 %v4703
        %v4713 = vunpack.c.l.b16 %v4704
        %v4714 = vunpack.c.l.b16 %v4705
        %v4715 = vpack.c.b16 %v4712, %v4711
        %v4716 = vpack.c.b16 %v4714, %v4713
        %v4720 = vsel %vm3580, %v4706, 0
        %4722 = vmatpush.bf16.msra.mxu0 0
        %4723 = vmatpush.bf16.msra.mxu0 0
        %4724 = vmatpush.bf16.msra.mxu0 0
        %4725 = vmatpush.bf16.msra.mxu0 0
        %4726 = vmatpush.bf16.msra.mxu0 0
        %4727 = vmatpush.bf16.msra.mxu0 0
        %4728 = vmatpush.bf16.msra.mxu0 %v4716
        %4729 = vmatpush.bf16.msra.mxu0 %v4715
        %4730 = vmatmul.bf16.gmra.mxu0 %v4720
        %v4731 = vpop.f32.mrf.mxu0
        %v4732 = vadd.f32 0.0, %v4731
        %v4733 = vpop.f32.mrf.mxu0
        %4734 = vdwg.mxu0
        %v4735 = vadd.f32 %v4698, %v4732
        %s4736 = scalar_lea.vmem %s12, 48
        %v4737 = vld [vmem:[%s4736] sm:$0xf]
        %v4738 = vld [vmem:[%s4736 + $0x4] sm:$0xf]
        %v4739 = vld [vmem:[%s4736 + $0x8] sm:$0xf]
        %v4740 = vld [vmem:[%s4736 + $0xc] sm:$0xf]
        %v4741 = vrot.slane %v4639, 1
        %v4742 = vrot.slane %v4641, 2
        %v4743 = vor.u32 %v4741, %v4742
        %v4748 = vunpack.c.l.b16 %v4737
        %v4749 = vunpack.c.l.b16 %v4738
        %v4750 = vunpack.c.l.b16 %v4739
        %v4751 = vunpack.c.l.b16 %v4740
        %v4752 = vpack.c.b16 %v4749, %v4748
        %v4753 = vpack.c.b16 %v4751, %v4750
        %v4757 = vsel %vm3580, %v4743, 0
        %4759 = vmatpush.bf16.msra.mxu0 0
        %4760 = vmatpush.bf16.msra.mxu0 0
        %4761 = vmatpush.bf16.msra.mxu0 0
        %4762 = vmatpush.bf16.msra.mxu0 0
        %4763 = vmatpush.bf16.msra.mxu0 0
        %4764 = vmatpush.bf16.msra.mxu0 0
        %4765 = vmatpush.bf16.msra.mxu0 %v4753
        %4766 = vmatpush.bf16.msra.mxu0 %v4752
        %4767 = vmatmul.bf16.gmra.mxu0 %v4757
        %v4768 = vpop.f32.mrf.mxu0
        %v4769 = vadd.f32 0.0, %v4768
        %v4770 = vpop.f32.mrf.mxu0
        %4771 = vdwg.mxu0
        %v4772 = vadd.f32 %v4735, %v4769
        %v4773 = vld [vmem:[%s13] sm:$0x1]
        %v4775 = vperm.slane %v4773, 0
        %v4777 = vadd.f32 %v4772, %v4775
        %vm4778 = vcmask 126976
        %4779 = vst.msk [vmem:[#allocation5] sm:$0x1f] %vm4778, %v4777
        %vm4780 = vcmask 124928
        %4781 = vst.msk [vmem:[#allocation5 + $0x5] sm:$0x7] %vm4780, 0.0
        %v4782 = vld [vmem:[#allocation3] ss:$32 sm:$0x1]
        %s4783 = scalar_lea.vmem [#allocation3], 1
        %v4784 = vld [vmem:[%s4783] ss:$32 sm:$0x1]
        %v4785 = vmax.f32 %v4782, %v4784
        %s4786 = scalar_lea.vmem [#allocation3], 2
        %v4787 = vld [vmem:[%s4786] ss:$32 sm:$0x1]
        %v4788 = vmax.f32 %v4785, %v4787
        %s4789 = scalar_lea.vmem [#allocation3], 3
        %v4790 = vld [vmem:[%s4789] ss:$32 sm:$0x1]
        %v4791 = vmax.f32 %v4788, %v4790
        %v4792 = vlaneseq
        %vm4793 = vcmp.ge.s32.totalorder %v4792, 0
        %vm4794 = vcmp.lt.s32.totalorder %v4792, 32
        %vm4795 = vmand %vm4793, %vm4794
        %4796 = vst.msk [vmem:[#allocation6] sm:$0x1] %vm4795, %v4791
        %s4797 = scalar_lea.vmem [#allocation3], 4
        %v4798 = vld [vmem:[%s4797] ss:$32 sm:$0x1]
        %s4799 = scalar_lea.vmem [#allocation3], 5
        %v4800 = vld [vmem:[%s4799] ss:$32 sm:$0x1]
        %v4801 = vmax.f32 %v4798, %v4800
        %s4802 = scalar_lea.vmem [#allocation3], 6
        %v4803 = vld [vmem:[%s4802] ss:$32 sm:$0x1]
        %v4804 = vmax.f32 %v4801, %v4803
        %s4805 = scalar_lea.vmem [#allocation3], 7
        %v4806 = vld [vmem:[%s4805] ss:$32 sm:$0x1]
        %v4807 = vmax.f32 %v4804, %v4806
        %4809 = vrot.lane.b32.xlu0 %v4807, 32
        %v4810 = vpop.permute.xlu0 %4809
        %vm4812 = vcmp.ge.s32.totalorder %v4792, 32
        %vm4813 = vcmp.lt.s32.totalorder %v4792, 64
        %vm4814 = vmand %vm4812, %vm4813
        %4815 = vst.msk [vmem:[#allocation6] sm:$0x1] %vm4814, %v4810
        %s4816 = scalar_lea.vmem [#allocation3], 8
        %v4817 = vld [vmem:[%s4816] ss:$32 sm:$0x1]
        %s4818 = scalar_lea.vmem [#allocation3], 9
        %v4819 = vld [vmem:[%s4818] ss:$32 sm:$0x1]
        %v4820 = vmax.f32 %v4817, %v4819
        %s4821 = scalar_lea.vmem [#allocation3], 10
        %v4822 = vld [vmem:[%s4821] ss:$32 sm:$0x1]
        %v4823 = vmax.f32 %v4820, %v4822
        %s4824 = scalar_lea.vmem [#allocation3], 11
        %v4825 = vld [vmem:[%s4824] ss:$32 sm:$0x1]
        %v4826 = vmax.f32 %v4823, %v4825
        %4828 = vrot.lane.b32.xlu0 %v4826, 64
        %v4829 = vpop.permute.xlu0 %4828
        %vm4831 = vcmp.ge.s32.totalorder %v4792, 64
        %vm4832 = vcmp.lt.s32.totalorder %v4792, 96
        %vm4833 = vmand %vm4831, %vm4832
        %4834 = vst.msk [vmem:[#allocation6] sm:$0x1] %vm4833, %v4829
        %s4835 = scalar_lea.vmem [#allocation3], 12
        %v4836 = vld [vmem:[%s4835] ss:$32 sm:$0x1]
        %s4837 = scalar_lea.vmem [#allocation3], 13
        %v4838 = vld [vmem:[%s4837] ss:$32 sm:$0x1]
        %v4839 = vmax.f32 %v4836, %v4838
        %s4840 = scalar_lea.vmem [#allocation3], 14
        %v4841 = vld [vmem:[%s4840] ss:$32 sm:$0x1]
        %v4842 = vmax.f32 %v4839, %v4841
        %s4843 = scalar_lea.vmem [#allocation3], 15
        %v4844 = vld [vmem:[%s4843] ss:$32 sm:$0x1]
        %v4845 = vmax.f32 %v4842, %v4844
        %4847 = vrot.lane.b32.xlu0 %v4845, 96
        %v4848 = vpop.permute.xlu0 %4847
        %vm4850 = vcmp.ge.s32.totalorder %v4792, 96
        %vm4851 = vcmp.lt.s32.totalorder %v4792, 128
        %vm4852 = vmand %vm4850, %vm4851
        %4853 = vst.msk [vmem:[#allocation6] sm:$0x1] %vm4852, %v4848
        %s4854 = scalar_lea.vmem [#allocation3], 16
        %v4855 = vld [vmem:[%s4854] ss:$32 sm:$0x1]
        %s4856 = scalar_lea.vmem [#allocation3], 17
        %v4857 = vld [vmem:[%s4856] ss:$32 sm:$0x1]
        %v4858 = vmax.f32 %v4855, %v4857
        %s4859 = scalar_lea.vmem [#allocation3], 18
        %v4860 = vld [vmem:[%s4859] ss:$32 sm:$0x1]
        %v4861 = vmax.f32 %v4858, %v4860
        %s4862 = scalar_lea.vmem [#allocation3], 19
        %v4863 = vld [vmem:[%s4862] ss:$32 sm:$0x1]
        %v4864 = vmax.f32 %v4861, %v4863
        %4865 = vst.msk [vmem:[#allocation6 + $0x1] sm:$0x1] %vm4795, %v4864
        %v4866 = vld [vmem:[#allocation5] ss:$8 sm:$0x1]
        %s4867 = scalar_lea.vmem [#allocation5], 1
        %v4868 = vld [vmem:[%s4867] ss:$8 sm:$0x1]
        %v4869 = vmax.f32 %v4866, %v4868
        %4871 = vrot.lane.b32.xlu0 %v4869, 32
        %v4872 = vpop.permute.xlu0 %4871
        %vm4874 = vcmp.lt.s32.totalorder %v4792, 48
        %vm4875 = vmand %vm4812, %vm4874
        %4876 = vst.msk [vmem:[#allocation6 + $0x1] sm:$0x1] %vm4875, %v4872
        %v4877 = vld [vmem:[#allocation6] sm:$0x3]
        %v4879 = vperm.slane %v4877, 0
        %v4880 = vperm.slane %v4877, 1
        %v4883 = vpack.c.bf16 %v4879, %v4879
        %v4884 = vpack.c.bf16 %v4880, %v4880
        %v4885 = vld [vmem:[%s14] sm:$0xf]
        %v4886 = vld [vmem:[%s14 + $0x4] sm:$0xf]
        %v4887 = vld [vmem:[%s14 + $0x8] sm:$0xf]
        %v4888 = vld [vmem:[%s14 + $0xc] sm:$0xf]
        %v4889 = vld [vmem:[%s14 + $0x10] sm:$0xf]
        %v4890 = vld [vmem:[%s14 + $0x14] sm:$0xf]
        %v4891 = vld [vmem:[%s14 + $0x18] sm:$0xf]
        %v4892 = vld [vmem:[%s14 + $0x1c] sm:$0xf]
        %v4893 = vld [vmem:[%s14 + $0x20] sm:$0xf]
        %v4894 = vld [vmem:[%s14 + $0x24] sm:$0xf]
        %v4895 = vld [vmem:[%s14 + $0x28] sm:$0xf]
        %v4896 = vld [vmem:[%s14 + $0x2c] sm:$0xf]
        %v4897 = vld [vmem:[%s14 + $0x30] sm:$0xf]
        %v4898 = vld [vmem:[%s14 + $0x34] sm:$0xf]
        %v4899 = vld [vmem:[%s14 + $0x38] sm:$0xf]
        %v4900 = vld [vmem:[%s14 + $0x3c] sm:$0xf]
        %v4901 = vld [vmem:[%s14 + $0x40] sm:$0xf]
        %v4902 = vld [vmem:[%s14 + $0x44] sm:$0xf]
        %v4903 = vld [vmem:[%s14 + $0x48] sm:$0xf]
        %v4904 = vld [vmem:[%s14 + $0x4c] sm:$0xf]
        %v4905 = vld [vmem:[%s14 + $0x50] sm:$0xf]
        %v4906 = vld [vmem:[%s14 + $0x54] sm:$0xf]
        %v4907 = vld [vmem:[%s15] sm:$0x1]
        %v4930 = vunpack.c.l.b16 %v4885
        %v4931 = vunpack.c.l.b16 %v4886
        %v4932 = vunpack.c.l.b16 %v4887
        %v4933 = vunpack.c.l.b16 %v4888
        %v4934 = vunpack.c.l.b16 %v4889
        %v4935 = vunpack.c.l.b16 %v4890
        %v4936 = vunpack.c.l.b16 %v4891
        %v4937 = vunpack.c.l.b16 %v4892
        %v4938 = vunpack.c.l.b16 %v4893
        %v4939 = vunpack.c.l.b16 %v4894
        %v4940 = vunpack.c.l.b16 %v4895
        %v4941 = vunpack.c.l.b16 %v4896
        %v4942 = vunpack.c.l.b16 %v4897
        %v4943 = vunpack.c.l.b16 %v4898
        %v4944 = vunpack.c.l.b16 %v4899
        %v4945 = vunpack.c.l.b16 %v4900
        %v4946 = vunpack.c.l.b16 %v4901
        %v4947 = vunpack.c.l.b16 %v4902
        %v4948 = vunpack.c.l.b16 %v4903
        %v4949 = vunpack.c.l.b16 %v4904
        %v4950 = vunpack.c.l.b16 %v4905
        %v4951 = vunpack.c.l.b16 %v4906
        %v4952 = vpack.c.b16 %v4931, %v4930
        %v4953 = vpack.c.b16 %v4933, %v4932
        %v4954 = vpack.c.b16 %v4935, %v4934
        %v4955 = vpack.c.b16 %v4937, %v4936
        %v4956 = vpack.c.b16 %v4939, %v4938
        %v4957 = vpack.c.b16 %v4941, %v4940
        %v4958 = vpack.c.b16 %v4943, %v4942
        %v4959 = vpack.c.b16 %v4945, %v4944
        %v4960 = vpack.c.b16 %v4947, %v4946
        %v4961 = vpack.c.b16 %v4949, %v4948
        %v4962 = vpack.c.b16 %v4951, %v4950
        %vm4974 = vcmask 392192
        %v4976 = vsel %vm4974, %v4884, 0
        %4978 = vmatpush.bf16.msra.mxu0 %v4959
        %4979 = vmatpush.bf16.msra.mxu0 %v4958
        %4980 = vmatpush.bf16.msra.mxu0 %v4957
        %4981 = vmatpush.bf16.msra.mxu0 %v4956
        %4982 = vmatpush.bf16.msra.mxu0 %v4955
        %4983 = vmatpush.bf16.msra.mxu0 %v4954
        %4984 = vmatpush.bf16.msra.mxu0 %v4953
        %4985 = vmatpush.bf16.msra.mxu0 %v4952
        %4986 = vmatmul.bf16.gmra.mxu0 %v4883
        %v4987 = vpop.f32.mrf.mxu0
        %v4988 = vadd.f32 %v4907, %v4987
        %v4989 = vpop.f32.mrf.mxu0
        %4990 = vdwg.mxu0
        %4991 = vmatpush.bf16.msra.mxu0 0
        %4992 = vmatpush.bf16.msra.mxu0 0
        %4993 = vmatpush.bf16.msra.mxu0 0
        %4994 = vmatpush.bf16.msra.mxu0 0
        %4995 = vmatpush.bf16.msra.mxu0 0
        %4996 = vmatpush.bf16.msra.mxu0 %v4962
        %4997 = vmatpush.bf16.msra.mxu0 %v4961
        %4998 = vmatpush.bf16.msra.mxu0 %v4960
        %4999 = vmatmul.bf16.gmra.mxu0 %v4976
        %v5000 = vpop.f32.mrf.mxu0
        %v5001 = vadd.f32 %v4988, %v5000
        %v5002 = vpop.f32.mrf.mxu0
        %5003 = vdwg.mxu0
        %vm5004 = vcmp.gt.f32.partialorder %v5001, 0.0
        %v5005 = vmul.f32 %v5001, 0.01
        %v5006 = vsel %vm5004, %v5001, %v5005
        %v5007 = vpack.c.bf16 %v5006, %v5006
        %v5008 = vld [vmem:[%s16] sm:$0xf]
        %v5009 = vld [vmem:[%s16 + $0x4] sm:$0xf]
        %v5010 = vld [vmem:[%s16 + $0x8] sm:$0xf]
        %v5011 = vld [vmem:[%s16 + $0xc] sm:$0xf]
        %v5012 = vld [vmem:[%s16 + $0x10] sm:$0xf]
        %v5013 = vld [vmem:[%s16 + $0x14] sm:$0xf]
        %v5014 = vld [vmem:[%s16 + $0x18] sm:$0xf]
        %v5015 = vld [vmem:[%s16 + $0x1c] sm:$0xf]
        %v5016 = vld [vmem:[%s17] sm:$0x1]
        %v5025 = vunpack.c.l.b16 %v5008
        %v5026 = vunpack.c.l.b16 %v5009
        %v5027 = vunpack.c.l.b16 %v5010
        %v5028 = vunpack.c.l.b16 %v5011
        %v5029 = vunpack.c.l.b16 %v5012
        %v5030 = vunpack.c.l.b16 %v5013
        %v5031 = vunpack.c.l.b16 %v5014
        %v5032 = vunpack.c.l.b16 %v5015
        %v5033 = vpack.c.b16 %v5026, %v5025
        %v5034 = vpack.c.b16 %v5028, %v5027
        %v5035 = vpack.c.b16 %v5030, %v5029
        %v5036 = vpack.c.b16 %v5032, %v5031
        %v5042 = vsel %vm2965, %v5007, 0
        %5044 = vmatpush.bf16.msra.mxu0 0
        %5045 = vmatpush.bf16.msra.mxu0 0
        %5046 = vmatpush.bf16.msra.mxu0 0
        %5047 = vmatpush.bf16.msra.mxu0 0
        %5048 = vmatpush.bf16.msra.mxu0 %v5036
        %5049 = vmatpush.bf16.msra.mxu0 %v5035
        %5050 = vmatpush.bf16.msra.mxu0 %v5034
        %5051 = vmatpush.bf16.msra.mxu0 %v5033
        %5052 = vmatmul.bf16.gmra.mxu0 %v5042
        %v5053 = vpop.f32.mrf.mxu0
        %v5054 = vadd.f32 %v5016, %v5053
        %v5055 = vpop.f32.mrf.mxu0
        %5056 = vdwg.mxu0
        %v5057 = vsub.f32 0.0, %v5054
        %v5058 = vmul.f32 %v5057, 1.442695
        %v5059 = vpow.pop %v5058
        %v5060 = vadd.f32 %v5059, 1.0
        %v5061 = vrcp.pop %v5060
        %v5062 = vmul.f32 %v5060, %v5061
        %v5063 = vsub.f32 1.0, %v5062
        %v5064 = vmul.f32 %v5061, %v5063
        %v5065 = vadd.f32 %v5061, %v5064
        %vm5066 = vweird.f32 %v5060
        %vm5067 = vweird.f32 %v5061
        %vm5068 = vmor %vm5066, %vm5067
        %v5069 = vsel %vm5068, %v5061, %v5065
        %v5070 = vand.u32 2147483647, %v5060
        %vm5071 = vcmp.eq.f32.partialorder %v5070, 8.507059e+37
        %v5072 = vand.u32 %v5060, 2147483648
        %v5073 = vor.u32 1.1754944e-38, %v5072
        %v5074 = vsel %vm5071, %v5073, %v5069
        %v5075 = vmul.f32 1.0, %v5074
        %vm5076 = vcmask 32768
        %v5077 = vsel %vm5076, %v5075, -inf
        %5078 = vmax.xlane.f32.xlu0 %v5077
        %v5079 = vpop.xlane.xlu0 %5078
        %v5080 = vsub.f32 %v5075, %v5079
        %v5081 = vmul.f32 %v5080, 1.442695
        %v5082 = vpow.pop %v5081
        %v5083 = vsel %vm5076, %v5082, 0.0
        %5084 = vadd.xlane.f32.xlu0 %v5083
        %v5085 = vpop.xlane.xlu0 %5084
        %v5086 = vrcp.pop %v5085
        %v5087 = vmul.f32 %v5085, %v5086
        %v5088 = vsub.f32 1.0, %v5087
        %v5089 = vmul.f32 %v5086, %v5088
        %v5090 = vadd.f32 %v5086, %v5089
        %vm5091 = vweird.f32 %v5085
        %vm5092 = vweird.f32 %v5086
        %vm5093 = vmor %vm5091, %vm5092
        %v5094 = vsel %vm5093, %v5086, %v5090
        %v5095 = vand.u32 2147483647, %v5085
        %vm5096 = vcmp.eq.f32.partialorder %v5095, 8.507059e+37
        %v5097 = vand.u32 %v5085, 2147483648
        %v5098 = vor.u32 1.1754944e-38, %v5097
        %v5099 = vsel %vm5096, %v5098, %v5094
        %v5100 = vmul.f32 %v5082, %v5099
        %5101 = vst.msk [vmem:[%s582] sm:$0x1] %vm5076, %v5100
        %s5102 = sand.u32 %s428, 1
        %s5103 = scalar_lea.sflag [#allocation8], %s5102
        %s5104 = sand.u32 %s428, 1
        %s5105 = scalar_lea.vmem [#allocation7], %s5104
        // Predicated region
        $region93: #{_forward.1} parent=91 // pred_check
          %p5106 = pneg %p438
        $region94: #{_forward.1} parent=91 // pred_check_branch
          %5108 = sbr.rel (%p5106) target = $region96
        $region95: #{_forward.1} parent=91 // pred_region
          %5110 = vsyncadd %s5103, 0
          %s5111 = scalar_lea.hbm %s18, %s32
          %s5113 = sshll.u32 %s5105, 4
          %s5114 = int_to_ptr.vmem [resolvable:$true] %s5113
          %s5115 = sshll.u32 %s5111, 4
          %s5116 = int_to_ptr.hbm [resolvable:$true] %s5115
          %5118 = dma.vmem_to_hbm [thread:$0]  %s5114, 16, %s5116, %s5103
        $region96: #{_forward.1} parent=91 // pred_fallthru
          _
      $region92: #{_forward.1} parent=5 // pred_fallthru
        _
      %p5119 = scmp.le.s32.totalorder 2, %s27
      // Predicated region
      $region97: #{_forward.1} parent=5 // pred_check
        %p5120 = pneg %p5119
      $region98: #{_forward.1} parent=5 // pred_check_branch
        %5122 = sbr.rel (%p5120) target = $region100
      $region99: #{_forward.1} parent=5 // pred_region
        %s5123 = ssub.s32 %s27, 2
        // Predicated region
        $region101: #{_forward.1} parent=99 // pred_check
          %p5124 = pneg %p444
        $region102: #{_forward.1} parent=99 // pred_check_branch
          %5126 = sbr.rel (%p5124) target = $region104
        $region103: #{_forward.1} parent=99 // pred_region
          %s5127 = sand.u32 %s429, 1
          %s5128 = scalar_lea.sflag [#allocation8], %s5127
          %s5129 = sand.u32 %s429, 1
          %s5130 = scalar_lea.vmem [#allocation7], %s5129
          %5132 = dma.done %s5128, 16
        $region104: #{_forward.1} parent=99 // pred_fallthru
          _
      $region100: #{_forward.1} parent=5 // pred_fallthru
        _
    $region6: #{_forward.1} parent=1 // loop_footer
      %s31 = sadd.s32 1, %s27
    $region7: #{_forward.1} parent=1 // loop_footer_branch
      %26 = sbr.rel target = $region3
    $region8: #{_forward.1} parent=1 // loop_exit
      _
    %5133 = vsyncpa [#allocation8], 1
    %s5134 = scalar_lea.sflag [#allocation8], 1
    %5135 = vsyncpa %s5134, 1

</llo_original>
